<compile_context>
chip_gen: v7x
topology: tpu7x:2x2x1
jax: 0.10.0
libtpu: 0.0.40
codegen_flags: <defaults>
</compile_context>

<pallas_src>
import functools

import jax
import jax.numpy as jnp
from jax.experimental import pallas as pl
from jax.experimental.pallas import tpu as pltpu


# ----------------------------------------------------------------------------
# budgets / helpers
# ----------------------------------------------------------------------------
def _vmem_budget_bytes():
    # ~65% of physical VMEM (v5e/v6e 128 MiB -> ~83 MiB, v7x 64 MiB -> ~41 MiB);
    # conservative 32 MiB fallback if the query is unavailable.
    try:
        cap = pltpu.get_tpu_info().vmem_capacity_bytes
        return max(16 * 1024 * 1024, min(100 * 1024 * 1024, int(cap * 0.65)))
    except Exception:
        return 32 * 1024 * 1024


VMEM_BUDGET = _vmem_budget_bytes()


def make_divisible(v, divisor=8, min_value=None, round_limit=0.9):
    min_value = min_value or divisor
    new_v = max(min_value, int(v + divisor / 2) // divisor * divisor)
    if new_v < round_limit * v:
        new_v += divisor
    return new_v


def _pick_row_tile(n, per_row_bytes):
    # largest row tile dividing n whose double-buffered in+out footprint fits in half
    # the scoped budget; prefer >=2 grid steps so v7x can split across its 2 TCs.
    cands = [t for t in (2048, 1024, 512, 256, 128, 64, 32, 16, 8) if n % t == 0] or [n]
    fit = [t for t in cands if 2 * t * per_row_bytes <= VMEM_BUDGET // 2] or [cands[-1]]
    multi = [t for t in fit if n // t >= 2]
    return (multi or fit)[0]


def _mosaic(sems):
    return pltpu.CompilerParams(dimension_semantics=sems, vmem_limit_bytes=VMEM_BUDGET)


def _const_spec(block_shape, index_map):
    # grid-invariant operand: single pipeline buffer instead of default double-buffering.
    try:
        return pl.BlockSpec(block_shape, index_map, pipeline_mode=pl.Buffered(1))
    except Exception:
        return pl.BlockSpec(block_shape, index_map)


def _layernorm(x, w, b):
    mu = jnp.mean(x, axis=-1, keepdims=True)
    xc = x - mu
    var = jnp.mean(xc * xc, axis=-1, keepdims=True)
    return xc * jax.lax.rsqrt(var + 1e-5) * w + b


def _erf(x):
    # Abramowitz & Stegun 7.1.26 rational approx (|err| < 1.5e-7); matches torch.nn.GELU
    # (exact erf form) to ~1e-7 when used in _gelu_exact.
    a1, a2, a3, a4, a5 = 0.254829592, -0.284496736, 1.421413741, -1.453152027, 1.061405429
    pc = 0.3275911
    ax = jnp.abs(x)
    t = 1.0 / (1.0 + pc * ax)
    poly = ((((a5 * t + a4) * t + a3) * t + a2) * t + a1) * t
    y = 1.0 - poly * jnp.exp(-ax * ax)
    return jnp.where(x < 0.0, -y, y)


def _gelu_exact(x):
    return 0.5 * x * (1.0 + _erf(x * 0.7071067811865476))


# ----------------------------------------------------------------------------
# Pallas kernels
# ----------------------------------------------------------------------------
def _ln_qkv_kernel(x_ref, lw_ref, lb_ref, wq_ref, wkv_ref, q_ref, kv_ref):
    # fused LayerNorm1 + bias-free q / kv projections; bf16 outputs (halved HBM traffic)
    xn = _layernorm(x_ref[...], lw_ref[...], lb_ref[...]).astype(jnp.bfloat16)
    q_ref[...] = jnp.dot(xn, wq_ref[...],
                         preferred_element_type=jnp.float32).astype(q_ref.dtype)
    kv_ref[...] = jnp.dot(xn, wkv_ref[...],
                          preferred_element_type=jnp.float32).astype(kv_ref.dtype)


def _halo_attn_kernel(q_ref, kv_ref, rel_ref, sel_ref, exp_ref, mb_ref, o_ref, *,
                      scale, nh, dhqk, dhv, bs, win, nwb):
    # grid step = (batch, block-row): process all block-columns + heads of this row band.
    QQ = bs * bs
    per = dhqk + dhv
    qband = q_ref[...]                       # (bs, W, NH*dhqk)       bf16
    rel = rel_ref[...]                       # (dhqk, 2*bs*win)       bf16
    sel = sel_ref[...]                       # (QQ, 2*bs)   0/1       f32
    exp_m = exp_ref[...]                     # (2*win, win*win) 0/1   f32
    for j in range(nwb):                     # static unroll over block columns
        qblk = qband[:, j * bs:(j + 1) * bs, :].reshape(QQ, nh * dhqk)
        kv = kv_ref[j]                       # (win*win, NH*(dhqk+dhv)) bf16
        mb = mb_ref[j]                       # (1, win*win) additive mask (0 / -1e30)
        for h in range(nh):                  # static unroll over heads
            q_h = qblk[:, h * dhqk:(h + 1) * dhqk]                 # (QQ, dhqk)
            k_h = kv[:, h * per:h * per + dhqk]                    # (WW, dhqk)
            v_h = kv[:, h * per + dhqk:(h + 1) * per]              # (WW, dhv)
            s = jax.lax.dot_general(q_h, k_h, (((1,), (1,)), ((), ())),
                                    preferred_element_type=jnp.float32)   # (QQ, WW)
            # query-related rel-pos bias on the MXU:
            #   big[:, g*win+k] = q_h . rel[:, g*win+k]; select g==qh (height) and
            #   g==qw (width) with fixed 0/1 row masks, then expand (QQ,win)->(QQ,WW)
            #   with a fixed 0/1 matmul. No (QQ,WW,DQK) table, no VPU broadcast-reduce.
            big = jnp.dot(q_h, rel, preferred_element_type=jnp.float32)   # (QQ, 2*bs*win)
            b_h = jnp.zeros((QQ, win), jnp.float32)
            b_w = jnp.zeros((QQ, win), jnp.float32)
            for g in range(bs):
                b_h = b_h + big[:, g * win:(g + 1) * win] * sel[:, g:g + 1]
                b_w = b_w + (big[:, (bs + g) * win:(bs + g + 1) * win]
                             * sel[:, bs + g:bs + g + 1])
            bias = jnp.dot(jnp.concatenate([b_h, b_w], axis=1), exp_m,
                           preferred_element_type=jnp.float32)            # (QQ, WW)
            s = s * scale + bias + mb
            smax = jnp.max(s, axis=-1, keepdims=True)
            e = jnp.exp(s - smax)
            p = e * pl.reciprocal(jnp.sum(e, axis=-1, keepdims=True), approx=True)
            out_h = jnp.dot(p.astype(jnp.bfloat16), v_h,
                            preferred_element_type=jnp.float32)           # (QQ, dhv)
            # store this head directly into the spatial output block (no list/concat)
            o_ref[:, j * bs:(j + 1) * bs, h * dhv:(h + 1) * dhv] = (
                out_h.astype(jnp.bfloat16).reshape(bs, bs, dhv))


def _matmul_scale_res_kernel(a_ref, w_ref, b_ref, g_ref, r_ref, o_ref):
    # fused projection + bias + layer-scale + residual add (a is already bf16)
    y = jnp.dot(a_ref[...], w_ref[...], preferred_element_type=jnp.float32) + b_ref[...]
    o_ref[...] = r_ref[...] + g_ref[...] * y


def _ln_mlp1_kernel(x_ref, lw_ref, lb_ref, w1_ref, b1_ref, h_ref):
    # fused LayerNorm2 + fc1 + exact (erf) GELU; hidden activation stored as bf16
    xn = _layernorm(x_ref[...], lw_ref[...], lb_ref[...]).astype(jnp.bfloat16)
    y = jnp.dot(xn, w1_ref[...], preferred_element_type=jnp.float32) + b1_ref[...]
    h_ref[...] = _gelu_exact(y).astype(h_ref.dtype)


# ----------------------------------------------------------------------------
# Pallas wrappers
# ----------------------------------------------------------------------------
def ln_qkv(x2d, lw, lb, wq, wkv, *, row_tile):
    n, c = x2d.shape
    dqk, dkv = wq.shape[1], wkv.shape[1]
    return pl.pallas_call(
        _ln_qkv_kernel,
        grid=(n // row_tile,),
        out_shape=(jax.ShapeDtypeStruct((n, dqk), jnp.bfloat16),
                   jax.ShapeDtypeStruct((n, dkv), jnp.bfloat16)),
        in_specs=[
            pl.BlockSpec((row_tile, c), lambda i: (i, 0)),
            _const_spec((1, c), lambda i: (0, 0)),
            _const_spec((1, c), lambda i: (0, 0)),
            _const_spec((c, dqk), lambda i: (0, 0)),
            _const_spec((c, dkv), lambda i: (0, 0)),
        ],
        out_specs=(pl.BlockSpec((row_tile, dqk), lambda i: (i, 0)),
                   pl.BlockSpec((row_tile, dkv), lambda i: (i, 0))),
        compiler_params=_mosaic(("parallel",)),
    )(x2d, lw, lb, wq, wkv)


def matmul_scale_residual(a, w, b, g, res, *, row_tile):
    n, din = a.shape
    c = w.shape[1]
    return pl.pallas_call(
        _matmul_scale_res_kernel,
        grid=(n // row_tile,),
        out_shape=jax.ShapeDtypeStruct((n, c), jnp.float32),
        in_specs=[
            pl.BlockSpec((row_tile, din), lambda i: (i, 0)),
            _const_spec((din, c), lambda i: (0, 0)),
            _const_spec((1, c), lambda i: (0, 0)),
            _const_spec((1, c), lambda i: (0, 0)),
            pl.BlockSpec((row_tile, c), lambda i: (i, 0)),
        ],
        out_specs=pl.BlockSpec((row_tile, c), lambda i: (i, 0)),
        compiler_params=_mosaic(("parallel",)),
    )(a, w, b, g, res)


def ln_mlp1(x2d, lw, lb, w1, b1, *, row_tile):
    n, c = x2d.shape
    hidden = w1.shape[1]
    return pl.pallas_call(
        _ln_mlp1_kernel,
        grid=(n // row_tile,),
        out_shape=jax.ShapeDtypeStruct((n, hidden), jnp.bfloat16),
        in_specs=[
            pl.BlockSpec((row_tile, c), lambda i: (i, 0)),
            _const_spec((1, c), lambda i: (0, 0)),
            _const_spec((1, c), lambda i: (0, 0)),
            _const_spec((c, hidden), lambda i: (0, 0)),
            _const_spec((1, hidden), lambda i: (0, 0)),
        ],
        out_specs=pl.BlockSpec((row_tile, hidden), lambda i: (i, 0)),
        compiler_params=_mosaic(("parallel",)),
    )(x2d, lw, lb, w1, b1)


def halo_attention(q4, kv_win, relcat, sel, expand, mask_bias, *,
                   scale, nh, dhqk, dhv, bs, win, nwb):
    # q4: (B, H, W, NH*dhqk) bf16   kv_win: (B, nhb, nwb, win*win, NH*(dhqk+dhv)) bf16
    # relcat: (dhqk, 2*bs*win) bf16 sel: (QQ, 2*bs) f32  expand: (2*win, WW) f32
    # mask_bias: (nhb, nwb, 1, WW) additive (0 / -1e30) f32
    B, H, W, dqkT = q4.shape
    nhb = H // bs
    WW = win * win
    ckv = kv_win.shape[-1]
    dv = nh * dhv
    kern = functools.partial(_halo_attn_kernel, scale=scale, nh=nh, dhqk=dhqk,
                             dhv=dhv, bs=bs, win=win, nwb=nwb)
    return pl.pallas_call(
        kern,
        grid=(B, nhb),
        out_shape=jax.ShapeDtypeStruct((B, H, W, dv), jnp.bfloat16),
        in_specs=[
            pl.BlockSpec((None, bs, W, dqkT), lambda b, r: (b, r, 0, 0)),
            pl.BlockSpec((None, None, nwb, WW, ckv), lambda b, r: (b, r, 0, 0, 0)),
            _const_spec((dhqk, 2 * bs * win), lambda b, r: (0, 0)),
            _const_spec((bs * bs, 2 * bs), lambda b, r: (0, 0)),
            _const_spec((2 * win, WW), lambda b, r: (0, 0)),
            pl.BlockSpec((None, nwb, 1, WW), lambda b, r: (r, 0, 0, 0)),
        ],
        out_specs=pl.BlockSpec((None, bs, W, dv), lambda b, r: (b, r, 0, 0)),
        compiler_params=_mosaic(("parallel", "parallel")),
    )(q4, kv_win, relcat, sel, expand, mask_bias)


# ----------------------------------------------------------------------------
# parameters (deterministic synthetic init; shapes follow the PyTorch __init__)
# ----------------------------------------------------------------------------
def init_params(key, dim, num_heads, block_size, halo_size, mlp_ratio,
                layer_scale_init_value):
    dim_out = dim
    dim_head_qk = make_divisible(dim_out * 1.0, divisor=8) // num_heads
    dim_head_v = dim_out // num_heads
    dim_out_qk = num_heads * dim_head_qk
    dim_out_v = num_heads * dim_head_v
    win_size = block_size + 2 * halo_size
    scale = dim_head_qk ** (-0.5)
    hidden = int(dim * mlp_ratio)

    ks = jax.random.split(key, 8)
    bf = jnp.bfloat16
    p = {
        "ln1_w": jnp.ones((1, dim), jnp.float32),
        "ln1_b": jnp.zeros((1, dim), jnp.float32),
        # q / kv projections are bias-free (qkv_bias=False); matmul weights kept in bf16
        "wq": (0.02 * jax.random.normal(ks[0], (dim, dim_out_qk), jnp.float32)).astype(bf),
        "wkv": (0.02 * jax.random.normal(ks[1], (dim, dim_out_qk + dim_out_v), jnp.float32)).astype(bf),
        # QueryRelatedPosEmbedRel params (init = scale * randn, as in PyTorch; f32)
        "height_rel": scale * jax.random.normal(ks[2], (2 * win_size - 1, dim_head_qk), jnp.float32),
        "width_rel": scale * jax.random.normal(ks[3], (2 * win_size - 1, dim_head_qk), jnp.float32),
        "wproj": (0.02 * jax.random.normal(ks[4], (dim_out_v, dim_out_v), jnp.float32)).astype(bf),
        "bproj": jnp.zeros((1, dim_out_v), jnp.float32),
        "gamma1": jnp.full((1, dim), layer_scale_init_value, jnp.float32),
        "ln2_w": jnp.ones((1, dim), jnp.float32),
        "ln2_b": jnp.zeros((1, dim), jnp.float32),
        "w1": (0.02 * jax.random.normal(ks[5], (dim, hidden), jnp.float32)).astype(bf),
        "b1": jnp.zeros((1, hidden), jnp.float32),
        "w2": (0.02 * jax.random.normal(ks[6], (hidden, dim), jnp.float32)).astype(bf),
        "b2": jnp.zeros((1, dim), jnp.float32),
        "gamma2": jnp.full((1, dim), layer_scale_init_value, jnp.float32),
    }
    cfg = dict(
        dim=dim, num_heads=num_heads, block_size=block_size, halo_size=halo_size,
        win_size=win_size, dim_head_qk=dim_head_qk, dim_head_v=dim_head_v,
        dim_out_qk=dim_out_qk, dim_out_v=dim_out_v, scale=scale,
    )
    return p, cfg


# ----------------------------------------------------------------------------
# forward (glue in JAX, compute in Pallas kernels)
# ----------------------------------------------------------------------------
def halo_block_forward(x, p, cfg):
    B, H, W, C = x.shape
    bs, halo, win = cfg["block_size"], cfg["halo_size"], cfg["win_size"]
    NH, dhqk, dhv = cfg["num_heads"], cfg["dim_head_qk"], cfg["dim_head_v"]
    dqk, dv = cfg["dim_out_qk"], cfg["dim_out_v"]
    assert H % bs == 0 and W % bs == 0
    nhb, nwb = H // bs, W // bs
    N = B * H * W
    ckv = dqk + dv
    hidden = p["w1"].shape[1]
    WW = win * win

    shortcut = x.reshape(N, C)

    # ------------- attention branch: fused LN1 + q/kv projections -------------
    t1 = _pick_row_tile(N, C * 4 + dqk * 2 + ckv * 2)
    q, kv = ln_qkv(shortcut, p["ln1_w"], p["ln1_b"], p["wq"], p["wkv"], row_tile=t1)

    # q stays spatial; the attention kernel reads (bs, W) row bands directly (no transpose)
    q4 = q.reshape(B, H, W, dqk)

    # non-centric halo windows for k|v: pad bottom/right by 2*halo, unfold win @ stride bs.
    # k|v stay packed (head-major [k|v] per head) and are split by lane slices in-kernel.
    # TODO(synk): fuse this overlapping unfold into the attention kernel with manual
    # element-offset DMAs (make_async_copy) to avoid the ~(win/bs)^2 HBM duplication.
    kv4 = kv.reshape(B, H, W, ckv)
    kv_pad = jnp.pad(kv4, ((0, 0), (0, 2 * halo), (0, 2 * halo), (0, 0)))
    hi = jnp.arange(nhb)[:, None] * bs + jnp.arange(win)[None, :]          # (nhb, win)
    wi = jnp.arange(nwb)[:, None] * bs + jnp.arange(win)[None, :]          # (nwb, win)
    kv_win = kv_pad[:, hi[:, None, :, None], wi[None, :, None, :], :]      # (B,nhb,nwb,win,win,Ckv)
    kv_win = kv_win.reshape(B, nhb, nwb, WW, ckv)

    # query-related rel-pos tables for the in-kernel MXU bias path:
    #   relcat[d, g*win+k]       = height_rel[k - g + win - 1, d]   (g  in [0, bs))
    #   relcat[d, (bs+g)*win+k]  = width_rel [k - g + win - 1, d]
    idx = jnp.arange(win)[None, :] - jnp.arange(bs)[:, None] + (win - 1)   # (bs, win)
    relcat = jnp.concatenate([p["height_rel"][idx], p["width_rel"][idx]], axis=0)
    relcat = relcat.reshape(2 * bs * win, dhqk).T.astype(jnp.bfloat16)     # (dhqk, 2*bs*win)
    qidx = jnp.arange(bs * bs)
    sel = jnp.concatenate(
        [(qidx[:, None] // bs == jnp.arange(bs)[None, :]).astype(jnp.float32),   # g == qh
         (qidx[:, None] % bs == jnp.arange(bs)[None, :]).astype(jnp.float32)],   # g == qw
        axis=1)                                                            # (QQ, 2*bs)
    kcol = jnp.arange(WW)
    expand = jnp.concatenate(
        [(kcol[None, :] // win == jnp.arange(win)[:, None]).astype(jnp.float32),  # kh expand
         (kcol[None, :] % win == jnp.arange(win)[:, None]).astype(jnp.float32)],  # kw expand
        axis=0)                                                            # (2*win, WW)

    # halo mask (exactly as PyTorch get_mask: symmetric halo pad, centred window indices),
    # prebuilt as an additive bias (0 / -1e30), kept f32.
    rh = jnp.arange(nhb)[:, None] * bs - halo + jnp.arange(win)[None, :]
    rw = jnp.arange(nwb)[:, None] * bs - halo + jnp.arange(win)[None, :]
    valid = (((rh >= 0) & (rh < H))[:, None, :, None]
             & ((rw >= 0) & (rw < W))[None, :, None, :])
    mask_bias = jnp.where(valid, 0.0, -1e30).astype(jnp.float32).reshape(nhb, nwb, 1, WW)

    ao = halo_attention(q4, kv_win, relcat, sel, expand, mask_bias,
                        scale=cfg["scale"], nh=NH, dhqk=dhqk, dhv=dhv,
                        bs=bs, win=win, nwb=nwb)                           # (B, H, W, dv) bf16
    ao2 = ao.reshape(N, dv)

    # fused attn-proj + layer-scale + residual
    t3 = _pick_row_tile(N, dv * 2 + C * 8)
    x1 = matmul_scale_residual(ao2, p["wproj"], p["bproj"], p["gamma1"], shortcut, row_tile=t3)

    # ------------- MLP branch -------------
    t4 = _pick_row_tile(N, C * 4 + hidden * 2)
    hdn = ln_mlp1(x1, p["ln2_w"], p["ln2_b"], p["w1"], p["b1"], row_tile=t4)   # bf16 hidden
    t5 = _pick_row_tile(N, hidden * 2 + C * 8)
    x2 = matmul_scale_residual(hdn, p["w2"], p["b2"], p["gamma2"], x1, row_tile=t5)
    return x2.reshape(B, H, W, C)


# ----------------------------------------------------------------------------
# main
# ----------------------------------------------------------------------------
if __name__ == "__main__":
    key = jax.random.PRNGKey(0)
    kx, kp = jax.random.split(key)

    B, H, W, dim = 2, 8, 8, 16
    block_size, halo_size, num_heads = 4, 1, 2      # win_size = 6, 2x2 = 4 blocks

    x = jax.random.normal(kx, (B, H, W, dim), jnp.float32)   # layout: NHWC
    params, cfg = init_params(
        kp, dim=dim, num_heads=num_heads, block_size=block_size,
        halo_size=halo_size, mlp_ratio=4.0, layer_scale_init_value=0.1,
    )

    fwd = jax.jit(lambda xx, pp: halo_block_forward(xx, pp, cfg))
    out = jax.block_until_ready(fwd(x, params))

    assert out.shape == (B, H, W, dim)
    assert bool(jnp.all(jnp.isfinite(out)))
    print("KERNEL_OK")
</pallas_src>

<mosaic_0001>
module attributes {stable_mosaic.version = 11 : i64} {
  func.func @_ln_qkv_kernel(%arg0: i32, %arg1: memref<64x16xf32, #tpu.memory_space<vmem>>, %arg2: memref<1x16xf32, #tpu.memory_space<vmem>>, %arg3: memref<1x16xf32, #tpu.memory_space<vmem>>, %arg4: memref<16x16xbf16, #tpu.memory_space<vmem>>, %arg5: memref<16x32xbf16, #tpu.memory_space<vmem>>, %arg6: memref<64x16xbf16, #tpu.memory_space<vmem>>, %arg7: memref<64x32xbf16, #tpu.memory_space<vmem>>) attributes {dimension_semantics = [#tpu.dimension_semantics<parallel>], iteration_bounds = array<i64: 2>, scalar_prefetch = 0 : i64, scratch_operands = 0 : i64, tpu.core_type = #tpu.core_type<tc>, window_params = [{transform_indices = @transform_0, window_bounds = array<i64: 64, 16>}, {pipeline_mode = #tpu.pipeline_mode<synchronous>, transform_indices = @transform_1, window_bounds = array<i64: 1, 16>}, {pipeline_mode = #tpu.pipeline_mode<synchronous>, transform_indices = @transform_2, window_bounds = array<i64: 1, 16>}, {pipeline_mode = #tpu.pipeline_mode<synchronous>, transform_indices = @transform_3, window_bounds = array<i64: 16, 16>}, {pipeline_mode = #tpu.pipeline_mode<synchronous>, transform_indices = @transform_4, window_bounds = array<i64: 16, 32>}, {transform_indices = @transform_5, window_bounds = array<i64: 64, 16>}, {transform_indices = @transform_6, window_bounds = array<i64: 64, 32>}]} {
    %c0 = arith.constant 0 : index
    %c0_0 = arith.constant 0 : index
    %0 = vector.load %arg1[%c0, %c0_0] : memref<64x16xf32, #tpu.memory_space<vmem>>, vector<64x16xf32>
    %c0_1 = arith.constant 0 : index
    %c0_2 = arith.constant 0 : index
    %1 = vector.load %arg2[%c0_1, %c0_2] : memref<1x16xf32, #tpu.memory_space<vmem>>, vector<1x16xf32>
    %c0_3 = arith.constant 0 : index
    %c0_4 = arith.constant 0 : index
    %2 = vector.load %arg3[%c0_3, %c0_4] : memref<1x16xf32, #tpu.memory_space<vmem>>, vector<1x16xf32>
    %cst = arith.constant dense<0.000000e+00> : vector<64xf32>
    %3 = vector.multi_reduction <add>, %0, %cst [1] : vector<64x16xf32> to vector<64xf32>
    %4 = vector.shape_cast %3 : vector<64xf32> to vector<64x1xf32>
    %cst_5 = arith.constant 1.600000e+01 : f32
    %5 = vector.broadcast %cst_5 : f32 to vector<64x1xf32>
    %6 = arith.divf %4, %5 : vector<64x1xf32>
    %7 = vector.broadcast %6 : vector<64x1xf32> to vector<64x16xf32>
    %8 = arith.subf %0, %7 : vector<64x16xf32>
    %9 = arith.mulf %8, %8 : vector<64x16xf32>
    %cst_6 = arith.constant dense<0.000000e+00> : vector<64xf32>
    %10 = vector.multi_reduction <add>, %9, %cst_6 [1] : vector<64x16xf32> to vector<64xf32>
    %11 = vector.shape_cast %10 : vector<64xf32> to vector<64x1xf32>
    %cst_7 = arith.constant 1.600000e+01 : f32
    %12 = vector.broadcast %cst_7 : f32 to vector<64x1xf32>
    %13 = arith.divf %11, %12 : vector<64x1xf32>
    %cst_8 = arith.constant 9.99999974E-6 : f32
    %14 = vector.broadcast %cst_8 : f32 to vector<64x1xf32>
    %15 = arith.addf %13, %14 : vector<64x1xf32>
    %16 = math.rsqrt %15 : vector<64x1xf32>
    %17 = vector.broadcast %16 : vector<64x1xf32> to vector<64x16xf32>
    %18 = arith.mulf %8, %17 : vector<64x16xf32>
    %19 = vector.broadcast %1 : vector<1x16xf32> to vector<64x16xf32>
    %20 = arith.mulf %18, %19 : vector<64x16xf32>
    %21 = vector.broadcast %2 : vector<1x16xf32> to vector<64x16xf32>
    %22 = arith.addf %20, %21 : vector<64x16xf32>
    %23 = arith.truncf %22 : vector<64x16xf32> to vector<64x16xbf16>
    %c0_9 = arith.constant 0 : index
    %c0_10 = arith.constant 0 : index
    %24 = vector.load %arg4[%c0_9, %c0_10] : memref<16x16xbf16, #tpu.memory_space<vmem>>, vector<16x16xbf16>
    %cst_11 = arith.constant dense<0.000000e+00> : vector<64x16xf32>
    %25 = tpu.matmul %23, %24, %cst_11 {dimension_numbers = #tpu.dot_dimension_numbers<[1], [0], [0], [1], [0, 0, 1, 1], [], []>} : vector<64x16xbf16>, vector<16x16xbf16>, vector<64x16xf32> -> vector<64x16xf32>
    %26 = arith.truncf %25 : vector<64x16xf32> to vector<64x16xbf16>
    %c0_12 = arith.constant 0 : index
    %c0_13 = arith.constant 0 : index
    %27 = vector.load %arg6[%c0_12, %c0_13] : memref<64x16xbf16, #tpu.memory_space<vmem>>, vector<64x16xbf16>
    tpu.vector_store %arg6[%c0_12, %c0_13], %26 {strides = array<i32>} : memref<64x16xbf16, #tpu.memory_space<vmem>>, vector<64x16xbf16>,
    %c0_14 = arith.constant 0 : index
    %c0_15 = arith.constant 0 : index
    %28 = vector.load %arg5[%c0_14, %c0_15] : memref<16x32xbf16, #tpu.memory_space<vmem>>, vector<16x32xbf16>
    %cst_16 = arith.constant dense<0.000000e+00> : vector<64x32xf32>
    %29 = tpu.matmul %23, %28, %cst_16 {dimension_numbers = #tpu.dot_dimension_numbers<[1], [0], [0], [1], [0, 0, 1, 1], [], []>} : vector<64x16xbf16>, vector<16x32xbf16>, vector<64x32xf32> -> vector<64x32xf32>
    %30 = arith.truncf %29 : vector<64x32xf32> to vector<64x32xbf16>
    %c0_17 = arith.constant 0 : index
    %c0_18 = arith.constant 0 : index
    %31 = vector.load %arg7[%c0_17, %c0_18] : memref<64x32xbf16, #tpu.memory_space<vmem>>, vector<64x32xbf16>
    tpu.vector_store %arg7[%c0_17, %c0_18], %30 {strides = array<i32>} : memref<64x32xbf16, #tpu.memory_space<vmem>>, vector<64x32xbf16>,
    return
  }
  func.func @transform_0(%arg0: i32) -> (i32, i32) {
    %c0_i32 = arith.constant 0 : i32
    %c0_i32_0 = arith.constant 0 : i32
    return %arg0, %c0_i32 : i32, i32
  }
  func.func @transform_1(%arg0: i32) -> (i32, i32) {
    %c0_i32 = arith.constant 0 : i32
    %c0_i32_0 = arith.constant 0 : i32
    %c0_i32_1 = arith.constant 0 : i32
    return %c0_i32, %c0_i32_0 : i32, i32
  }
  func.func @transform_2(%arg0: i32) -> (i32, i32) {
    %c0_i32 = arith.constant 0 : i32
    %c0_i32_0 = arith.constant 0 : i32
    %c0_i32_1 = arith.constant 0 : i32
    return %c0_i32, %c0_i32_0 : i32, i32
  }
  func.func @transform_3(%arg0: i32) -> (i32, i32) {
    %c0_i32 = arith.constant 0 : i32
    %c0_i32_0 = arith.constant 0 : i32
    %c0_i32_1 = arith.constant 0 : i32
    return %c0_i32, %c0_i32_0 : i32, i32
  }
  func.func @transform_4(%arg0: i32) -> (i32, i32) {
    %c0_i32 = arith.constant 0 : i32
    %c0_i32_0 = arith.constant 0 : i32
    %c0_i32_1 = arith.constant 0 : i32
    return %c0_i32, %c0_i32_0 : i32, i32
  }
  func.func @transform_5(%arg0: i32) -> (i32, i32) {
    %c0_i32 = arith.constant 0 : i32
    %c0_i32_0 = arith.constant 0 : i32
    return %arg0, %c0_i32 : i32, i32
  }
  func.func @transform_6(%arg0: i32) -> (i32, i32) {
    %c0_i32 = arith.constant 0 : i32
    %c0_i32_0 = arith.constant 0 : i32
    return %arg0, %c0_i32 : i32, i32
  }
}

module attributes {stable_mosaic.version = 11 : i64} {
  func.func @_ln_mlp1_kernel(%arg0: i32, %arg1: memref<64x16xf32, #tpu.memory_space<vmem>>, %arg2: memref<1x16xf32, #tpu.memory_space<vmem>>, %arg3: memref<1x16xf32, #tpu.memory_space<vmem>>, %arg4: memref<16x64xbf16, #tpu.memory_space<vmem>>, %arg5: memref<1x64xf32, #tpu.memory_space<vmem>>, %arg6: memref<64x64xbf16, #tpu.memory_space<vmem>>) attributes {dimension_semantics = [#tpu.dimension_semantics<parallel>], iteration_bounds = array<i64: 2>, scalar_prefetch = 0 : i64, scratch_operands = 0 : i64, tpu.core_type = #tpu.core_type<tc>, window_params = [{transform_indices = @transform_0, window_bounds = array<i64: 64, 16>}, {pipeline_mode = #tpu.pipeline_mode<synchronous>, transform_indices = @transform_1, window_bounds = array<i64: 1, 16>}, {pipeline_mode = #tpu.pipeline_mode<synchronous>, transform_indices = @transform_2, window_bounds = array<i64: 1, 16>}, {pipeline_mode = #tpu.pipeline_mode<synchronous>, transform_indices = @transform_3, window_bounds = array<i64: 16, 64>}, {pipeline_mode = #tpu.pipeline_mode<synchronous>, transform_indices = @transform_4, window_bounds = array<i64: 1, 64>}, {transform_indices = @transform_5, window_bounds = array<i64: 64, 64>}]} {
    %c0 = arith.constant 0 : index
    %c0_0 = arith.constant 0 : index
    %0 = vector.load %arg1[%c0, %c0_0] : memref<64x16xf32, #tpu.memory_space<vmem>>, vector<64x16xf32>
    %c0_1 = arith.constant 0 : index
    %c0_2 = arith.constant 0 : index
    %1 = vector.load %arg2[%c0_1, %c0_2] : memref<1x16xf32, #tpu.memory_space<vmem>>, vector<1x16xf32>
    %c0_3 = arith.constant 0 : index
    %c0_4 = arith.constant 0 : index
    %2 = vector.load %arg3[%c0_3, %c0_4] : memref<1x16xf32, #tpu.memory_space<vmem>>, vector<1x16xf32>
    %cst = arith.constant dense<0.000000e+00> : vector<64xf32>
    %3 = vector.multi_reduction <add>, %0, %cst [1] : vector<64x16xf32> to vector<64xf32>
    %4 = vector.shape_cast %3 : vector<64xf32> to vector<64x1xf32>
    %cst_5 = arith.constant 1.600000e+01 : f32
    %5 = vector.broadcast %cst_5 : f32 to vector<64x1xf32>
    %6 = arith.divf %4, %5 : vector<64x1xf32>
    %7 = vector.broadcast %6 : vector<64x1xf32> to vector<64x16xf32>
    %8 = arith.subf %0, %7 : vector<64x16xf32>
    %9 = arith.mulf %8, %8 : vector<64x16xf32>
    %cst_6 = arith.constant dense<0.000000e+00> : vector<64xf32>
    %10 = vector.multi_reduction <add>, %9, %cst_6 [1] : vector<64x16xf32> to vector<64xf32>
    %11 = vector.shape_cast %10 : vector<64xf32> to vector<64x1xf32>
    %cst_7 = arith.constant 1.600000e+01 : f32
    %12 = vector.broadcast %cst_7 : f32 to vector<64x1xf32>
    %13 = arith.divf %11, %12 : vector<64x1xf32>
    %cst_8 = arith.constant 9.99999974E-6 : f32
    %14 = vector.broadcast %cst_8 : f32 to vector<64x1xf32>
    %15 = arith.addf %13, %14 : vector<64x1xf32>
    %16 = math.rsqrt %15 : vector<64x1xf32>
    %17 = vector.broadcast %16 : vector<64x1xf32> to vector<64x16xf32>
    %18 = arith.mulf %8, %17 : vector<64x16xf32>
    %19 = vector.broadcast %1 : vector<1x16xf32> to vector<64x16xf32>
    %20 = arith.mulf %18, %19 : vector<64x16xf32>
    %21 = vector.broadcast %2 : vector<1x16xf32> to vector<64x16xf32>
    %22 = arith.addf %20, %21 : vector<64x16xf32>
    %23 = arith.truncf %22 : vector<64x16xf32> to vector<64x16xbf16>
    %c0_9 = arith.constant 0 : index
    %c0_10 = arith.constant 0 : index
    %24 = vector.load %arg4[%c0_9, %c0_10] : memref<16x64xbf16, #tpu.memory_space<vmem>>, vector<16x64xbf16>
    %cst_11 = arith.constant dense<0.000000e+00> : vector<64x64xf32>
    %25 = tpu.matmul %23, %24, %cst_11 {dimension_numbers = #tpu.dot_dimension_numbers<[1], [0], [0], [1], [0, 0, 1, 1], [], []>} : vector<64x16xbf16>, vector<16x64xbf16>, vector<64x64xf32> -> vector<64x64xf32>
    %c0_12 = arith.constant 0 : index
    %c0_13 = arith.constant 0 : index
    %26 = vector.load %arg5[%c0_12, %c0_13] : memref<1x64xf32, #tpu.memory_space<vmem>>, vector<1x64xf32>
    %27 = vector.broadcast %26 : vector<1x64xf32> to vector<64x64xf32>
    %28 = arith.addf %25, %27 : vector<64x64xf32>
    %cst_14 = arith.constant 5.000000e-01 : f32
    %29 = vector.broadcast %cst_14 : f32 to vector<64x64xf32>
    %30 = arith.mulf %29, %28 : vector<64x64xf32>
    %cst_15 = arith.constant 0.707106769 : f32
    %31 = vector.broadcast %cst_15 : f32 to vector<64x64xf32>
    %32 = arith.mulf %28, %31 : vector<64x64xf32>
    %33 = math.absf %32 : vector<64x64xf32>
    %cst_16 = arith.constant 0.327591091 : f32
    %34 = vector.broadcast %cst_16 : f32 to vector<64x64xf32>
    %35 = arith.mulf %34, %33 : vector<64x64xf32>
    %cst_17 = arith.constant 1.000000e+00 : f32
    %36 = vector.broadcast %cst_17 : f32 to vector<64x64xf32>
    %37 = arith.addf %36, %35 : vector<64x64xf32>
    %cst_18 = arith.constant 1.000000e+00 : f32
    %38 = vector.broadcast %cst_18 : f32 to vector<64x64xf32>
    %39 = arith.divf %38, %37 : vector<64x64xf32>
    %cst_19 = arith.constant 1.06140542 : f32
    %40 = vector.broadcast %cst_19 : f32 to vector<64x64xf32>
    %41 = arith.mulf %40, %39 : vector<64x64xf32>
    %cst_20 = arith.constant -1.45315206 : f32
    %42 = vector.broadcast %cst_20 : f32 to vector<64x64xf32>
    %43 = arith.addf %41, %42 : vector<64x64xf32>
    %44 = arith.mulf %43, %39 : vector<64x64xf32>
    %cst_21 = arith.constant 1.42141378 : f32
    %45 = vector.broadcast %cst_21 : f32 to vector<64x64xf32>
    %46 = arith.addf %44, %45 : vector<64x64xf32>
    %47 = arith.mulf %46, %39 : vector<64x64xf32>
    %cst_22 = arith.constant -0.284496725 : f32
    %48 = vector.broadcast %cst_22 : f32 to vector<64x64xf32>
    %49 = arith.addf %47, %48 : vector<64x64xf32>
    %50 = arith.mulf %49, %39 : vector<64x64xf32>
    %cst_23 = arith.constant 0.254829586 : f32
    %51 = vector.broadcast %cst_23 : f32 to vector<64x64xf32>
    %52 = arith.addf %50, %51 : vector<64x64xf32>
    %53 = arith.mulf %52, %39 : vector<64x64xf32>
    %cst_24 = arith.constant 0.000000e+00 : f32
    %54 = vector.broadcast %cst_24 : f32 to vector<64x64xf32>
    %55 = arith.subf %54, %33 : vector<64x64xf32>
    %56 = arith.mulf %55, %33 : vector<64x64xf32>
    %57 = math.exp %56 : vector<64x64xf32>
    %58 = arith.mulf %53, %57 : vector<64x64xf32>
    %cst_25 = arith.constant 1.000000e+00 : f32
    %59 = vector.broadcast %cst_25 : f32 to vector<64x64xf32>
    %60 = arith.subf %59, %58 : vector<64x64xf32>
    %cst_26 = arith.constant 0.000000e+00 : f32
    %61 = vector.broadcast %cst_26 : f32 to vector<64x64xf32>
    %62 = arith.cmpf olt, %32, %61 : vector<64x64xf32>
    %cst_27 = arith.constant 0.000000e+00 : f32
    %63 = vector.broadcast %cst_27 : f32 to vector<64x64xf32>
    %64 = arith.subf %63, %60 : vector<64x64xf32>
    %65 = arith.select %62, %64, %60 : vector<64x64xi1>, vector<64x64xf32>
    %cst_28 = arith.constant 1.000000e+00 : f32
    %66 = vector.broadcast %cst_28 : f32 to vector<64x64xf32>
    %67 = arith.addf %66, %65 : vector<64x64xf32>
    %68 = arith.mulf %30, %67 : vector<64x64xf32>
    %69 = arith.truncf %68 : vector<64x64xf32> to vector<64x64xbf16>
    %c0_29 = arith.constant 0 : index
    %c0_30 = arith.constant 0 : index
    %70 = vector.load %arg6[%c0_29, %c0_30] : memref<64x64xbf16, #tpu.memory_space<vmem>>, vector<64x64xbf16>
    tpu.vector_store %arg6[%c0_29, %c0_30], %69 {strides = array<i32>} : memref<64x64xbf16, #tpu.memory_space<vmem>>, vector<64x64xbf16>,
    return
  }
  func.func @transform_0(%arg0: i32) -> (i32, i32) {
    %c0_i32 = arith.constant 0 : i32
    %c0_i32_0 = arith.constant 0 : i32
    return %arg0, %c0_i32 : i32, i32
  }
  func.func @transform_1(%arg0: i32) -> (i32, i32) {
    %c0_i32 = arith.constant 0 : i32
    %c0_i32_0 = arith.constant 0 : i32
    %c0_i32_1 = arith.constant 0 : i32
    return %c0_i32, %c0_i32_0 : i32, i32
  }
  func.func @transform_2(%arg0: i32) -> (i32, i32) {
    %c0_i32 = arith.constant 0 : i32
    %c0_i32_0 = arith.constant 0 : i32
    %c0_i32_1 = arith.constant 0 : i32
    return %c0_i32, %c0_i32_0 : i32, i32
  }
  func.func @transform_3(%arg0: i32) -> (i32, i32) {
    %c0_i32 = arith.constant 0 : i32
    %c0_i32_0 = arith.constant 0 : i32
    %c0_i32_1 = arith.constant 0 : i32
    return %c0_i32, %c0_i32_0 : i32, i32
  }
  func.func @transform_4(%arg0: i32) -> (i32, i32) {
    %c0_i32 = arith.constant 0 : i32
    %c0_i32_0 = arith.constant 0 : i32
    %c0_i32_1 = arith.constant 0 : i32
    return %c0_i32, %c0_i32_0 : i32, i32
  }
  func.func @transform_5(%arg0: i32) -> (i32, i32) {
    %c0_i32 = arith.constant 0 : i32
    %c0_i32_0 = arith.constant 0 : i32
    return %arg0, %c0_i32 : i32, i32
  }
}

module attributes {stable_mosaic.version = 11 : i64} {
  func.func @_matmul_scale_res_kernel(%arg0: i32, %arg1: memref<64x16xbf16, #tpu.memory_space<vmem>>, %arg2: memref<16x16xbf16, #tpu.memory_space<vmem>>, %arg3: memref<1x16xf32, #tpu.memory_space<vmem>>, %arg4: memref<1x16xf32, #tpu.memory_space<vmem>>, %arg5: memref<64x16xf32, #tpu.memory_space<vmem>>, %arg6: memref<64x16xf32, #tpu.memory_space<vmem>>) attributes {dimension_semantics = [#tpu.dimension_semantics<parallel>], iteration_bounds = array<i64: 2>, scalar_prefetch = 0 : i64, scratch_operands = 0 : i64, tpu.core_type = #tpu.core_type<tc>, window_params = [{transform_indices = @transform_0, window_bounds = array<i64: 64, 16>}, {pipeline_mode = #tpu.pipeline_mode<synchronous>, transform_indices = @transform_1, window_bounds = array<i64: 16, 16>}, {pipeline_mode = #tpu.pipeline_mode<synchronous>, transform_indices = @transform_2, window_bounds = array<i64: 1, 16>}, {pipeline_mode = #tpu.pipeline_mode<synchronous>, transform_indices = @transform_3, window_bounds = array<i64: 1, 16>}, {transform_indices = @transform_4, window_bounds = array<i64: 64, 16>}, {transform_indices = @transform_5, window_bounds = array<i64: 64, 16>}]} {
    %c0 = arith.constant 0 : index
    %c0_0 = arith.constant 0 : index
    %0 = vector.load %arg1[%c0, %c0_0] : memref<64x16xbf16, #tpu.memory_space<vmem>>, vector<64x16xbf16>
    %c0_1 = arith.constant 0 : index
    %c0_2 = arith.constant 0 : index
    %1 = vector.load %arg2[%c0_1, %c0_2] : memref<16x16xbf16, #tpu.memory_space<vmem>>, vector<16x16xbf16>
    %cst = arith.constant dense<0.000000e+00> : vector<64x16xf32>
    %2 = tpu.matmul %0, %1, %cst {dimension_numbers = #tpu.dot_dimension_numbers<[1], [0], [0], [1], [0, 0, 1, 1], [], []>} : vector<64x16xbf16>, vector<16x16xbf16>, vector<64x16xf32> -> vector<64x16xf32>
    %c0_3 = arith.constant 0 : index
    %c0_4 = arith.constant 0 : index
    %3 = vector.load %arg3[%c0_3, %c0_4] : memref<1x16xf32, #tpu.memory_space<vmem>>, vector<1x16xf32>
    %4 = vector.broadcast %3 : vector<1x16xf32> to vector<64x16xf32>
    %5 = arith.addf %2, %4 : vector<64x16xf32>
    %c0_5 = arith.constant 0 : index
    %c0_6 = arith.constant 0 : index
    %6 = vector.load %arg5[%c0_5, %c0_6] : memref<64x16xf32, #tpu.memory_space<vmem>>, vector<64x16xf32>
    %c0_7 = arith.constant 0 : index
    %c0_8 = arith.constant 0 : index
    %7 = vector.load %arg4[%c0_7, %c0_8] : memref<1x16xf32, #tpu.memory_space<vmem>>, vector<1x16xf32>
    %8 = vector.broadcast %7 : vector<1x16xf32> to vector<64x16xf32>
    %9 = arith.mulf %8, %5 : vector<64x16xf32>
    %10 = arith.addf %6, %9 : vector<64x16xf32>
    %c0_9 = arith.constant 0 : index
    %c0_10 = arith.constant 0 : index
    %11 = vector.load %arg6[%c0_9, %c0_10] : memref<64x16xf32, #tpu.memory_space<vmem>>, vector<64x16xf32>
    tpu.vector_store %arg6[%c0_9, %c0_10], %10 {strides = array<i32>} : memref<64x16xf32, #tpu.memory_space<vmem>>, vector<64x16xf32>,
    return
  }
  func.func @transform_0(%arg0: i32) -> (i32, i32) {
    %c0_i32 = arith.constant 0 : i32
    %c0_i32_0 = arith.constant 0 : i32
    return %arg0, %c0_i32 : i32, i32
  }
  func.func @transform_1(%arg0: i32) -> (i32, i32) {
    %c0_i32 = arith.constant 0 : i32
    %c0_i32_0 = arith.constant 0 : i32
    %c0_i32_1 = arith.constant 0 : i32
    return %c0_i32, %c0_i32_0 : i32, i32
  }
  func.func @transform_2(%arg0: i32) -> (i32, i32) {
    %c0_i32 = arith.constant 0 : i32
    %c0_i32_0 = arith.constant 0 : i32
    %c0_i32_1 = arith.constant 0 : i32
    return %c0_i32, %c0_i32_0 : i32, i32
  }
  func.func @transform_3(%arg0: i32) -> (i32, i32) {
    %c0_i32 = arith.constant 0 : i32
    %c0_i32_0 = arith.constant 0 : i32
    %c0_i32_1 = arith.constant 0 : i32
    return %c0_i32, %c0_i32_0 : i32, i32
  }
  func.func @transform_4(%arg0: i32) -> (i32, i32) {
    %c0_i32 = arith.constant 0 : i32
    %c0_i32_0 = arith.constant 0 : i32
    return %arg0, %c0_i32 : i32, i32
  }
  func.func @transform_5(%arg0: i32) -> (i32, i32) {
    %c0_i32 = arith.constant 0 : i32
    %c0_i32_0 = arith.constant 0 : i32
    return %arg0, %c0_i32 : i32, i32
  }
}

module attributes {stable_mosaic.version = 11 : i64} {
  func.func @_halo_attn_kernel(%arg0: i32, %arg1: i32, %arg2: memref<1x4x8x16xbf16, #tpu.memory_space<vmem>>, %arg3: memref<1x1x2x36x32xbf16, #tpu.memory_space<vmem>>, %arg4: memref<8x48xbf16, #tpu.memory_space<vmem>>, %arg5: memref<16x8xf32, #tpu.memory_space<vmem>>, %arg6: memref<12x36xf32, #tpu.memory_space<vmem>>, %arg7: memref<1x2x1x36xf32, #tpu.memory_space<vmem>>, %arg8: memref<1x4x8x16xbf16, #tpu.memory_space<vmem>>) attributes {dimension_semantics = [#tpu.dimension_semantics<parallel>, #tpu.dimension_semantics<parallel>], iteration_bounds = array<i64: 2, 2>, scalar_prefetch = 0 : i64, scratch_operands = 0 : i64, tpu.core_type = #tpu.core_type<tc>, window_params = [{transform_indices = @transform_0, window_bounds = array<i64: 1, 4, 8, 16>}, {transform_indices = @transform_1, window_bounds = array<i64: 1, 1, 2, 36, 32>}, {pipeline_mode = #tpu.pipeline_mode<synchronous>, transform_indices = @transform_2, window_bounds = array<i64: 8, 48>}, {pipeline_mode = #tpu.pipeline_mode<synchronous>, transform_indices = @transform_3, window_bounds = array<i64: 16, 8>}, {pipeline_mode = #tpu.pipeline_mode<synchronous>, transform_indices = @transform_4, window_bounds = array<i64: 12, 36>}, {transform_indices = @transform_5, window_bounds = array<i64: 1, 2, 1, 36>}, {transform_indices = @transform_6, window_bounds = array<i64: 1, 4, 8, 16>}]} {
    %c0 = arith.constant 0 : index
    %c0_0 = arith.constant 0 : index
    %c0_1 = arith.constant 0 : index
    %c0_2 = arith.constant 0 : index
    %0 = vector.load %arg2[%c0, %c0_0, %c0_1, %c0_2] : memref<1x4x8x16xbf16, #tpu.memory_space<vmem>>, vector<1x4x8x16xbf16>
    %1 = vector.shape_cast %0 : vector<1x4x8x16xbf16> to vector<4x8x16xbf16>
    %c0_3 = arith.constant 0 : index
    %c0_4 = arith.constant 0 : index
    %2 = vector.load %arg4[%c0_3, %c0_4] : memref<8x48xbf16, #tpu.memory_space<vmem>>, vector<8x48xbf16>
    %c0_5 = arith.constant 0 : index
    %c0_6 = arith.constant 0 : index
    %3 = vector.load %arg5[%c0_5, %c0_6] : memref<16x8xf32, #tpu.memory_space<vmem>>, vector<16x8xf32>
    %c0_7 = arith.constant 0 : index
    %c0_8 = arith.constant 0 : index
    %4 = vector.load %arg6[%c0_7, %c0_8] : memref<12x36xf32, #tpu.memory_space<vmem>>, vector<12x36xf32>
    %5 = vector.extract_strided_slice %1 {offsets = [0, 0, 0], sizes = [4, 4, 16], strides = [1, 1, 1]} : vector<4x8x16xbf16> to vector<4x4x16xbf16>
    %6 = vector.shape_cast %5 : vector<4x4x16xbf16> to vector<16x16xbf16>
    %c0_9 = arith.constant 0 : index
    %c0_10 = arith.constant 0 : index
    %c0_11 = arith.constant 0 : index
    %c0_12 = arith.constant 0 : index
    %c0_13 = arith.constant 0 : index
    %7 = vector.load %arg3[%c0_9, %c0_10, %c0_11, %c0_12, %c0_13] : memref<1x1x2x36x32xbf16, #tpu.memory_space<vmem>>, vector<1x1x1x36x32xbf16>
    %8 = vector.shape_cast %7 : vector<1x1x1x36x32xbf16> to vector<36x32xbf16>
    %c0_14 = arith.constant 0 : index
    %c0_15 = arith.constant 0 : index
    %c0_16 = arith.constant 0 : index
    %c0_17 = arith.constant 0 : index
    %9 = vector.load %arg7[%c0_14, %c0_15, %c0_16, %c0_17] : memref<1x2x1x36xf32, #tpu.memory_space<vmem>>, vector<1x1x1x36xf32>
    %10 = vector.shape_cast %9 : vector<1x1x1x36xf32> to vector<1x36xf32>
    %11 = vector.extract_strided_slice %6 {offsets = [0, 0], sizes = [16, 8], strides = [1, 1]} : vector<16x16xbf16> to vector<16x8xbf16>
    %12 = vector.extract_strided_slice %8 {offsets = [0, 0], sizes = [36, 8], strides = [1, 1]} : vector<36x32xbf16> to vector<36x8xbf16>
    %13 = vector.extract_strided_slice %8 {offsets = [0, 8], sizes = [36, 8], strides = [1, 1]} : vector<36x32xbf16> to vector<36x8xbf16>
    %cst = arith.constant dense<0.000000e+00> : vector<16x36xf32>
    %14 = tpu.matmul %11, %12, %cst {dimension_numbers = #tpu.dot_dimension_numbers<[1], [1], [0], [0], [0, 0, 1, 0], [], []>} : vector<16x8xbf16>, vector<36x8xbf16>, vector<16x36xf32> -> vector<16x36xf32>
    %cst_18 = arith.constant dense<0.000000e+00> : vector<16x48xf32>
    %15 = tpu.matmul %11, %2, %cst_18 {dimension_numbers = #tpu.dot_dimension_numbers<[1], [0], [0], [1], [0, 0, 1, 1], [], []>} : vector<16x8xbf16>, vector<8x48xbf16>, vector<16x48xf32> -> vector<16x48xf32>
    %cst_19 = arith.constant 0.000000e+00 : f32
    %16 = vector.broadcast %cst_19 : f32 to vector<16x6xf32>
    %cst_20 = arith.constant 0.000000e+00 : f32
    %17 = vector.broadcast %cst_20 : f32 to vector<16x6xf32>
    %18 = vector.extract_strided_slice %15 {offsets = [0, 0], sizes = [16, 6], strides = [1, 1]} : vector<16x48xf32> to vector<16x6xf32>
    %19 = vector.extract_strided_slice %3 {offsets = [0, 0], sizes = [16, 1], strides = [1, 1]} : vector<16x8xf32> to vector<16x1xf32>
    %20 = vector.broadcast %19 : vector<16x1xf32> to vector<16x6xf32>
    %21 = arith.mulf %18, %20 : vector<16x6xf32>
    %22 = arith.addf %16, %21 : vector<16x6xf32>
    %23 = vector.extract_strided_slice %15 {offsets = [0, 24], sizes = [16, 6], strides = [1, 1]} : vector<16x48xf32> to vector<16x6xf32>
    %24 = vector.extract_strided_slice %3 {offsets = [0, 4], sizes = [16, 1], strides = [1, 1]} : vector<16x8xf32> to vector<16x1xf32>
    %25 = vector.broadcast %24 : vector<16x1xf32> to vector<16x6xf32>
    %26 = arith.mulf %23, %25 : vector<16x6xf32>
    %27 = arith.addf %17, %26 : vector<16x6xf32>
    %28 = vector.extract_strided_slice %15 {offsets = [0, 6], sizes = [16, 6], strides = [1, 1]} : vector<16x48xf32> to vector<16x6xf32>
    %29 = vector.extract_strided_slice %3 {offsets = [0, 1], sizes = [16, 1], strides = [1, 1]} : vector<16x8xf32> to vector<16x1xf32>
    %30 = vector.broadcast %29 : vector<16x1xf32> to vector<16x6xf32>
    %31 = arith.mulf %28, %30 : vector<16x6xf32>
    %32 = arith.addf %22, %31 : vector<16x6xf32>
    %33 = vector.extract_strided_slice %15 {offsets = [0, 30], sizes = [16, 6], strides = [1, 1]} : vector<16x48xf32> to vector<16x6xf32>
    %34 = vector.extract_strided_slice %3 {offsets = [0, 5], sizes = [16, 1], strides = [1, 1]} : vector<16x8xf32> to vector<16x1xf32>
    %35 = vector.broadcast %34 : vector<16x1xf32> to vector<16x6xf32>
    %36 = arith.mulf %33, %35 : vector<16x6xf32>
    %37 = arith.addf %27, %36 : vector<16x6xf32>
    %38 = vector.extract_strided_slice %15 {offsets = [0, 12], sizes = [16, 6], strides = [1, 1]} : vector<16x48xf32> to vector<16x6xf32>
    %39 = vector.extract_strided_slice %3 {offsets = [0, 2], sizes = [16, 1], strides = [1, 1]} : vector<16x8xf32> to vector<16x1xf32>
    %40 = vector.broadcast %39 : vector<16x1xf32> to vector<16x6xf32>
    %41 = arith.mulf %38, %40 : vector<16x6xf32>
    %42 = arith.addf %32, %41 : vector<16x6xf32>
    %43 = vector.extract_strided_slice %15 {offsets = [0, 36], sizes = [16, 6], strides = [1, 1]} : vector<16x48xf32> to vector<16x6xf32>
    %44 = vector.extract_strided_slice %3 {offsets = [0, 6], sizes = [16, 1], strides = [1, 1]} : vector<16x8xf32> to vector<16x1xf32>
    %45 = vector.broadcast %44 : vector<16x1xf32> to vector<16x6xf32>
    %46 = arith.mulf %43, %45 : vector<16x6xf32>
    %47 = arith.addf %37, %46 : vector<16x6xf32>
    %48 = vector.extract_strided_slice %15 {offsets = [0, 18], sizes = [16, 6], strides = [1, 1]} : vector<16x48xf32> to vector<16x6xf32>
    %49 = vector.extract_strided_slice %3 {offsets = [0, 3], sizes = [16, 1], strides = [1, 1]} : vector<16x8xf32> to vector<16x1xf32>
    %50 = vector.broadcast %49 : vector<16x1xf32> to vector<16x6xf32>
    %51 = arith.mulf %48, %50 : vector<16x6xf32>
    %52 = arith.addf %42, %51 : vector<16x6xf32>
    %53 = vector.extract_strided_slice %15 {offsets = [0, 42], sizes = [16, 6], strides = [1, 1]} : vector<16x48xf32> to vector<16x6xf32>
    %54 = vector.extract_strided_slice %3 {offsets = [0, 7], sizes = [16, 1], strides = [1, 1]} : vector<16x8xf32> to vector<16x1xf32>
    %55 = vector.broadcast %54 : vector<16x1xf32> to vector<16x6xf32>
    %56 = arith.mulf %53, %55 : vector<16x6xf32>
    %57 = arith.addf %47, %56 : vector<16x6xf32>
    %58 = tpu.concatenate %52, %57 in 1 : vector<16x6xf32>, vector<16x6xf32> -> vector<16x12xf32>
    %cst_21 = arith.constant dense<0.000000e+00> : vector<16x36xf32>
    %59 = tpu.matmul %58, %4, %cst_21 {dimension_numbers = #tpu.dot_dimension_numbers<[1], [0], [0], [1], [0, 0, 1, 1], [], []>} : vector<16x12xf32>, vector<12x36xf32>, vector<16x36xf32> -> vector<16x36xf32>
    %cst_22 = arith.constant 0.353553385 : f32
    %60 = vector.broadcast %cst_22 : f32 to vector<16x36xf32>
    %61 = arith.mulf %14, %60 : vector<16x36xf32>
    %62 = arith.addf %61, %59 : vector<16x36xf32>
    %63 = vector.broadcast %10 : vector<1x36xf32> to vector<16x36xf32>
    %64 = arith.addf %62, %63 : vector<16x36xf32>
    %cst_23 = arith.constant dense<0xFF800000> : vector<16xf32>
    %65 = vector.multi_reduction <maximumf>, %64, %cst_23 [1] : vector<16x36xf32> to vector<16xf32>
    %66 = vector.shape_cast %65 : vector<16xf32> to vector<16x1xf32>
    %67 = vector.broadcast %66 : vector<16x1xf32> to vector<16x36xf32>
    %68 = arith.subf %64, %67 : vector<16x36xf32>
    %69 = math.exp %68 : vector<16x36xf32>
    %cst_24 = arith.constant dense<0.000000e+00> : vector<16xf32>
    %70 = vector.multi_reduction <add>, %69, %cst_24 [1] : vector<16x36xf32> to vector<16xf32>
    %71 = vector.shape_cast %70 : vector<16xf32> to vector<16x1xf32>
    %72 = tpu.reciprocal %71 {approx = true} : vector<16x1xf32> -> vector<16x1xf32>
    %73 = vector.broadcast %72 : vector<16x1xf32> to vector<16x36xf32>
    %74 = arith.mulf %69, %73 : vector<16x36xf32>
    %75 = arith.truncf %74 : vector<16x36xf32> to vector<16x36xbf16>
    %cst_25 = arith.constant dense<0.000000e+00> : vector<16x8xf32>
    %76 = tpu.matmul %75, %13, %cst_25 {dimension_numbers = #tpu.dot_dimension_numbers<[1], [0], [0], [1], [0, 0, 1, 1], [], []>} : vector<16x36xbf16>, vector<36x8xbf16>, vector<16x8xf32> -> vector<16x8xf32>
    %77 = arith.truncf %76 : vector<16x8xf32> to vector<16x8xbf16>
    %78 = vector.shape_cast %77 : vector<16x8xbf16> to vector<4x4x8xbf16>
    %c0_26 = arith.constant 0 : index
    %c0_27 = arith.constant 0 : index
    %c0_28 = arith.constant 0 : index
    %c0_29 = arith.constant 0 : index
    %79 = vector.load %arg8[%c0_26, %c0_27, %c0_28, %c0_29] : memref<1x4x8x16xbf16, #tpu.memory_space<vmem>>, vector<1x4x4x8xbf16>
    %80 = vector.shape_cast %79 : vector<1x4x4x8xbf16> to vector<4x4x8xbf16>
    %81 = vector.shape_cast %78 : vector<4x4x8xbf16> to vector<1x4x4x8xbf16>
    tpu.vector_store %arg8[%c0_26, %c0_27, %c0_28, %c0_29], %81 {strides = array<i32>} : memref<1x4x8x16xbf16, #tpu.memory_space<vmem>>, vector<1x4x4x8xbf16>,
    %82 = vector.extract_strided_slice %6 {offsets = [0, 8], sizes = [16, 8], strides = [1, 1]} : vector<16x16xbf16> to vector<16x8xbf16>
    %83 = vector.extract_strided_slice %8 {offsets = [0, 16], sizes = [36, 8], strides = [1, 1]} : vector<36x32xbf16> to vector<36x8xbf16>
    %84 = vector.extract_strided_slice %8 {offsets = [0, 24], sizes = [36, 8], strides = [1, 1]} : vector<36x32xbf16> to vector<36x8xbf16>
    %cst_30 = arith.constant dense<0.000000e+00> : vector<16x36xf32>
    %85 = tpu.matmul %82, %83, %cst_30 {dimension_numbers = #tpu.dot_dimension_numbers<[1], [1], [0], [0], [0, 0, 1, 0], [], []>} : vector<16x8xbf16>, vector<36x8xbf16>, vector<16x36xf32> -> vector<16x36xf32>
    %cst_31 = arith.constant dense<0.000000e+00> : vector<16x48xf32>
    %86 = tpu.matmul %82, %2, %cst_31 {dimension_numbers = #tpu.dot_dimension_numbers<[1], [0], [0], [1], [0, 0, 1, 1], [], []>} : vector<16x8xbf16>, vector<8x48xbf16>, vector<16x48xf32> -> vector<16x48xf32>
    %cst_32 = arith.constant 0.000000e+00 : f32
    %87 = vector.broadcast %cst_32 : f32 to vector<16x6xf32>
    %cst_33 = arith.constant 0.000000e+00 : f32
    %88 = vector.broadcast %cst_33 : f32 to vector<16x6xf32>
    %89 = vector.extract_strided_slice %86 {offsets = [0, 0], sizes = [16, 6], strides = [1, 1]} : vector<16x48xf32> to vector<16x6xf32>
    %90 = vector.extract_strided_slice %3 {offsets = [0, 0], sizes = [16, 1], strides = [1, 1]} : vector<16x8xf32> to vector<16x1xf32>
    %91 = vector.broadcast %90 : vector<16x1xf32> to vector<16x6xf32>
    %92 = arith.mulf %89, %91 : vector<16x6xf32>
    %93 = arith.addf %87, %92 : vector<16x6xf32>
    %94 = vector.extract_strided_slice %86 {offsets = [0, 24], sizes = [16, 6], strides = [1, 1]} : vector<16x48xf32> to vector<16x6xf32>
    %95 = vector.extract_strided_slice %3 {offsets = [0, 4], sizes = [16, 1], strides = [1, 1]} : vector<16x8xf32> to vector<16x1xf32>
    %96 = vector.broadcast %95 : vector<16x1xf32> to vector<16x6xf32>
    %97 = arith.mulf %94, %96 : vector<16x6xf32>
    %98 = arith.addf %88, %97 : vector<16x6xf32>
    %99 = vector.extract_strided_slice %86 {offsets = [0, 6], sizes = [16, 6], strides = [1, 1]} : vector<16x48xf32> to vector<16x6xf32>
    %100 = vector.extract_strided_slice %3 {offsets = [0, 1], sizes = [16, 1], strides = [1, 1]} : vector<16x8xf32> to vector<16x1xf32>
    %101 = vector.broadcast %100 : vector<16x1xf32> to vector<16x6xf32>
    %102 = arith.mulf %99, %101 : vector<16x6xf32>
    %103 = arith.addf %93, %102 : vector<16x6xf32>
    %104 = vector.extract_strided_slice %86 {offsets = [0, 30], sizes = [16, 6], strides = [1, 1]} : vector<16x48xf32> to vector<16x6xf32>
    %105 = vector.extract_strided_slice %3 {offsets = [0, 5], sizes = [16, 1], strides = [1, 1]} : vector<16x8xf32> to vector<16x1xf32>
    %106 = vector.broadcast %105 : vector<16x1xf32> to vector<16x6xf32>
    %107 = arith.mulf %104, %106 : vector<16x6xf32>
    %108 = arith.addf %98, %107 : vector<16x6xf32>
    %109 = vector.extract_strided_slice %86 {offsets = [0, 12], sizes = [16, 6], strides = [1, 1]} : vector<16x48xf32> to vector<16x6xf32>
    %110 = vector.extract_strided_slice %3 {offsets = [0, 2], sizes = [16, 1], strides = [1, 1]} : vector<16x8xf32> to vector<16x1xf32>
    %111 = vector.broadcast %110 : vector<16x1xf32> to vector<16x6xf32>
    %112 = arith.mulf %109, %111 : vector<16x6xf32>
    %113 = arith.addf %103, %112 : vector<16x6xf32>
    %114 = vector.extract_strided_slice %86 {offsets = [0, 36], sizes = [16, 6], strides = [1, 1]} : vector<16x48xf32> to vector<16x6xf32>
    %115 = vector.extract_strided_slice %3 {offsets = [0, 6], sizes = [16, 1], strides = [1, 1]} : vector<16x8xf32> to vector<16x1xf32>
    %116 = vector.broadcast %115 : vector<16x1xf32> to vector<16x6xf32>
    %117 = arith.mulf %114, %116 : vector<16x6xf32>
    %118 = arith.addf %108, %117 : vector<16x6xf32>
    %119 = vector.extract_strided_slice %86 {offsets = [0, 18], sizes = [16, 6], strides = [1, 1]} : vector<16x48xf32> to vector<16x6xf32>
    %120 = vector.extract_strided_slice %3 {offsets = [0, 3], sizes = [16, 1], strides = [1, 1]} : vector<16x8xf32> to vector<16x1xf32>
    %121 = vector.broadcast %120 : vector<16x1xf32> to vector<16x6xf32>
    %122 = arith.mulf %119, %121 : vector<16x6xf32>
    %123 = arith.addf %113, %122 : vector<16x6xf32>
    %124 = vector.extract_strided_slice %86 {offsets = [0, 42], sizes = [16, 6], strides = [1, 1]} : vector<16x48xf32> to vector<16x6xf32>
    %125 = vector.extract_strided_slice %3 {offsets = [0, 7], sizes = [16, 1], strides = [1, 1]} : vector<16x8xf32> to vector<16x1xf32>
    %126 = vector.broadcast %125 : vector<16x1xf32> to vector<16x6xf32>
    %127 = arith.mulf %124, %126 : vector<16x6xf32>
    %128 = arith.addf %118, %127 : vector<16x6xf32>
    %129 = tpu.concatenate %123, %128 in 1 : vector<16x6xf32>, vector<16x6xf32> -> vector<16x12xf32>
    %cst_34 = arith.constant dense<0.000000e+00> : vector<16x36xf32>
    %130 = tpu.matmul %129, %4, %cst_34 {dimension_numbers = #tpu.dot_dimension_numbers<[1], [0], [0], [1], [0, 0, 1, 1], [], []>} : vector<16x12xf32>, vector<12x36xf32>, vector<16x36xf32> -> vector<16x36xf32>
    %cst_35 = arith.constant 0.353553385 : f32
    %131 = vector.broadcast %cst_35 : f32 to vector<16x36xf32>
    %132 = arith.mulf %85, %131 : vector<16x36xf32>
    %133 = arith.addf %132, %130 : vector<16x36xf32>
    %134 = vector.broadcast %10 : vector<1x36xf32> to vector<16x36xf32>
    %135 = arith.addf %133, %134 : vector<16x36xf32>
    %cst_36 = arith.constant dense<0xFF800000> : vector<16xf32>
    %136 = vector.multi_reduction <maximumf>, %135, %cst_36 [1] : vector<16x36xf32> to vector<16xf32>
    %137 = vector.shape_cast %136 : vector<16xf32> to vector<16x1xf32>
    %138 = vector.broadcast %137 : vector<16x1xf32> to vector<16x36xf32>
    %139 = arith.subf %135, %138 : vector<16x36xf32>
    %140 = math.exp %139 : vector<16x36xf32>
    %cst_37 = arith.constant dense<0.000000e+00> : vector<16xf32>
    %141 = vector.multi_reduction <add>, %140, %cst_37 [1] : vector<16x36xf32> to vector<16xf32>
    %142 = vector.shape_cast %141 : vector<16xf32> to vector<16x1xf32>
    %143 = tpu.reciprocal %142 {approx = true} : vector<16x1xf32> -> vector<16x1xf32>
    %144 = vector.broadcast %143 : vector<16x1xf32> to vector<16x36xf32>
    %145 = arith.mulf %140, %144 : vector<16x36xf32>
    %146 = arith.truncf %145 : vector<16x36xf32> to vector<16x36xbf16>
    %cst_38 = arith.constant dense<0.000000e+00> : vector<16x8xf32>
    %147 = tpu.matmul %146, %84, %cst_38 {dimension_numbers = #tpu.dot_dimension_numbers<[1], [0], [0], [1], [0, 0, 1, 1], [], []>} : vector<16x36xbf16>, vector<36x8xbf16>, vector<16x8xf32> -> vector<16x8xf32>
    %148 = arith.truncf %147 : vector<16x8xf32> to vector<16x8xbf16>
    %149 = vector.shape_cast %148 : vector<16x8xbf16> to vector<4x4x8xbf16>
    %c0_39 = arith.constant 0 : index
    %c0_40 = arith.constant 0 : index
    %c0_41 = arith.constant 0 : index
    %c8 = arith.constant 8 : index
    %150 = vector.load %arg8[%c0_39, %c0_40, %c0_41, %c8] : memref<1x4x8x16xbf16, #tpu.memory_space<vmem>>, vector<1x4x4x8xbf16>
    %151 = vector.shape_cast %150 : vector<1x4x4x8xbf16> to vector<4x4x8xbf16>
    %152 = vector.shape_cast %149 : vector<4x4x8xbf16> to vector<1x4x4x8xbf16>
    tpu.vector_store %arg8[%c0_39, %c0_40, %c0_41, %c8], %152 {strides = array<i32>} : memref<1x4x8x16xbf16, #tpu.memory_space<vmem>>, vector<1x4x4x8xbf16>,
    %153 = vector.extract_strided_slice %1 {offsets = [0, 4, 0], sizes = [4, 4, 16], strides = [1, 1, 1]} : vector<4x8x16xbf16> to vector<4x4x16xbf16>
    %154 = vector.shape_cast %153 : vector<4x4x16xbf16> to vector<16x16xbf16>
    %c0_42 = arith.constant 0 : index
    %c0_43 = arith.constant 0 : index
    %c1 = arith.constant 1 : index
    %c0_44 = arith.constant 0 : index
    %c0_45 = arith.constant 0 : index
    %155 = vector.load %arg3[%c0_42, %c0_43, %c1, %c0_44, %c0_45] : memref<1x1x2x36x32xbf16, #tpu.memory_space<vmem>>, vector<1x1x1x36x32xbf16>
    %156 = vector.shape_cast %155 : vector<1x1x1x36x32xbf16> to vector<36x32xbf16>
    %c0_46 = arith.constant 0 : index
    %c1_47 = arith.constant 1 : index
    %c0_48 = arith.constant 0 : index
    %c0_49 = arith.constant 0 : index
    %157 = vector.load %arg7[%c0_46, %c1_47, %c0_48, %c0_49] : memref<1x2x1x36xf32, #tpu.memory_space<vmem>>, vector<1x1x1x36xf32>
    %158 = vector.shape_cast %157 : vector<1x1x1x36xf32> to vector<1x36xf32>
    %159 = vector.extract_strided_slice %154 {offsets = [0, 0], sizes = [16, 8], strides = [1, 1]} : vector<16x16xbf16> to vector<16x8xbf16>
    %160 = vector.extract_strided_slice %156 {offsets = [0, 0], sizes = [36, 8], strides = [1, 1]} : vector<36x32xbf16> to vector<36x8xbf16>
    %161 = vector.extract_strided_slice %156 {offsets = [0, 8], sizes = [36, 8], strides = [1, 1]} : vector<36x32xbf16> to vector<36x8xbf16>
    %cst_50 = arith.constant dense<0.000000e+00> : vector<16x36xf32>
    %162 = tpu.matmul %159, %160, %cst_50 {dimension_numbers = #tpu.dot_dimension_numbers<[1], [1], [0], [0], [0, 0, 1, 0], [], []>} : vector<16x8xbf16>, vector<36x8xbf16>, vector<16x36xf32> -> vector<16x36xf32>
    %cst_51 = arith.constant dense<0.000000e+00> : vector<16x48xf32>
    %163 = tpu.matmul %159, %2, %cst_51 {dimension_numbers = #tpu.dot_dimension_numbers<[1], [0], [0], [1], [0, 0, 1, 1], [], []>} : vector<16x8xbf16>, vector<8x48xbf16>, vector<16x48xf32> -> vector<16x48xf32>
    %cst_52 = arith.constant 0.000000e+00 : f32
    %164 = vector.broadcast %cst_52 : f32 to vector<16x6xf32>
    %cst_53 = arith.constant 0.000000e+00 : f32
    %165 = vector.broadcast %cst_53 : f32 to vector<16x6xf32>
    %166 = vector.extract_strided_slice %163 {offsets = [0, 0], sizes = [16, 6], strides = [1, 1]} : vector<16x48xf32> to vector<16x6xf32>
    %167 = vector.extract_strided_slice %3 {offsets = [0, 0], sizes = [16, 1], strides = [1, 1]} : vector<16x8xf32> to vector<16x1xf32>
    %168 = vector.broadcast %167 : vector<16x1xf32> to vector<16x6xf32>
    %169 = arith.mulf %166, %168 : vector<16x6xf32>
    %170 = arith.addf %164, %169 : vector<16x6xf32>
    %171 = vector.extract_strided_slice %163 {offsets = [0, 24], sizes = [16, 6], strides = [1, 1]} : vector<16x48xf32> to vector<16x6xf32>
    %172 = vector.extract_strided_slice %3 {offsets = [0, 4], sizes = [16, 1], strides = [1, 1]} : vector<16x8xf32> to vector<16x1xf32>
    %173 = vector.broadcast %172 : vector<16x1xf32> to vector<16x6xf32>
    %174 = arith.mulf %171, %173 : vector<16x6xf32>
    %175 = arith.addf %165, %174 : vector<16x6xf32>
    %176 = vector.extract_strided_slice %163 {offsets = [0, 6], sizes = [16, 6], strides = [1, 1]} : vector<16x48xf32> to vector<16x6xf32>
    %177 = vector.extract_strided_slice %3 {offsets = [0, 1], sizes = [16, 1], strides = [1, 1]} : vector<16x8xf32> to vector<16x1xf32>
    %178 = vector.broadcast %177 : vector<16x1xf32> to vector<16x6xf32>
    %179 = arith.mulf %176, %178 : vector<16x6xf32>
    %180 = arith.addf %170, %179 : vector<16x6xf32>
    %181 = vector.extract_strided_slice %163 {offsets = [0, 30], sizes = [16, 6], strides = [1, 1]} : vector<16x48xf32> to vector<16x6xf32>
    %182 = vector.extract_strided_slice %3 {offsets = [0, 5], sizes = [16, 1], strides = [1, 1]} : vector<16x8xf32> to vector<16x1xf32>
    %183 = vector.broadcast %182 : vector<16x1xf32> to vector<16x6xf32>
    %184 = arith.mulf %181, %183 : vector<16x6xf32>
    %185 = arith.addf %175, %184 : vector<16x6xf32>
    %186 = vector.extract_strided_slice %163 {offsets = [0, 12], sizes = [16, 6], strides = [1, 1]} : vector<16x48xf32> to vector<16x6xf32>
    %187 = vector.extract_strided_slice %3 {offsets = [0, 2], sizes = [16, 1], strides = [1, 1]} : vector<16x8xf32> to vector<16x1xf32>
    %188 = vector.broadcast %187 : vector<16x1xf32> to vector<16x6xf32>
    %189 = arith.mulf %186, %188 : vector<16x6xf32>
    %190 = arith.addf %180, %189 : vector<16x6xf32>
    %191 = vector.extract_strided_slice %163 {offsets = [0, 36], sizes = [16, 6], strides = [1, 1]} : vector<16x48xf32> to vector<16x6xf32>
    %192 = vector.extract_strided_slice %3 {offsets = [0, 6], sizes = [16, 1], strides = [1, 1]} : vector<16x8xf32> to vector<16x1xf32>
    %193 = vector.broadcast %192 : vector<16x1xf32> to vector<16x6xf32>
    %194 = arith.mulf %191, %193 : vector<16x6xf32>
    %195 = arith.addf %185, %194 : vector<16x6xf32>
    %196 = vector.extract_strided_slice %163 {offsets = [0, 18], sizes = [16, 6], strides = [1, 1]} : vector<16x48xf32> to vector<16x6xf32>
    %197 = vector.extract_strided_slice %3 {offsets = [0, 3], sizes = [16, 1], strides = [1, 1]} : vector<16x8xf32> to vector<16x1xf32>
    %198 = vector.broadcast %197 : vector<16x1xf32> to vector<16x6xf32>
    %199 = arith.mulf %196, %198 : vector<16x6xf32>
    %200 = arith.addf %190, %199 : vector<16x6xf32>
    %201 = vector.extract_strided_slice %163 {offsets = [0, 42], sizes = [16, 6], strides = [1, 1]} : vector<16x48xf32> to vector<16x6xf32>
    %202 = vector.extract_strided_slice %3 {offsets = [0, 7], sizes = [16, 1], strides = [1, 1]} : vector<16x8xf32> to vector<16x1xf32>
    %203 = vector.broadcast %202 : vector<16x1xf32> to vector<16x6xf32>
    %204 = arith.mulf %201, %203 : vector<16x6xf32>
    %205 = arith.addf %195, %204 : vector<16x6xf32>
    %206 = tpu.concatenate %200, %205 in 1 : vector<16x6xf32>, vector<16x6xf32> -> vector<16x12xf32>
    %cst_54 = arith.constant dense<0.000000e+00> : vector<16x36xf32>
    %207 = tpu.matmul %206, %4, %cst_54 {dimension_numbers = #tpu.dot_dimension_numbers<[1], [0], [0], [1], [0, 0, 1, 1], [], []>} : vector<16x12xf32>, vector<12x36xf32>, vector<16x36xf32> -> vector<16x36xf32>
    %cst_55 = arith.constant 0.353553385 : f32
    %208 = vector.broadcast %cst_55 : f32 to vector<16x36xf32>
    %209 = arith.mulf %162, %208 : vector<16x36xf32>
    %210 = arith.addf %209, %207 : vector<16x36xf32>
    %211 = vector.broadcast %158 : vector<1x36xf32> to vector<16x36xf32>
    %212 = arith.addf %210, %211 : vector<16x36xf32>
    %cst_56 = arith.constant dense<0xFF800000> : vector<16xf32>
    %213 = vector.multi_reduction <maximumf>, %212, %cst_56 [1] : vector<16x36xf32> to vector<16xf32>
    %214 = vector.shape_cast %213 : vector<16xf32> to vector<16x1xf32>
    %215 = vector.broadcast %214 : vector<16x1xf32> to vector<16x36xf32>
    %216 = arith.subf %212, %215 : vector<16x36xf32>
    %217 = math.exp %216 : vector<16x36xf32>
    %cst_57 = arith.constant dense<0.000000e+00> : vector<16xf32>
    %218 = vector.multi_reduction <add>, %217, %cst_57 [1] : vector<16x36xf32> to vector<16xf32>
    %219 = vector.shape_cast %218 : vector<16xf32> to vector<16x1xf32>
    %220 = tpu.reciprocal %219 {approx = true} : vector<16x1xf32> -> vector<16x1xf32>
    %221 = vector.broadcast %220 : vector<16x1xf32> to vector<16x36xf32>
    %222 = arith.mulf %217, %221 : vector<16x36xf32>
    %223 = arith.truncf %222 : vector<16x36xf32> to vector<16x36xbf16>
    %cst_58 = arith.constant dense<0.000000e+00> : vector<16x8xf32>
    %224 = tpu.matmul %223, %161, %cst_58 {dimension_numbers = #tpu.dot_dimension_numbers<[1], [0], [0], [1], [0, 0, 1, 1], [], []>} : vector<16x36xbf16>, vector<36x8xbf16>, vector<16x8xf32> -> vector<16x8xf32>
    %225 = arith.truncf %224 : vector<16x8xf32> to vector<16x8xbf16>
    %226 = vector.shape_cast %225 : vector<16x8xbf16> to vector<4x4x8xbf16>
    %c0_59 = arith.constant 0 : index
    %c0_60 = arith.constant 0 : index
    %c4 = arith.constant 4 : index
    %c0_61 = arith.constant 0 : index
    %227 = vector.load %arg8[%c0_59, %c0_60, %c4, %c0_61] : memref<1x4x8x16xbf16, #tpu.memory_space<vmem>>, vector<1x4x4x8xbf16>
    %228 = vector.shape_cast %227 : vector<1x4x4x8xbf16> to vector<4x4x8xbf16>
    %229 = vector.shape_cast %226 : vector<4x4x8xbf16> to vector<1x4x4x8xbf16>
    tpu.vector_store %arg8[%c0_59, %c0_60, %c4, %c0_61], %229 {strides = array<i32>} : memref<1x4x8x16xbf16, #tpu.memory_space<vmem>>, vector<1x4x4x8xbf16>,
    %230 = vector.extract_strided_slice %154 {offsets = [0, 8], sizes = [16, 8], strides = [1, 1]} : vector<16x16xbf16> to vector<16x8xbf16>
    %231 = vector.extract_strided_slice %156 {offsets = [0, 16], sizes = [36, 8], strides = [1, 1]} : vector<36x32xbf16> to vector<36x8xbf16>
    %232 = vector.extract_strided_slice %156 {offsets = [0, 24], sizes = [36, 8], strides = [1, 1]} : vector<36x32xbf16> to vector<36x8xbf16>
    %cst_62 = arith.constant dense<0.000000e+00> : vector<16x36xf32>
    %233 = tpu.matmul %230, %231, %cst_62 {dimension_numbers = #tpu.dot_dimension_numbers<[1], [1], [0], [0], [0, 0, 1, 0], [], []>} : vector<16x8xbf16>, vector<36x8xbf16>, vector<16x36xf32> -> vector<16x36xf32>
    %cst_63 = arith.constant dense<0.000000e+00> : vector<16x48xf32>
    %234 = tpu.matmul %230, %2, %cst_63 {dimension_numbers = #tpu.dot_dimension_numbers<[1], [0], [0], [1], [0, 0, 1, 1], [], []>} : vector<16x8xbf16>, vector<8x48xbf16>, vector<16x48xf32> -> vector<16x48xf32>
    %cst_64 = arith.constant 0.000000e+00 : f32
    %235 = vector.broadcast %cst_64 : f32 to vector<16x6xf32>
    %cst_65 = arith.constant 0.000000e+00 : f32
    %236 = vector.broadcast %cst_65 : f32 to vector<16x6xf32>
    %237 = vector.extract_strided_slice %234 {offsets = [0, 0], sizes = [16, 6], strides = [1, 1]} : vector<16x48xf32> to vector<16x6xf32>
    %238 = vector.extract_strided_slice %3 {offsets = [0, 0], sizes = [16, 1], strides = [1, 1]} : vector<16x8xf32> to vector<16x1xf32>
    %239 = vector.broadcast %238 : vector<16x1xf32> to vector<16x6xf32>
    %240 = arith.mulf %237, %239 : vector<16x6xf32>
    %241 = arith.addf %235, %240 : vector<16x6xf32>
    %242 = vector.extract_strided_slice %234 {offsets = [0, 24], sizes = [16, 6], strides = [1, 1]} : vector<16x48xf32> to vector<16x6xf32>
    %243 = vector.extract_strided_slice %3 {offsets = [0, 4], sizes = [16, 1], strides = [1, 1]} : vector<16x8xf32> to vector<16x1xf32>
    %244 = vector.broadcast %243 : vector<16x1xf32> to vector<16x6xf32>
    %245 = arith.mulf %242, %244 : vector<16x6xf32>
    %246 = arith.addf %236, %245 : vector<16x6xf32>
    %247 = vector.extract_strided_slice %234 {offsets = [0, 6], sizes = [16, 6], strides = [1, 1]} : vector<16x48xf32> to vector<16x6xf32>
    %248 = vector.extract_strided_slice %3 {offsets = [0, 1], sizes = [16, 1], strides = [1, 1]} : vector<16x8xf32> to vector<16x1xf32>
    %249 = vector.broadcast %248 : vector<16x1xf32> to vector<16x6xf32>
    %250 = arith.mulf %247, %249 : vector<16x6xf32>
    %251 = arith.addf %241, %250 : vector<16x6xf32>
    %252 = vector.extract_strided_slice %234 {offsets = [0, 30], sizes = [16, 6], strides = [1, 1]} : vector<16x48xf32> to vector<16x6xf32>
    %253 = vector.extract_strided_slice %3 {offsets = [0, 5], sizes = [16, 1], strides = [1, 1]} : vector<16x8xf32> to vector<16x1xf32>
    %254 = vector.broadcast %253 : vector<16x1xf32> to vector<16x6xf32>
    %255 = arith.mulf %252, %254 : vector<16x6xf32>
    %256 = arith.addf %246, %255 : vector<16x6xf32>
    %257 = vector.extract_strided_slice %234 {offsets = [0, 12], sizes = [16, 6], strides = [1, 1]} : vector<16x48xf32> to vector<16x6xf32>
    %258 = vector.extract_strided_slice %3 {offsets = [0, 2], sizes = [16, 1], strides = [1, 1]} : vector<16x8xf32> to vector<16x1xf32>
    %259 = vector.broadcast %258 : vector<16x1xf32> to vector<16x6xf32>
    %260 = arith.mulf %257, %259 : vector<16x6xf32>
    %261 = arith.addf %251, %260 : vector<16x6xf32>
    %262 = vector.extract_strided_slice %234 {offsets = [0, 36], sizes = [16, 6], strides = [1, 1]} : vector<16x48xf32> to vector<16x6xf32>
    %263 = vector.extract_strided_slice %3 {offsets = [0, 6], sizes = [16, 1], strides = [1, 1]} : vector<16x8xf32> to vector<16x1xf32>
    %264 = vector.broadcast %263 : vector<16x1xf32> to vector<16x6xf32>
    %265 = arith.mulf %262, %264 : vector<16x6xf32>
    %266 = arith.addf %256, %265 : vector<16x6xf32>
    %267 = vector.extract_strided_slice %234 {offsets = [0, 18], sizes = [16, 6], strides = [1, 1]} : vector<16x48xf32> to vector<16x6xf32>
    %268 = vector.extract_strided_slice %3 {offsets = [0, 3], sizes = [16, 1], strides = [1, 1]} : vector<16x8xf32> to vector<16x1xf32>
    %269 = vector.broadcast %268 : vector<16x1xf32> to vector<16x6xf32>
    %270 = arith.mulf %267, %269 : vector<16x6xf32>
    %271 = arith.addf %261, %270 : vector<16x6xf32>
    %272 = vector.extract_strided_slice %234 {offsets = [0, 42], sizes = [16, 6], strides = [1, 1]} : vector<16x48xf32> to vector<16x6xf32>
    %273 = vector.extract_strided_slice %3 {offsets = [0, 7], sizes = [16, 1], strides = [1, 1]} : vector<16x8xf32> to vector<16x1xf32>
    %274 = vector.broadcast %273 : vector<16x1xf32> to vector<16x6xf32>
    %275 = arith.mulf %272, %274 : vector<16x6xf32>
    %276 = arith.addf %266, %275 : vector<16x6xf32>
    %277 = tpu.concatenate %271, %276 in 1 : vector<16x6xf32>, vector<16x6xf32> -> vector<16x12xf32>
    %cst_66 = arith.constant dense<0.000000e+00> : vector<16x36xf32>
    %278 = tpu.matmul %277, %4, %cst_66 {dimension_numbers = #tpu.dot_dimension_numbers<[1], [0], [0], [1], [0, 0, 1, 1], [], []>} : vector<16x12xf32>, vector<12x36xf32>, vector<16x36xf32> -> vector<16x36xf32>
    %cst_67 = arith.constant 0.353553385 : f32
    %279 = vector.broadcast %cst_67 : f32 to vector<16x36xf32>
    %280 = arith.mulf %233, %279 : vector<16x36xf32>
    %281 = arith.addf %280, %278 : vector<16x36xf32>
    %282 = vector.broadcast %158 : vector<1x36xf32> to vector<16x36xf32>
    %283 = arith.addf %281, %282 : vector<16x36xf32>
    %cst_68 = arith.constant dense<0xFF800000> : vector<16xf32>
    %284 = vector.multi_reduction <maximumf>, %283, %cst_68 [1] : vector<16x36xf32> to vector<16xf32>
    %285 = vector.shape_cast %284 : vector<16xf32> to vector<16x1xf32>
    %286 = vector.broadcast %285 : vector<16x1xf32> to vector<16x36xf32>
    %287 = arith.subf %283, %286 : vector<16x36xf32>
    %288 = math.exp %287 : vector<16x36xf32>
    %cst_69 = arith.constant dense<0.000000e+00> : vector<16xf32>
    %289 = vector.multi_reduction <add>, %288, %cst_69 [1] : vector<16x36xf32> to vector<16xf32>
    %290 = vector.shape_cast %289 : vector<16xf32> to vector<16x1xf32>
    %291 = tpu.reciprocal %290 {approx = true} : vector<16x1xf32> -> vector<16x1xf32>
    %292 = vector.broadcast %291 : vector<16x1xf32> to vector<16x36xf32>
    %293 = arith.mulf %288, %292 : vector<16x36xf32>
    %294 = arith.truncf %293 : vector<16x36xf32> to vector<16x36xbf16>
    %cst_70 = arith.constant dense<0.000000e+00> : vector<16x8xf32>
    %295 = tpu.matmul %294, %232, %cst_70 {dimension_numbers = #tpu.dot_dimension_numbers<[1], [0], [0], [1], [0, 0, 1, 1], [], []>} : vector<16x36xbf16>, vector<36x8xbf16>, vector<16x8xf32> -> vector<16x8xf32>
    %296 = arith.truncf %295 : vector<16x8xf32> to vector<16x8xbf16>
    %297 = vector.shape_cast %296 : vector<16x8xbf16> to vector<4x4x8xbf16>
    %c0_71 = arith.constant 0 : index
    %c0_72 = arith.constant 0 : index
    %c4_73 = arith.constant 4 : index
    %c8_74 = arith.constant 8 : index
    %298 = vector.load %arg8[%c0_71, %c0_72, %c4_73, %c8_74] : memref<1x4x8x16xbf16, #tpu.memory_space<vmem>>, vector<1x4x4x8xbf16>
    %299 = vector.shape_cast %298 : vector<1x4x4x8xbf16> to vector<4x4x8xbf16>
    %300 = vector.shape_cast %297 : vector<4x4x8xbf16> to vector<1x4x4x8xbf16>
    tpu.vector_store %arg8[%c0_71, %c0_72, %c4_73, %c8_74], %300 {strides = array<i32>} : memref<1x4x8x16xbf16, #tpu.memory_space<vmem>>, vector<1x4x4x8xbf16>,
    return
  }
  func.func @transform_0(%arg0: i32, %arg1: i32) -> (i32, i32, i32, i32) {
    %c0_i32 = arith.constant 0 : i32
    %c0_i32_0 = arith.constant 0 : i32
    %c0_i32_1 = arith.constant 0 : i32
    return %arg0, %arg1, %c0_i32, %c0_i32_0 : i32, i32, i32, i32
  }
  func.func @transform_1(%arg0: i32, %arg1: i32) -> (i32, i32, i32, i32, i32) {
    %c0_i32 = arith.constant 0 : i32
    %c0_i32_0 = arith.constant 0 : i32
    %c0_i32_1 = arith.constant 0 : i32
    %c0_i32_2 = arith.constant 0 : i32
    return %arg0, %arg1, %c0_i32, %c0_i32_0, %c0_i32_1 : i32, i32, i32, i32, i32
  }
  func.func @transform_2(%arg0: i32, %arg1: i32) -> (i32, i32) {
    %c0_i32 = arith.constant 0 : i32
    %c0_i32_0 = arith.constant 0 : i32
    %c0_i32_1 = arith.constant 0 : i32
    return %c0_i32, %c0_i32_0 : i32, i32
  }
  func.func @transform_3(%arg0: i32, %arg1: i32) -> (i32, i32) {
    %c0_i32 = arith.constant 0 : i32
    %c0_i32_0 = arith.constant 0 : i32
    %c0_i32_1 = arith.constant 0 : i32
    return %c0_i32, %c0_i32_0 : i32, i32
  }
  func.func @transform_4(%arg0: i32, %arg1: i32) -> (i32, i32) {
    %c0_i32 = arith.constant 0 : i32
    %c0_i32_0 = arith.constant 0 : i32
    %c0_i32_1 = arith.constant 0 : i32
    return %c0_i32, %c0_i32_0 : i32, i32
  }
  func.func @transform_5(%arg0: i32, %arg1: i32) -> (i32, i32, i32, i32) {
    %c0_i32 = arith.constant 0 : i32
    %c0_i32_0 = arith.constant 0 : i32
    %c0_i32_1 = arith.constant 0 : i32
    %c0_i32_2 = arith.constant 0 : i32
    return %arg1, %c0_i32, %c0_i32_0, %c0_i32_1 : i32, i32, i32, i32
  }
  func.func @transform_6(%arg0: i32, %arg1: i32) -> (i32, i32, i32, i32) {
    %c0_i32 = arith.constant 0 : i32
    %c0_i32_0 = arith.constant 0 : i32
    %c0_i32_1 = arith.constant 0 : i32
    return %arg0, %arg1, %c0_i32, %c0_i32_0 : i32, i32, i32, i32
  }
}

module attributes {stable_mosaic.version = 11 : i64} {
  func.func @_matmul_scale_res_kernel(%arg0: i32, %arg1: memref<64x64xbf16, #tpu.memory_space<vmem>>, %arg2: memref<64x16xbf16, #tpu.memory_space<vmem>>, %arg3: memref<1x16xf32, #tpu.memory_space<vmem>>, %arg4: memref<1x16xf32, #tpu.memory_space<vmem>>, %arg5: memref<64x16xf32, #tpu.memory_space<vmem>>, %arg6: memref<64x16xf32, #tpu.memory_space<vmem>>) attributes {dimension_semantics = [#tpu.dimension_semantics<parallel>], iteration_bounds = array<i64: 2>, scalar_prefetch = 0 : i64, scratch_operands = 0 : i64, tpu.core_type = #tpu.core_type<tc>, window_params = [{transform_indices = @transform_0, window_bounds = array<i64: 64, 64>}, {pipeline_mode = #tpu.pipeline_mode<synchronous>, transform_indices = @transform_1, window_bounds = array<i64: 64, 16>}, {pipeline_mode = #tpu.pipeline_mode<synchronous>, transform_indices = @transform_2, window_bounds = array<i64: 1, 16>}, {pipeline_mode = #tpu.pipeline_mode<synchronous>, transform_indices = @transform_3, window_bounds = array<i64: 1, 16>}, {transform_indices = @transform_4, window_bounds = array<i64: 64, 16>}, {transform_indices = @transform_5, window_bounds = array<i64: 64, 16>}]} {
    %c0 = arith.constant 0 : index
    %c0_0 = arith.constant 0 : index
    %0 = vector.load %arg1[%c0, %c0_0] : memref<64x64xbf16, #tpu.memory_space<vmem>>, vector<64x64xbf16>
    %c0_1 = arith.constant 0 : index
    %c0_2 = arith.constant 0 : index
    %1 = vector.load %arg2[%c0_1, %c0_2] : memref<64x16xbf16, #tpu.memory_space<vmem>>, vector<64x16xbf16>
    %cst = arith.constant dense<0.000000e+00> : vector<64x16xf32>
    %2 = tpu.matmul %0, %1, %cst {dimension_numbers = #tpu.dot_dimension_numbers<[1], [0], [0], [1], [0, 0, 1, 1], [], []>} : vector<64x64xbf16>, vector<64x16xbf16>, vector<64x16xf32> -> vector<64x16xf32>
    %c0_3 = arith.constant 0 : index
    %c0_4 = arith.constant 0 : index
    %3 = vector.load %arg3[%c0_3, %c0_4] : memref<1x16xf32, #tpu.memory_space<vmem>>, vector<1x16xf32>
    %4 = vector.broadcast %3 : vector<1x16xf32> to vector<64x16xf32>
    %5 = arith.addf %2, %4 : vector<64x16xf32>
    %c0_5 = arith.constant 0 : index
    %c0_6 = arith.constant 0 : index
    %6 = vector.load %arg5[%c0_5, %c0_6] : memref<64x16xf32, #tpu.memory_space<vmem>>, vector<64x16xf32>
    %c0_7 = arith.constant 0 : index
    %c0_8 = arith.constant 0 : index
    %7 = vector.load %arg4[%c0_7, %c0_8] : memref<1x16xf32, #tpu.memory_space<vmem>>, vector<1x16xf32>
    %8 = vector.broadcast %7 : vector<1x16xf32> to vector<64x16xf32>
    %9 = arith.mulf %8, %5 : vector<64x16xf32>
    %10 = arith.addf %6, %9 : vector<64x16xf32>
    %c0_9 = arith.constant 0 : index
    %c0_10 = arith.constant 0 : index
    %11 = vector.load %arg6[%c0_9, %c0_10] : memref<64x16xf32, #tpu.memory_space<vmem>>, vector<64x16xf32>
    tpu.vector_store %arg6[%c0_9, %c0_10], %10 {strides = array<i32>} : memref<64x16xf32, #tpu.memory_space<vmem>>, vector<64x16xf32>,
    return
  }
  func.func @transform_0(%arg0: i32) -> (i32, i32) {
    %c0_i32 = arith.constant 0 : i32
    %c0_i32_0 = arith.constant 0 : i32
    return %arg0, %c0_i32 : i32, i32
  }
  func.func @transform_1(%arg0: i32) -> (i32, i32) {
    %c0_i32 = arith.constant 0 : i32
    %c0_i32_0 = arith.constant 0 : i32
    %c0_i32_1 = arith.constant 0 : i32
    return %c0_i32, %c0_i32_0 : i32, i32
  }
  func.func @transform_2(%arg0: i32) -> (i32, i32) {
    %c0_i32 = arith.constant 0 : i32
    %c0_i32_0 = arith.constant 0 : i32
    %c0_i32_1 = arith.constant 0 : i32
    return %c0_i32, %c0_i32_0 : i32, i32
  }
  func.func @transform_3(%arg0: i32) -> (i32, i32) {
    %c0_i32 = arith.constant 0 : i32
    %c0_i32_0 = arith.constant 0 : i32
    %c0_i32_1 = arith.constant 0 : i32
    return %c0_i32, %c0_i32_0 : i32, i32
  }
  func.func @transform_4(%arg0: i32) -> (i32, i32) {
    %c0_i32 = arith.constant 0 : i32
    %c0_i32_0 = arith.constant 0 : i32
    return %arg0, %c0_i32 : i32, i32
  }
  func.func @transform_5(%arg0: i32) -> (i32, i32) {
    %c0_i32 = arith.constant 0 : i32
    %c0_i32_0 = arith.constant 0 : i32
    return %arg0, %c0_i32 : i32, i32
  }
}

</mosaic_0001>

<llo_original>
// kernel: _lambda_.5
$region0: #{_lambda_.5}
  #allocation0 [shape = 'u32[]', space=smem, size = 0x4, offset = 0x4, fixed_abs, tag = 'smem constant byte address 0x4 - core index']
  #allocation1 [shape = 'u32[144,128]{1,0:T(1,128)}', space=vmem, size = 0x12000, scoped, tag = 'internal scratch']
  %s0 = inlined_call_operand.hbm [shape: f32[128,16], index: 0, kind: input, shape index: {}]
  %s1 = inlined_call_operand.vmem [shape: f32[1,16], index: 1, kind: input, shape index: {}]
  %s2 = inlined_call_operand.vmem [shape: f32[1,16], index: 2, kind: input, shape index: {}]
  %s3 = inlined_call_operand.vmem [shape: bf16[16,16], index: 3, kind: input, shape index: {}]
  %s4 = inlined_call_operand.vmem [shape: bf16[16,32], index: 4, kind: input, shape index: {}]
  %s5 = inlined_call_operand.vmem [shape: bf16[128,16], index: 5, kind: output, shape index: {0}]
  %s6 = inlined_call_operand.vmem [shape: bf16[128,32], index: 6, kind: output, shape index: {1}]
  %7 = xla_tuple %s5, %s6
  %s8 = sld [smem:[#allocation0]]
  $region65: #{_lambda_.5} parent=0
    _
  %s10 = ssub.s32 1, %s8
  %s11 = scalar_select 0, %s10, %s8
  $region1: #{_lambda_.5} parent=0
    #allocation2 [shape = 'u8[65536]{0}', space=vmem, size = 0x10000, scoped, tag = 'input window, operand 0']
    #allocation3 [shape = 's32[2]{0}', space=sflag, size = 0x8, scoped, tag = 'scoped memory for _lambda_.5']
    %12 = vsyncpa [#allocation3], 0
    %s13 = scalar_lea.sflag [#allocation3], 1
    %14 = vsyncpa %s13, 0
    loop: start=0, step=1, limit=4
    $region2: #{_lambda_.5} parent=1 // loop_pre_header
      _
    $region3: #{_lambda_.5} parent=1 // loop_header
      %s16 = sphi 0, %s20
      %p17 = scmp.ge.s32.totalorder %s16, 4
      %s26 = sphi 0, %s28
      %s29 = sphi 0, %s26
      %s30 = sphi 0, %s29
      %s46 = sphi 0, %s30
      %s50 = sphi 0, %s50
      %s52 = sphi 0, %s50
      %s53 = sphi 0, %s52
      %s67 = sphi 0, %s53
      %s71 = sphi 0, %s71
      %s73 = sphi 0, %s71
      %s74 = sphi 0, %s73
      %s88 = sphi 0, %s74
      %s92 = sphi 0, %s92
      %s94 = sphi 0, %s92
      %s95 = sphi 0, %s94
      %s109 = sphi 0, %s95
      %s113 = sphi 0, %s113
      %s115 = sphi 0, %s113
      %s116 = sphi 0, %s115
      %s130 = sphi 0, %s116
      %s136 = sphi 0, %s138
      %s139 = sphi 0, %s136
      %s140 = sphi 0, %s139
      %s156 = sphi 0, %s140
      %s162 = sphi 0, %s164
      %s165 = sphi 0, %s162
      %s166 = sphi 0, %s165
      %s182 = sphi 0, %s166
    $region4: #{_lambda_.5} parent=1 // loop_header_branch
      %19 = sbr.rel (%p17) target = $region8
    $region5: #{_lambda_.5} parent=1 // loop_body
      %s21 = ssub.s32 %s16, 1
      %s22 = ssub.s32 %s16, 2
      %s23 = sadd.s32 %s16, 1
      %s24 = ssub.s32 %s16, %s23
      %p25 = scmp.eq.s32.totalorder %s24, 0
      %s27 = sadd.s32 %s26, 1
      %s28 = scalar_select %p25, %s26, %s27
      %p31 = pneg %p25
      %p32 = scmp.eq.s32.totalorder %s16, 1
      %p33 = por %p31, %p32
      %p34 = scmp.ne.s32.totalorder %s26, %s29
      %p35 = scmp.eq.s32.totalorder %s16, 0
      %p36 = por %p34, %p35
      %p37 = scmp.ne.s32.totalorder %s26, %s29
      %p38 = scmp.eq.s32.totalorder %s21, 1
      %p39 = por %p37, %p38
      %p40 = scmp.ne.s32.totalorder %s29, %s30
      %p41 = scmp.eq.s32.totalorder %s21, 0
      %p42 = por %p40, %p41
      %p43 = scmp.ne.s32.totalorder %s29, %s30
      %p44 = scmp.eq.s32.totalorder %s22, 1
      %p45 = por %p43, %p44
      %p47 = scmp.ne.s32.totalorder %s30, %s46
      %p48 = scmp.eq.s32.totalorder %s22, 0
      %p49 = por %p47, %p48
      %s51 = sadd.s32 %s50, 1
      %p54 = scmp.eq.s32.totalorder %s16, 1
      %p55 = scmp.ne.s32.totalorder %s50, %s52
      %p56 = scmp.eq.s32.totalorder %s16, 0
      %p57 = por %p55, %p56
      %p58 = scmp.ne.s32.totalorder %s50, %s52
      %p59 = scmp.eq.s32.totalorder %s21, 1
      %p60 = por %p58, %p59
      %p61 = scmp.ne.s32.totalorder %s52, %s53
      %p62 = scmp.eq.s32.totalorder %s21, 0
      %p63 = por %p61, %p62
      %p64 = scmp.ne.s32.totalorder %s52, %s53
      %p65 = scmp.eq.s32.totalorder %s22, 1
      %p66 = por %p64, %p65
      %p68 = scmp.ne.s32.totalorder %s53, %s67
      %p69 = scmp.eq.s32.totalorder %s22, 0
      %p70 = por %p68, %p69
      %s72 = sadd.s32 %s71, 1
      %p75 = scmp.eq.s32.totalorder %s16, 1
      %p76 = scmp.ne.s32.totalorder %s71, %s73
      %p77 = scmp.eq.s32.totalorder %s16, 0
      %p78 = por %p76, %p77
      %p79 = scmp.ne.s32.totalorder %s71, %s73
      %p80 = scmp.eq.s32.totalorder %s21, 1
      %p81 = por %p79, %p80
      %p82 = scmp.ne.s32.totalorder %s73, %s74
      %p83 = scmp.eq.s32.totalorder %s21, 0
      %p84 = por %p82, %p83
      %p85 = scmp.ne.s32.totalorder %s73, %s74
      %p86 = scmp.eq.s32.totalorder %s22, 1
      %p87 = por %p85, %p86
      %p89 = scmp.ne.s32.totalorder %s74, %s88
      %p90 = scmp.eq.s32.totalorder %s22, 0
      %p91 = por %p89, %p90
      %s93 = sadd.s32 %s92, 1
      %p96 = scmp.eq.s32.totalorder %s16, 1
      %p97 = scmp.ne.s32.totalorder %s92, %s94
      %p98 = scmp.eq.s32.totalorder %s16, 0
      %p99 = por %p97, %p98
      %p100 = scmp.ne.s32.totalorder %s92, %s94
      %p101 = scmp.eq.s32.totalorder %s21, 1
      %p102 = por %p100, %p101
      %p103 = scmp.ne.s32.totalorder %s94, %s95
      %p104 = scmp.eq.s32.totalorder %s21, 0
      %p105 = por %p103, %p104
      %p106 = scmp.ne.s32.totalorder %s94, %s95
      %p107 = scmp.eq.s32.totalorder %s22, 1
      %p108 = por %p106, %p107
      %p110 = scmp.ne.s32.totalorder %s95, %s109
      %p111 = scmp.eq.s32.totalorder %s22, 0
      %p112 = por %p110, %p111
      %s114 = sadd.s32 %s113, 1
      %p117 = scmp.eq.s32.totalorder %s16, 1
      %p118 = scmp.ne.s32.totalorder %s113, %s115
      %p119 = scmp.eq.s32.totalorder %s16, 0
      %p120 = por %p118, %p119
      %p121 = scmp.ne.s32.totalorder %s113, %s115
      %p122 = scmp.eq.s32.totalorder %s21, 1
      %p123 = por %p121, %p122
      %p124 = scmp.ne.s32.totalorder %s115, %s116
      %p125 = scmp.eq.s32.totalorder %s21, 0
      %p126 = por %p124, %p125
      %p127 = scmp.ne.s32.totalorder %s115, %s116
      %p128 = scmp.eq.s32.totalorder %s22, 1
      %p129 = por %p127, %p128
      %p131 = scmp.ne.s32.totalorder %s116, %s130
      %p132 = scmp.eq.s32.totalorder %s22, 0
      %p133 = por %p131, %p132
      %s134 = ssub.s32 %s16, %s23
      %p135 = scmp.eq.s32.totalorder %s134, 0
      %s137 = sadd.s32 %s136, 1
      %s138 = scalar_select %p135, %s136, %s137
      %p141 = pneg %p135
      %p142 = scmp.eq.s32.totalorder %s16, 1
      %p143 = por %p141, %p142
      %p144 = scmp.ne.s32.totalorder %s136, %s139
      %p145 = scmp.eq.s32.totalorder %s16, 0
      %p146 = por %p144, %p145
      %p147 = scmp.ne.s32.totalorder %s136, %s139
      %p148 = scmp.eq.s32.totalorder %s21, 1
      %p149 = por %p147, %p148
      %p150 = scmp.ne.s32.totalorder %s139, %s140
      %p151 = scmp.eq.s32.totalorder %s21, 0
      %p152 = por %p150, %p151
      %p153 = scmp.ne.s32.totalorder %s139, %s140
      %p154 = scmp.eq.s32.totalorder %s22, 1
      %p155 = por %p153, %p154
      %p157 = scmp.ne.s32.totalorder %s140, %s156
      %p158 = scmp.eq.s32.totalorder %s22, 0
      %p159 = por %p157, %p158
      %s160 = ssub.s32 %s16, %s23
      %p161 = scmp.eq.s32.totalorder %s160, 0
      %s163 = sadd.s32 %s162, 1
      %s164 = scalar_select %p161, %s162, %s163
      %p167 = pneg %p161
      %p168 = scmp.eq.s32.totalorder %s16, 1
      %p169 = por %p167, %p168
      %p170 = scmp.ne.s32.totalorder %s162, %s165
      %p171 = scmp.eq.s32.totalorder %s16, 0
      %p172 = por %p170, %p171
      %p173 = scmp.ne.s32.totalorder %s162, %s165
      %p174 = scmp.eq.s32.totalorder %s21, 1
      %p175 = por %p173, %p174
      %p176 = scmp.ne.s32.totalorder %s165, %s166
      %p177 = scmp.eq.s32.totalorder %s21, 0
      %p178 = por %p176, %p177
      %p179 = scmp.ne.s32.totalorder %s165, %s166
      %p180 = scmp.eq.s32.totalorder %s22, 1
      %p181 = por %p179, %p180
      %p183 = scmp.ne.s32.totalorder %s166, %s182
      %p184 = scmp.eq.s32.totalorder %s22, 0
      %p185 = por %p183, %p184
      %p186 = scmp.le.s32.totalorder 1, %s16
      %p187 = scmp.lt.s32.totalorder %s16, 3
      %p188 = pnand %p186, %p187
      %p189 = pneg %p188
      // Predicated region
      $region9: #{_lambda_.5} parent=5 // pred_check
        _
      $region10: #{_lambda_.5} parent=5 // pred_check_branch
        %191 = sbr.rel (%p188) target = $region12
      $region11: #{_lambda_.5} parent=5 // pred_region
        %s192 = ssub.s32 %s16, 1
        // Predicated region
        $region13: #{_lambda_.5} parent=11 // pred_check
          %p193 = pneg %p63
        $region14: #{_lambda_.5} parent=11 // pred_check_branch
          %195 = sbr.rel (%p193) target = $region16
        $region15: #{_lambda_.5} parent=11 // pred_region
          _
        $region16: #{_lambda_.5} parent=11 // pred_fallthru
          _
        // Predicated region
        $region17: #{_lambda_.5} parent=11 // pred_check
          %p196 = pneg %p84
        $region18: #{_lambda_.5} parent=11 // pred_check_branch
          %198 = sbr.rel (%p196) target = $region20
        $region19: #{_lambda_.5} parent=11 // pred_region
          _
        $region20: #{_lambda_.5} parent=11 // pred_fallthru
          _
        // Predicated region
        $region21: #{_lambda_.5} parent=11 // pred_check
          %p199 = pneg %p105
        $region22: #{_lambda_.5} parent=11 // pred_check_branch
          %201 = sbr.rel (%p199) target = $region24
        $region23: #{_lambda_.5} parent=11 // pred_region
          _
        $region24: #{_lambda_.5} parent=11 // pred_fallthru
          _
        // Predicated region
        $region25: #{_lambda_.5} parent=11 // pred_check
          %p202 = pneg %p126
        $region26: #{_lambda_.5} parent=11 // pred_check_branch
          %204 = sbr.rel (%p202) target = $region28
        $region27: #{_lambda_.5} parent=11 // pred_region
          _
        $region28: #{_lambda_.5} parent=11 // pred_fallthru
          _
      $region12: #{_lambda_.5} parent=5 // pred_fallthru
        _
      %p205 = scmp.lt.s32.totalorder %s16, 2
      // Predicated region
      $region29: #{_lambda_.5} parent=5 // pred_check
        %p206 = pneg %p205
      $region30: #{_lambda_.5} parent=5 // pred_check_branch
        %208 = sbr.rel (%p206) target = $region32
      $region31: #{_lambda_.5} parent=5 // pred_region
        // Predicated region
        $region33: #{_lambda_.5} parent=31 // pred_check
          %p209 = pneg %p36
        $region34: #{_lambda_.5} parent=31 // pred_check_branch
          %211 = sbr.rel (%p209) target = $region36
        $region35: #{_lambda_.5} parent=31 // pred_region
          %s212 = sand.u32 %s26, 1
          %s213 = scalar_lea.sflag [#allocation3], %s212
          %s214 = sand.u32 %s26, 1
          %s215 = smul.addr %s214, 64
          %s216 = scalar_lea.vmem [#allocation2], %s215
          %s217 = smul.u32 8, %s16
          %s219 = ssub.s32 1024, 1024
          %220 = vsyncadd %s213, %s219
          %s221 = smul.addr %s217, 128
          %s222 = scalar_lea.hbm %s0, %s221
          %s223 = sshll.u32 %s216, 4
          %s224 = int_to_ptr.vmem [resolvable:$true] %s223
          %229 = dma.hbm_to_vmem [thread:$0]  %s222, 1024, %s224, %s213, 128, 128, 8
        $region36: #{_lambda_.5} parent=31 // pred_fallthru
          _
      $region32: #{_lambda_.5} parent=5 // pred_fallthru
        _
      %p230 = scmp.le.s32.totalorder 1, %s16
      %p231 = scmp.lt.s32.totalorder %s16, 3
      %p232 = pnand %p230, %p231
      %p233 = pneg %p232
      // Predicated region
      $region37: #{_lambda_.5} parent=5 // pred_check
        _
      $region38: #{_lambda_.5} parent=5 // pred_check_branch
        %235 = sbr.rel (%p232) target = $region40
      $region39: #{_lambda_.5} parent=5 // pred_region
        %s236 = ssub.s32 %s16, 1
        %s237 = sand.u32 %s29, 1
        %s238 = scalar_lea.sflag [#allocation3], %s237
        %s239 = sand.u32 %s29, 1
        %s240 = smul.addr %s239, 64
        %s241 = scalar_lea.vmem [#allocation2], %s240
        // Predicated region
        $region41: #{_lambda_.5} parent=39 // pred_check
          %p242 = pneg %p42
        $region42: #{_lambda_.5} parent=39 // pred_check_branch
          %244 = sbr.rel (%p242) target = $region44
        $region43: #{_lambda_.5} parent=39 // pred_region
          %245 = dma.done %s238, 1024
        $region44: #{_lambda_.5} parent=39 // pred_fallthru
          _
        %s246 = sand.u32 %s29, 1
        %s247 = scalar_lea.sflag [#allocation3], %s246
        %s248 = sand.u32 %s29, 1
        %s249 = smul.addr %s248, 64
        %s250 = scalar_lea.vmem [#allocation2], %s249
        %p251 = pneg %p42
        %p252 = pneg %p39
        %p253 = pneg %p63
        %p254 = pneg %p60
        %p255 = pneg %p84
        %p256 = pneg %p81
        %p257 = pneg %p105
        %p258 = pneg %p102
        %p259 = pneg %p126
        %p260 = pneg %p123
        %p261 = pneg %p152
        %p262 = pneg %p149
        %s263 = smul.u32 8, %s21
        %p264 = scmp.lt.s32.totalorder %s263, 15
        %s265 = scalar_select %p264, %s263, 15
        %s266 = smul.addr %s265, 4
        %s267 = scalar_lea.vmem %s5, %s266
        %p268 = pneg %p178
        %p269 = pneg %p175
        %s270 = smul.u32 8, %s21
        %p271 = scmp.lt.s32.totalorder %s270, 15
        %s272 = scalar_select %p271, %s270, 15
        %s273 = smul.addr %s272, 4
        %s274 = scalar_lea.vmem %s6, %s273
        %s275 = smul.u32 8, %s21
        %s276 = smul.u32 8, %s21
        %p277 = scmp.lt.s32.totalorder %s276, 15
        %s278 = scalar_select %p277, %s276, 15
        %s279 = smul.addr %s278, 4
        %s280 = scalar_lea.vmem %s5, %s279
        %s281 = smul.u32 8, %s21
        %s282 = smul.u32 8, %s21
        %p283 = scmp.lt.s32.totalorder %s282, 15
        %s284 = scalar_select %p283, %s282, 15
        %s285 = smul.addr %s284, 4
        %s286 = scalar_lea.vmem %s6, %s285
        %s287 = smul.u32 8, %s21
        %v289 = vld [vmem:[%s241] sm:$0xff]
        %v290 = vld [vmem:[%s241 + $0x8] sm:$0xff]
        %v291 = vld [vmem:[%s241 + $0x10] sm:$0xff]
        %v292 = vld [vmem:[%s241 + $0x18] sm:$0xff]
        %v293 = vld [vmem:[%s241 + $0x20] sm:$0xff]
        %v294 = vld [vmem:[%s241 + $0x28] sm:$0xff]
        %v295 = vld [vmem:[%s241 + $0x30] sm:$0xff]
        %v296 = vld [vmem:[%s241 + $0x38] sm:$0xff]
        %v297 = vld [vmem:[%s1] sm:$0x1]
        %v298 = vld [vmem:[%s2] sm:$0x1]
        %vm299 = vcmask 130048
        %v300 = vsel %vm299, %v289, 0.0
        %301 = vadd.xlane.f32.xlu0 %v300
        %v302 = vpop.xlane.xlu0 %301
        %v303 = vsel %vm299, %v290, 0.0
        %304 = vadd.xlane.f32.xlu0 %v303
        %v305 = vpop.xlane.xlu0 %304
        %v306 = vsel %vm299, %v291, 0.0
        %307 = vadd.xlane.f32.xlu0 %v306
        %v308 = vpop.xlane.xlu0 %307
        %v309 = vsel %vm299, %v292, 0.0
        %310 = vadd.xlane.f32.xlu0 %v309
        %v311 = vpop.xlane.xlu0 %310
        %v312 = vsel %vm299, %v293, 0.0
        %313 = vadd.xlane.f32.xlu0 %v312
        %v314 = vpop.xlane.xlu0 %313
        %v315 = vsel %vm299, %v294, 0.0
        %316 = vadd.xlane.f32.xlu0 %v315
        %v317 = vpop.xlane.xlu0 %316
        %v318 = vsel %vm299, %v295, 0.0
        %319 = vadd.xlane.f32.xlu0 %v318
        %v320 = vpop.xlane.xlu0 %319
        %v321 = vsel %vm299, %v296, 0.0
        %322 = vadd.xlane.f32.xlu0 %v321
        %v323 = vpop.xlane.xlu0 %322
        %v324 = vrcp.pop 16.0
        %v325 = vmul.f32 %v302, %v324
        %v326 = vmul.f32 %v305, %v324
        %v327 = vmul.f32 %v308, %v324
        %v328 = vmul.f32 %v311, %v324
        %v329 = vmul.f32 %v314, %v324
        %v330 = vmul.f32 %v317, %v324
        %v331 = vmul.f32 %v320, %v324
        %v332 = vmul.f32 %v323, %v324
        %v333 = vsub.f32 %v289, %v325
        %v334 = vsub.f32 %v290, %v326
        %v335 = vsub.f32 %v291, %v327
        %v336 = vsub.f32 %v292, %v328
        %v337 = vsub.f32 %v293, %v329
        %v338 = vsub.f32 %v294, %v330
        %v339 = vsub.f32 %v295, %v331
        %v340 = vsub.f32 %v296, %v332
        %v341 = vmul.f32 %v333, %v333
        %v342 = vmul.f32 %v334, %v334
        %v343 = vmul.f32 %v335, %v335
        %v344 = vmul.f32 %v336, %v336
        %v345 = vmul.f32 %v337, %v337
        %v346 = vmul.f32 %v338, %v338
        %v347 = vmul.f32 %v339, %v339
        %v348 = vmul.f32 %v340, %v340
        %v349 = vsel %vm299, %v341, 0.0
        %350 = vadd.xlane.f32.xlu0 %v349
        %v351 = vpop.xlane.xlu0 %350
        %v352 = vsel %vm299, %v342, 0.0
        %353 = vadd.xlane.f32.xlu0 %v352
        %v354 = vpop.xlane.xlu0 %353
        %v355 = vsel %vm299, %v343, 0.0
        %356 = vadd.xlane.f32.xlu0 %v355
        %v357 = vpop.xlane.xlu0 %356
        %v358 = vsel %vm299, %v344, 0.0
        %359 = vadd.xlane.f32.xlu0 %v358
        %v360 = vpop.xlane.xlu0 %359
        %v361 = vsel %vm299, %v345, 0.0
        %362 = vadd.xlane.f32.xlu0 %v361
        %v363 = vpop.xlane.xlu0 %362
        %v364 = vsel %vm299, %v346, 0.0
        %365 = vadd.xlane.f32.xlu0 %v364
        %v366 = vpop.xlane.xlu0 %365
        %v367 = vsel %vm299, %v347, 0.0
        %368 = vadd.xlane.f32.xlu0 %v367
        %v369 = vpop.xlane.xlu0 %368
        %v370 = vsel %vm299, %v348, 0.0
        %371 = vadd.xlane.f32.xlu0 %v370
        %v372 = vpop.xlane.xlu0 %371
        %v373 = vmul.f32 %v351, %v324
        %v374 = vmul.f32 %v354, %v324
        %v375 = vmul.f32 %v357, %v324
        %v376 = vmul.f32 %v360, %v324
        %v377 = vmul.f32 %v363, %v324
        %v378 = vmul.f32 %v366, %v324
        %v379 = vmul.f32 %v369, %v324
        %v380 = vmul.f32 %v372, %v324
        %v381 = vadd.f32 %v373, 1e-05
        %v382 = vadd.f32 %v374, 1e-05
        %v383 = vadd.f32 %v375, 1e-05
        %v384 = vadd.f32 %v376, 1e-05
        %v385 = vadd.f32 %v377, 1e-05
        %v386 = vadd.f32 %v378, 1e-05
        %v387 = vadd.f32 %v379, 1e-05
        %v388 = vadd.f32 %v380, 1e-05
        %v389 = vrsqrt.pop %v381
        %v390 = vrsqrt.pop %v382
        %v391 = vrsqrt.pop %v383
        %v392 = vrsqrt.pop %v384
        %v393 = vrsqrt.pop %v385
        %v394 = vrsqrt.pop %v386
        %v395 = vrsqrt.pop %v387
        %v396 = vrsqrt.pop %v388
        %v397 = vmul.f32 %v333, %v389
        %v398 = vmul.f32 %v334, %v390
        %v399 = vmul.f32 %v335, %v391
        %v400 = vmul.f32 %v336, %v392
        %v401 = vmul.f32 %v337, %v393
        %v402 = vmul.f32 %v338, %v394
        %v403 = vmul.f32 %v339, %v395
        %v404 = vmul.f32 %v340, %v396
        %v406 = vlaneseq
        %v407 = vshrl.u32 %v406, 7
        %v408 = vsub.s32 0, %v407
        %v409 = vrot.slane %v297, %v408
        %v411 = vmul.f32 %v397, %v409
        %v412 = vmul.f32 %v398, %v409
        %v413 = vmul.f32 %v399, %v409
        %v414 = vmul.f32 %v400, %v409
        %v415 = vmul.f32 %v401, %v409
        %v416 = vmul.f32 %v402, %v409
        %v417 = vmul.f32 %v403, %v409
        %v418 = vmul.f32 %v404, %v409
        %v420 = vlaneseq
        %v421 = vshrl.u32 %v420, 7
        %v422 = vsub.s32 0, %v421
        %v423 = vrot.slane %v298, %v422
        %v425 = vadd.f32 %v411, %v423
        %v426 = vadd.f32 %v412, %v423
        %v427 = vadd.f32 %v413, %v423
        %v428 = vadd.f32 %v414, %v423
        %v429 = vadd.f32 %v415, %v423
        %v430 = vadd.f32 %v416, %v423
        %v431 = vadd.f32 %v417, %v423
        %v432 = vadd.f32 %v418, %v423
        %v433 = vpack.c.bf16 %v426, %v425
        %v434 = vpack.c.bf16 %v428, %v427
        %v435 = vpack.c.bf16 %v430, %v429
        %v436 = vpack.c.bf16 %v432, %v431
        %v437 = vld [vmem:[%s3] sm:$0xf]
        %v438 = vld [vmem:[%s3 + $0x4] sm:$0xf]
        %v441 = vunpack.c.l.b16 %v437
        %v442 = vunpack.c.l.b16 %v438
        %v443 = vpack.c.b16 %v442, %v441
        %v446 = vsel %vm299, %v433, 0
        %v449 = vsel %vm299, %v434, 0
        %v452 = vsel %vm299, %v435, 0
        %v455 = vsel %vm299, %v436, 0
        %457 = vmatprep.subr.bf16.mxu0 0
        %458 = vmatpush1.bf16.msra.mxu0 %v443
        %459 = vmatprep.subr.bf16.mxu0 0
        %460 = vmatpush1.bf16.msra.mxu0 0
        %461 = vmatprep.subr.bf16.mxu0 0
        %462 = vmatpush1.bf16.msra.mxu0 0
        %463 = vmatprep.subr.bf16.mxu0 0
        %464 = vmatpush1.bf16.msra.mxu0 0
        %465 = vmatprep.subr.bf16.mxu0 0
        %466 = vmatpush1.bf16.msra.mxu0 0
        %467 = vmatprep.subr.bf16.mxu0 0
        %468 = vmatpush1.bf16.msra.mxu0 0
        %469 = vmatprep.subr.bf16.mxu0 0
        %470 = vmatpush1.bf16.msra.mxu0 0
        %471 = vmatprep.subr.bf16.mxu0 0
        %472 = vmatpush1.bf16.msra.mxu0 0
        %473 = vmatprep.subr.bf16.mxu0 0
        %474 = vmatpush1.bf16.msra.mxu0 0
        %475 = vmatprep.subr.bf16.mxu0 0
        %476 = vmatpush1.bf16.msra.mxu0 0
        %477 = vmatprep.subr.bf16.mxu0 0
        %478 = vmatpush1.bf16.msra.mxu0 0
        %479 = vmatprep.subr.bf16.mxu0 0
        %480 = vmatpush1.bf16.msra.mxu0 0
        %481 = vmatprep.subr.bf16.mxu0 0
        %482 = vmatpush1.bf16.msra.mxu0 0
        %483 = vmatprep.subr.bf16.mxu0 0
        %484 = vmatpush1.bf16.msra.mxu0 0
        %485 = vmatprep.subr.bf16.mxu0 0
        %486 = vmatpush1.bf16.msra.mxu0 0
        %487 = vmatprep.subr.bf16.mxu0 0
        %488 = vmatpush1.bf16.msra.mxu0 0
        %489 = vmatprep.mubr.bf16.mxu0 0
        %490 = vmatmul.mubr.bf16.gmra.mrb[0].mxu0 %v446
        %v491 = vpop.f32.mrb[0].mxu0
        %v492 = vadd.f32 0.0, %v491
        %v493 = vpop.f32.mrb[0].mxu0
        %v494 = vpop.f32.mrb[0].mxu0
        %v495 = vadd.f32 0.0, %v494
        %v496 = vpop.f32.mrb[0].mxu0
        %497 = vmatprep.mubr.bf16.mxu0 0
        %498 = vmatmul.mubr.bf16.gmra.mrb[0].mxu0 %v449
        %v499 = vpop.f32.mrb[0].mxu0
        %v500 = vadd.f32 0.0, %v499
        %v501 = vpop.f32.mrb[0].mxu0
        %v502 = vpop.f32.mrb[0].mxu0
        %v503 = vadd.f32 0.0, %v502
        %v504 = vpop.f32.mrb[0].mxu0
        %505 = vmatprep.mubr.bf16.mxu0 0
        %506 = vmatmul.mubr.bf16.gmra.mrb[0].mxu0 %v452
        %v507 = vpop.f32.mrb[0].mxu0
        %v508 = vadd.f32 0.0, %v507
        %v509 = vpop.f32.mrb[0].mxu0
        %v510 = vpop.f32.mrb[0].mxu0
        %v511 = vadd.f32 0.0, %v510
        %v512 = vpop.f32.mrb[0].mxu0
        %513 = vmatprep.mubr.bf16.mxu0 0
        %514 = vmatmul.mubr.bf16.gmra.mrb[0].mxu0 %v455
        %v515 = vpop.f32.mrb[0].mxu0
        %v516 = vadd.f32 0.0, %v515
        %v517 = vpop.f32.mrb[0].mxu0
        %v518 = vpop.f32.mrb[0].mxu0
        %v519 = vadd.f32 0.0, %v518
        %v520 = vpop.f32.mrb[0].mxu0
        %521 = vdwg.mxu0
        %v522 = vpack.c.bf16 %v495, %v492
        %v523 = vpack.c.bf16 %v503, %v500
        %v524 = vpack.c.bf16 %v511, %v508
        %v525 = vpack.c.bf16 %v519, %v516
        %v530 = vunpack.c.l.b16 %v522
        %v531 = vunpack.c.h.b16 %v522
        %v532 = vunpack.c.l.b16 %v523
        %v533 = vunpack.c.h.b16 %v523
        %v534 = vunpack.c.l.b16 %v524
        %v535 = vunpack.c.h.b16 %v524
        %v536 = vunpack.c.l.b16 %v525
        %v537 = vunpack.c.h.b16 %v525
        %v538 = vpack.c.b16 %v530, %v530
        %v539 = vpack.c.b16 %v531, %v531
        %v540 = vpack.c.b16 %v532, %v532
        %v541 = vpack.c.b16 %v533, %v533
        %v542 = vpack.c.b16 %v534, %v534
        %v543 = vpack.c.b16 %v535, %v535
        %v544 = vpack.c.b16 %v536, %v536
        %v545 = vpack.c.b16 %v537, %v537
        %vm554 = vcmask 125952
        %555 = vst.msk [vmem:[%s280] sm:$0xf] %vm554, %v538
        %556 = vst.msk [vmem:[%s280 + $0x4] sm:$0xf] %vm554, %v539
        %557 = vst.msk [vmem:[%s280 + $0x8] sm:$0xf] %vm554, %v540
        %558 = vst.msk [vmem:[%s280 + $0xc] sm:$0xf] %vm554, %v541
        %559 = vst.msk [vmem:[%s280 + $0x10] sm:$0xf] %vm554, %v542
        %560 = vst.msk [vmem:[%s280 + $0x14] sm:$0xf] %vm554, %v543
        %561 = vst.msk [vmem:[%s280 + $0x18] sm:$0xf] %vm554, %v544
        %562 = vst.msk [vmem:[%s280 + $0x1c] sm:$0xf] %vm554, %v545
        %v563 = vld [vmem:[%s4] sm:$0xf]
        %v564 = vld [vmem:[%s4 + $0x4] sm:$0xf]
        %v567 = vunpack.c.l.b16 %v563
        %v568 = vunpack.c.l.b16 %v564
        %v569 = vpack.c.b16 %v568, %v567
        %571 = vmatprep.subr.bf16.mxu0 0
        %572 = vmatpush1.bf16.msra.mxu0 %v569
        %573 = vmatprep.subr.bf16.mxu0 0
        %574 = vmatpush1.bf16.msra.mxu0 0
        %575 = vmatprep.subr.bf16.mxu0 0
        %576 = vmatpush1.bf16.msra.mxu0 0
        %577 = vmatprep.subr.bf16.mxu0 0
        %578 = vmatpush1.bf16.msra.mxu0 0
        %579 = vmatprep.subr.bf16.mxu0 0
        %580 = vmatpush1.bf16.msra.mxu0 0
        %581 = vmatprep.subr.bf16.mxu0 0
        %582 = vmatpush1.bf16.msra.mxu0 0
        %583 = vmatprep.subr.bf16.mxu0 0
        %584 = vmatpush1.bf16.msra.mxu0 0
        %585 = vmatprep.subr.bf16.mxu0 0
        %586 = vmatpush1.bf16.msra.mxu0 0
        %587 = vmatprep.subr.bf16.mxu0 0
        %588 = vmatpush1.bf16.msra.mxu0 0
        %589 = vmatprep.subr.bf16.mxu0 0
        %590 = vmatpush1.bf16.msra.mxu0 0
        %591 = vmatprep.subr.bf16.mxu0 0
        %592 = vmatpush1.bf16.msra.mxu0 0
        %593 = vmatprep.subr.bf16.mxu0 0
        %594 = vmatpush1.bf16.msra.mxu0 0
        %595 = vmatprep.subr.bf16.mxu0 0
        %596 = vmatpush1.bf16.msra.mxu0 0
        %597 = vmatprep.subr.bf16.mxu0 0
        %598 = vmatpush1.bf16.msra.mxu0 0
        %599 = vmatprep.subr.bf16.mxu0 0
        %600 = vmatpush1.bf16.msra.mxu0 0
        %601 = vmatprep.subr.bf16.mxu0 0
        %602 = vmatpush1.bf16.msra.mxu0 0
        %603 = vmatprep.mubr.bf16.mxu0 0
        %604 = vmatmul.mubr.bf16.gmra.mrb[0].mxu0 %v446
        %v605 = vpop.f32.mrb[0].mxu0
        %v606 = vadd.f32 0.0, %v605
        %v607 = vpop.f32.mrb[0].mxu0
        %v608 = vpop.f32.mrb[0].mxu0
        %v609 = vadd.f32 0.0, %v608
        %v610 = vpop.f32.mrb[0].mxu0
        %611 = vmatprep.mubr.bf16.mxu0 0
        %612 = vmatmul.mubr.bf16.gmra.mrb[0].mxu0 %v449
        %v613 = vpop.f32.mrb[0].mxu0
        %v614 = vadd.f32 0.0, %v613
        %v615 = vpop.f32.mrb[0].mxu0
        %v616 = vpop.f32.mrb[0].mxu0
        %v617 = vadd.f32 0.0, %v616
        %v618 = vpop.f32.mrb[0].mxu0
        %619 = vmatprep.mubr.bf16.mxu0 0
        %620 = vmatmul.mubr.bf16.gmra.mrb[0].mxu0 %v452
        %v621 = vpop.f32.mrb[0].mxu0
        %v622 = vadd.f32 0.0, %v621
        %v623 = vpop.f32.mrb[0].mxu0
        %v624 = vpop.f32.mrb[0].mxu0
        %v625 = vadd.f32 0.0, %v624
        %v626 = vpop.f32.mrb[0].mxu0
        %627 = vmatprep.mubr.bf16.mxu0 0
        %628 = vmatmul.mubr.bf16.gmra.mrb[0].mxu0 %v455
        %v629 = vpop.f32.mrb[0].mxu0
        %v630 = vadd.f32 0.0, %v629
        %v631 = vpop.f32.mrb[0].mxu0
        %v632 = vpop.f32.mrb[0].mxu0
        %v633 = vadd.f32 0.0, %v632
        %v634 = vpop.f32.mrb[0].mxu0
        %635 = vdwg.mxu0
        %v636 = vpack.c.bf16 %v609, %v606
        %v637 = vpack.c.bf16 %v617, %v614
        %v638 = vpack.c.bf16 %v625, %v622
        %v639 = vpack.c.bf16 %v633, %v630
        %v644 = vunpack.c.l.b16 %v636
        %v645 = vunpack.c.h.b16 %v636
        %v646 = vunpack.c.l.b16 %v637
        %v647 = vunpack.c.h.b16 %v637
        %v648 = vunpack.c.l.b16 %v638
        %v649 = vunpack.c.h.b16 %v638
        %v650 = vunpack.c.l.b16 %v639
        %v651 = vunpack.c.h.b16 %v639
        %v652 = vpack.c.b16 %v644, %v644
        %v653 = vpack.c.b16 %v645, %v645
        %v654 = vpack.c.b16 %v646, %v646
        %v655 = vpack.c.b16 %v647, %v647
        %v656 = vpack.c.b16 %v648, %v648
        %v657 = vpack.c.b16 %v649, %v649
        %v658 = vpack.c.b16 %v650, %v650
        %v659 = vpack.c.b16 %v651, %v651
        %vm668 = vcmask 257024
        %669 = vst.msk [vmem:[%s286] sm:$0xf] %vm668, %v652
        %670 = vst.msk [vmem:[%s286 + $0x4] sm:$0xf] %vm668, %v653
        %671 = vst.msk [vmem:[%s286 + $0x8] sm:$0xf] %vm668, %v654
        %672 = vst.msk [vmem:[%s286 + $0xc] sm:$0xf] %vm668, %v655
        %673 = vst.msk [vmem:[%s286 + $0x10] sm:$0xf] %vm668, %v656
        %674 = vst.msk [vmem:[%s286 + $0x14] sm:$0xf] %vm668, %v657
        %675 = vst.msk [vmem:[%s286 + $0x18] sm:$0xf] %vm668, %v658
        %676 = vst.msk [vmem:[%s286 + $0x1c] sm:$0xf] %vm668, %v659
        %s677 = smul.u32 8, %s21
        %p678 = scmp.lt.s32.totalorder %s677, 15
        %s679 = scalar_select %p678, %s677, 15
        %s680 = smul.addr %s679, 4
        %s681 = scalar_lea.vmem %s5, %s680
        %s682 = smul.u32 8, %s21
        %p683 = scmp.lt.s32.totalorder %s682, 15
        %s684 = scalar_select %p683, %s682, 15
        %s685 = smul.addr %s684, 4
        %s686 = scalar_lea.vmem %s6, %s685
        // Predicated region
        $region45: #{_lambda_.5} parent=39 // pred_check
          %p687 = pneg %p149
        $region46: #{_lambda_.5} parent=39 // pred_check_branch
          %689 = sbr.rel (%p687) target = $region48
        $region47: #{_lambda_.5} parent=39 // pred_region
          %s690 = smul.u32 8, %s21
        $region48: #{_lambda_.5} parent=39 // pred_fallthru
          _
        // Predicated region
        $region49: #{_lambda_.5} parent=39 // pred_check
          %p691 = pneg %p175
        $region50: #{_lambda_.5} parent=39 // pred_check_branch
          %693 = sbr.rel (%p691) target = $region52
        $region51: #{_lambda_.5} parent=39 // pred_region
          %s694 = smul.u32 8, %s21
        $region52: #{_lambda_.5} parent=39 // pred_fallthru
          _
      $region40: #{_lambda_.5} parent=5 // pred_fallthru
        _
      %p695 = scmp.le.s32.totalorder 2, %s16
      // Predicated region
      $region53: #{_lambda_.5} parent=5 // pred_check
        %p696 = pneg %p695
      $region54: #{_lambda_.5} parent=5 // pred_check_branch
        %698 = sbr.rel (%p696) target = $region56
      $region55: #{_lambda_.5} parent=5 // pred_region
        %s699 = ssub.s32 %s16, 2
        // Predicated region
        $region57: #{_lambda_.5} parent=55 // pred_check
          %p700 = pneg %p155
        $region58: #{_lambda_.5} parent=55 // pred_check_branch
          %702 = sbr.rel (%p700) target = $region60
        $region59: #{_lambda_.5} parent=55 // pred_region
          %s703 = smul.u32 8, %s22
          %p704 = scmp.lt.s32.totalorder %s703, 15
          %s705 = scalar_select %p704, %s703, 15
          %s706 = smul.addr %s705, 4
          %s707 = scalar_lea.vmem %s5, %s706
        $region60: #{_lambda_.5} parent=55 // pred_fallthru
          _
        // Predicated region
        $region61: #{_lambda_.5} parent=55 // pred_check
          %p708 = pneg %p181
        $region62: #{_lambda_.5} parent=55 // pred_check_branch
          %710 = sbr.rel (%p708) target = $region64
        $region63: #{_lambda_.5} parent=55 // pred_region
          %s711 = smul.u32 8, %s22
          %p712 = scmp.lt.s32.totalorder %s711, 15
          %s713 = scalar_select %p712, %s711, 15
          %s714 = smul.addr %s713, 4
          %s715 = scalar_lea.vmem %s6, %s714
        $region64: #{_lambda_.5} parent=55 // pred_fallthru
          _
      $region56: #{_lambda_.5} parent=5 // pred_fallthru
        _
    $region6: #{_lambda_.5} parent=1 // loop_footer
      %s20 = sadd.s32 1, %s16
    $region7: #{_lambda_.5} parent=1 // loop_footer_branch
      %15 = sbr.rel target = $region3
    $region8: #{_lambda_.5} parent=1 // loop_exit
      _
    %716 = vsyncpa [#allocation3], 1
    %s717 = scalar_lea.sflag [#allocation3], 1
    %718 = vsyncpa %s717, 1

// kernel: _lambda_.7
$region0: #{_lambda_.7}
  #allocation0 [shape = 'u32[]', space=smem, size = 0x4, offset = 0x4, fixed_abs, tag = 'smem constant byte address 0x4 - core index']
  #allocation1 [shape = 'u32[144,128]{1,0:T(1,128)}', space=vmem, size = 0x12000, scoped, tag = 'internal scratch']
  %s0 = inlined_call_operand.vmem [shape: bf16[128,16], index: 0, kind: input, shape index: {}]
  %s1 = inlined_call_operand.vmem [shape: bf16[16,16], index: 1, kind: input, shape index: {}]
  %s2 = inlined_call_operand.vmem [shape: f32[1,16], index: 2, kind: input, shape index: {}]
  %s3 = inlined_call_operand.vmem [shape: f32[1,16], index: 3, kind: input, shape index: {}]
  %s4 = inlined_call_operand.vmem [shape: f32[128,16], index: 4, kind: input, shape index: {}]
  %s5 = inlined_call_operand.vmem [shape: f32[128,16], index: 5, kind: output, shape index: {}]
  %s6 = sld [smem:[#allocation0]]
  $region53: #{_lambda_.7} parent=0
    _
  %s8 = ssub.s32 1, %s6
  %s9 = scalar_select 0, %s8, %s6
  loop: start=0, step=1, limit=4
  $region2: #{_lambda_.7} parent=0 // loop_pre_header
    _
  $region3: #{_lambda_.7} parent=0 // loop_header
    %s11 = sphi 0, %s15
    %p12 = scmp.ge.s32.totalorder %s11, 4
    %s21 = sphi 0, %s23
    %s24 = sphi 0, %s21
    %s25 = sphi 0, %s24
    %s41 = sphi 0, %s25
    %s45 = sphi 0, %s45
    %s47 = sphi 0, %s45
    %s48 = sphi 0, %s47
    %s62 = sphi 0, %s48
    %s66 = sphi 0, %s66
    %s68 = sphi 0, %s66
    %s69 = sphi 0, %s68
    %s83 = sphi 0, %s69
    %s87 = sphi 0, %s87
    %s89 = sphi 0, %s87
    %s90 = sphi 0, %s89
    %s104 = sphi 0, %s90
    %s110 = sphi 0, %s112
    %s113 = sphi 0, %s110
    %s114 = sphi 0, %s113
    %s130 = sphi 0, %s114
    %s136 = sphi 0, %s138
    %s139 = sphi 0, %s136
    %s140 = sphi 0, %s139
    %s156 = sphi 0, %s140
  $region4: #{_lambda_.7} parent=0 // loop_header_branch
    %14 = sbr.rel (%p12) target = $region8
  $region5: #{_lambda_.7} parent=0 // loop_body
    %s16 = ssub.s32 %s11, 1
    %s17 = ssub.s32 %s11, 2
    %s18 = sadd.s32 %s11, 1
    %s19 = ssub.s32 %s11, %s18
    %p20 = scmp.eq.s32.totalorder %s19, 0
    %s22 = sadd.s32 %s21, 1
    %s23 = scalar_select %p20, %s21, %s22
    %p26 = pneg %p20
    %p27 = scmp.eq.s32.totalorder %s11, 1
    %p28 = por %p26, %p27
    %p29 = scmp.ne.s32.totalorder %s21, %s24
    %p30 = scmp.eq.s32.totalorder %s11, 0
    %p31 = por %p29, %p30
    %p32 = scmp.ne.s32.totalorder %s21, %s24
    %p33 = scmp.eq.s32.totalorder %s16, 1
    %p34 = por %p32, %p33
    %p35 = scmp.ne.s32.totalorder %s24, %s25
    %p36 = scmp.eq.s32.totalorder %s16, 0
    %p37 = por %p35, %p36
    %p38 = scmp.ne.s32.totalorder %s24, %s25
    %p39 = scmp.eq.s32.totalorder %s17, 1
    %p40 = por %p38, %p39
    %p42 = scmp.ne.s32.totalorder %s25, %s41
    %p43 = scmp.eq.s32.totalorder %s17, 0
    %p44 = por %p42, %p43
    %s46 = sadd.s32 %s45, 1
    %p49 = scmp.eq.s32.totalorder %s11, 1
    %p50 = scmp.ne.s32.totalorder %s45, %s47
    %p51 = scmp.eq.s32.totalorder %s11, 0
    %p52 = por %p50, %p51
    %p53 = scmp.ne.s32.totalorder %s45, %s47
    %p54 = scmp.eq.s32.totalorder %s16, 1
    %p55 = por %p53, %p54
    %p56 = scmp.ne.s32.totalorder %s47, %s48
    %p57 = scmp.eq.s32.totalorder %s16, 0
    %p58 = por %p56, %p57
    %p59 = scmp.ne.s32.totalorder %s47, %s48
    %p60 = scmp.eq.s32.totalorder %s17, 1
    %p61 = por %p59, %p60
    %p63 = scmp.ne.s32.totalorder %s48, %s62
    %p64 = scmp.eq.s32.totalorder %s17, 0
    %p65 = por %p63, %p64
    %s67 = sadd.s32 %s66, 1
    %p70 = scmp.eq.s32.totalorder %s11, 1
    %p71 = scmp.ne.s32.totalorder %s66, %s68
    %p72 = scmp.eq.s32.totalorder %s11, 0
    %p73 = por %p71, %p72
    %p74 = scmp.ne.s32.totalorder %s66, %s68
    %p75 = scmp.eq.s32.totalorder %s16, 1
    %p76 = por %p74, %p75
    %p77 = scmp.ne.s32.totalorder %s68, %s69
    %p78 = scmp.eq.s32.totalorder %s16, 0
    %p79 = por %p77, %p78
    %p80 = scmp.ne.s32.totalorder %s68, %s69
    %p81 = scmp.eq.s32.totalorder %s17, 1
    %p82 = por %p80, %p81
    %p84 = scmp.ne.s32.totalorder %s69, %s83
    %p85 = scmp.eq.s32.totalorder %s17, 0
    %p86 = por %p84, %p85
    %s88 = sadd.s32 %s87, 1
    %p91 = scmp.eq.s32.totalorder %s11, 1
    %p92 = scmp.ne.s32.totalorder %s87, %s89
    %p93 = scmp.eq.s32.totalorder %s11, 0
    %p94 = por %p92, %p93
    %p95 = scmp.ne.s32.totalorder %s87, %s89
    %p96 = scmp.eq.s32.totalorder %s16, 1
    %p97 = por %p95, %p96
    %p98 = scmp.ne.s32.totalorder %s89, %s90
    %p99 = scmp.eq.s32.totalorder %s16, 0
    %p100 = por %p98, %p99
    %p101 = scmp.ne.s32.totalorder %s89, %s90
    %p102 = scmp.eq.s32.totalorder %s17, 1
    %p103 = por %p101, %p102
    %p105 = scmp.ne.s32.totalorder %s90, %s104
    %p106 = scmp.eq.s32.totalorder %s17, 0
    %p107 = por %p105, %p106
    %s108 = ssub.s32 %s11, %s18
    %p109 = scmp.eq.s32.totalorder %s108, 0
    %s111 = sadd.s32 %s110, 1
    %s112 = scalar_select %p109, %s110, %s111
    %p115 = pneg %p109
    %p116 = scmp.eq.s32.totalorder %s11, 1
    %p117 = por %p115, %p116
    %p118 = scmp.ne.s32.totalorder %s110, %s113
    %p119 = scmp.eq.s32.totalorder %s11, 0
    %p120 = por %p118, %p119
    %p121 = scmp.ne.s32.totalorder %s110, %s113
    %p122 = scmp.eq.s32.totalorder %s16, 1
    %p123 = por %p121, %p122
    %p124 = scmp.ne.s32.totalorder %s113, %s114
    %p125 = scmp.eq.s32.totalorder %s16, 0
    %p126 = por %p124, %p125
    %p127 = scmp.ne.s32.totalorder %s113, %s114
    %p128 = scmp.eq.s32.totalorder %s17, 1
    %p129 = por %p127, %p128
    %p131 = scmp.ne.s32.totalorder %s114, %s130
    %p132 = scmp.eq.s32.totalorder %s17, 0
    %p133 = por %p131, %p132
    %s134 = ssub.s32 %s11, %s18
    %p135 = scmp.eq.s32.totalorder %s134, 0
    %s137 = sadd.s32 %s136, 1
    %s138 = scalar_select %p135, %s136, %s137
    %p141 = pneg %p135
    %p142 = scmp.eq.s32.totalorder %s11, 1
    %p143 = por %p141, %p142
    %p144 = scmp.ne.s32.totalorder %s136, %s139
    %p145 = scmp.eq.s32.totalorder %s11, 0
    %p146 = por %p144, %p145
    %p147 = scmp.ne.s32.totalorder %s136, %s139
    %p148 = scmp.eq.s32.totalorder %s16, 1
    %p149 = por %p147, %p148
    %p150 = scmp.ne.s32.totalorder %s139, %s140
    %p151 = scmp.eq.s32.totalorder %s16, 0
    %p152 = por %p150, %p151
    %p153 = scmp.ne.s32.totalorder %s139, %s140
    %p154 = scmp.eq.s32.totalorder %s17, 1
    %p155 = por %p153, %p154
    %p157 = scmp.ne.s32.totalorder %s140, %s156
    %p158 = scmp.eq.s32.totalorder %s17, 0
    %p159 = por %p157, %p158
    %p160 = scmp.le.s32.totalorder 1, %s11
    %p161 = scmp.lt.s32.totalorder %s11, 3
    %p162 = pnand %p160, %p161
    %p163 = pneg %p162
    // Predicated region
    $region9: #{_lambda_.7} parent=5 // pred_check
      _
    $region10: #{_lambda_.7} parent=5 // pred_check_branch
      %165 = sbr.rel (%p162) target = $region12
    $region11: #{_lambda_.7} parent=5 // pred_region
      %s166 = ssub.s32 %s11, 1
      // Predicated region
      $region13: #{_lambda_.7} parent=11 // pred_check
        %p167 = pneg %p58
      $region14: #{_lambda_.7} parent=11 // pred_check_branch
        %169 = sbr.rel (%p167) target = $region16
      $region15: #{_lambda_.7} parent=11 // pred_region
        _
      $region16: #{_lambda_.7} parent=11 // pred_fallthru
        _
      // Predicated region
      $region17: #{_lambda_.7} parent=11 // pred_check
        %p170 = pneg %p79
      $region18: #{_lambda_.7} parent=11 // pred_check_branch
        %172 = sbr.rel (%p170) target = $region20
      $region19: #{_lambda_.7} parent=11 // pred_region
        _
      $region20: #{_lambda_.7} parent=11 // pred_fallthru
        _
      // Predicated region
      $region21: #{_lambda_.7} parent=11 // pred_check
        %p173 = pneg %p100
      $region22: #{_lambda_.7} parent=11 // pred_check_branch
        %175 = sbr.rel (%p173) target = $region24
      $region23: #{_lambda_.7} parent=11 // pred_region
        _
      $region24: #{_lambda_.7} parent=11 // pred_fallthru
        _
    $region12: #{_lambda_.7} parent=5 // pred_fallthru
      _
    %p176 = scmp.lt.s32.totalorder %s11, 2
    // Predicated region
    $region25: #{_lambda_.7} parent=5 // pred_check
      %p177 = pneg %p176
    $region26: #{_lambda_.7} parent=5 // pred_check_branch
      %179 = sbr.rel (%p177) target = $region28
    $region27: #{_lambda_.7} parent=5 // pred_region
      // Predicated region
      $region29: #{_lambda_.7} parent=27 // pred_check
        %p180 = pneg %p31
      $region30: #{_lambda_.7} parent=27 // pred_check_branch
        %182 = sbr.rel (%p180) target = $region32
      $region31: #{_lambda_.7} parent=27 // pred_region
        %s183 = smul.u32 8, %s11
        %p184 = scmp.lt.s32.totalorder %s183, 15
        %s185 = scalar_select %p184, %s183, 15
        %s186 = smul.addr %s185, 4
        %s187 = scalar_lea.vmem %s0, %s186
        %s188 = smul.u32 8, %s11
      $region32: #{_lambda_.7} parent=27 // pred_fallthru
        _
      // Predicated region
      $region33: #{_lambda_.7} parent=27 // pred_check
        %p189 = pneg %p120
      $region34: #{_lambda_.7} parent=27 // pred_check_branch
        %191 = sbr.rel (%p189) target = $region36
      $region35: #{_lambda_.7} parent=27 // pred_region
        %s192 = smul.u32 8, %s11
        %p193 = scmp.lt.s32.totalorder %s192, 15
        %s194 = scalar_select %p193, %s192, 15
        %s195 = smul.addr %s194, 8
        %s196 = scalar_lea.vmem %s4, %s195
        %s197 = smul.u32 8, %s11
      $region36: #{_lambda_.7} parent=27 // pred_fallthru
        _
    $region28: #{_lambda_.7} parent=5 // pred_fallthru
      _
    %p198 = scmp.le.s32.totalorder 1, %s11
    %p199 = scmp.lt.s32.totalorder %s11, 3
    %p200 = pnand %p198, %p199
    %p201 = pneg %p200
    // Predicated region
    $region37: #{_lambda_.7} parent=5 // pred_check
      _
    $region38: #{_lambda_.7} parent=5 // pred_check_branch
      %203 = sbr.rel (%p200) target = $region40
    $region39: #{_lambda_.7} parent=5 // pred_region
      %s204 = ssub.s32 %s11, 1
      %s205 = smul.u32 8, %s16
      %p206 = scmp.lt.s32.totalorder %s205, 15
      %s207 = scalar_select %p206, %s205, 15
      %s208 = smul.addr %s207, 4
      %s209 = scalar_lea.vmem %s0, %s208
      %p210 = pneg %p37
      %p211 = pneg %p34
      %p212 = pneg %p58
      %p213 = pneg %p55
      %p214 = pneg %p79
      %p215 = pneg %p76
      %p216 = pneg %p100
      %p217 = pneg %p97
      %s218 = smul.u32 8, %s16
      %p219 = scmp.lt.s32.totalorder %s218, 15
      %s220 = scalar_select %p219, %s218, 15
      %s221 = smul.addr %s220, 8
      %s222 = scalar_lea.vmem %s4, %s221
      %p223 = pneg %p126
      %p224 = pneg %p123
      %p225 = pneg %p152
      %p226 = pneg %p149
      %s227 = smul.u32 8, %s16
      %p228 = scmp.lt.s32.totalorder %s227, 15
      %s229 = scalar_select %p228, %s227, 15
      %s230 = smul.addr %s229, 8
      %s231 = scalar_lea.vmem %s5, %s230
      %s232 = smul.u32 8, %s16
      %p233 = scmp.lt.s32.totalorder %s232, 15
      %s234 = scalar_select %p233, %s232, 15
      %s235 = smul.addr %s234, 4
      %s236 = scalar_lea.vmem %s0, %s235
      %s237 = smul.u32 8, %s16
      %s238 = smul.u32 8, %s16
      %p239 = scmp.lt.s32.totalorder %s238, 15
      %s240 = scalar_select %p239, %s238, 15
      %s241 = smul.addr %s240, 8
      %s242 = scalar_lea.vmem %s4, %s241
      %s243 = smul.u32 8, %s16
      %s244 = smul.u32 8, %s16
      %p245 = scmp.lt.s32.totalorder %s244, 15
      %s246 = scalar_select %p245, %s244, 15
      %s247 = smul.addr %s246, 8
      %s248 = scalar_lea.vmem %s5, %s247
      %s249 = smul.u32 8, %s16
      %v251 = vld [vmem:[%s236] sm:$0xf]
      %v252 = vld [vmem:[%s236 + $0x4] sm:$0xf]
      %v253 = vld [vmem:[%s236 + $0x8] sm:$0xf]
      %v254 = vld [vmem:[%s236 + $0xc] sm:$0xf]
      %v255 = vld [vmem:[%s236 + $0x10] sm:$0xf]
      %v256 = vld [vmem:[%s236 + $0x14] sm:$0xf]
      %v257 = vld [vmem:[%s236 + $0x18] sm:$0xf]
      %v258 = vld [vmem:[%s236 + $0x1c] sm:$0xf]
      %v259 = vld [vmem:[%s1] sm:$0xf]
      %v260 = vld [vmem:[%s1 + $0x4] sm:$0xf]
      %v261 = vld [vmem:[%s2] sm:$0x1]
      %v263 = vlaneseq
      %v264 = vshrl.u32 %v263, 7
      %v265 = vsub.s32 0, %v264
      %v266 = vrot.slane %v261, %v265
      %v276 = vunpack.c.l.b16 %v251
      %v277 = vunpack.c.l.b16 %v252
      %v278 = vunpack.c.l.b16 %v253
      %v279 = vunpack.c.l.b16 %v254
      %v280 = vunpack.c.l.b16 %v255
      %v281 = vunpack.c.l.b16 %v256
      %v282 = vunpack.c.l.b16 %v257
      %v283 = vunpack.c.l.b16 %v258
      %v284 = vpack.c.b16 %v277, %v276
      %v285 = vpack.c.b16 %v279, %v278
      %v286 = vpack.c.b16 %v281, %v280
      %v287 = vpack.c.b16 %v283, %v282
      %v290 = vunpack.c.l.b16 %v259
      %v291 = vunpack.c.l.b16 %v260
      %v292 = vpack.c.b16 %v291, %v290
      %vm294 = vcmask 130048
      %v296 = vsel %vm294, %v284, 0
      %v299 = vsel %vm294, %v285, 0
      %v302 = vsel %vm294, %v286, 0
      %v305 = vsel %vm294, %v287, 0
      %307 = vmatprep.subr.bf16.mxu0 0
      %308 = vmatpush1.bf16.msra.mxu0 %v292
      %309 = vmatprep.subr.bf16.mxu0 0
      %310 = vmatpush1.bf16.msra.mxu0 0
      %311 = vmatprep.subr.bf16.mxu0 0
      %312 = vmatpush1.bf16.msra.mxu0 0
      %313 = vmatprep.subr.bf16.mxu0 0
      %314 = vmatpush1.bf16.msra.mxu0 0
      %315 = vmatprep.subr.bf16.mxu0 0
      %316 = vmatpush1.bf16.msra.mxu0 0
      %317 = vmatprep.subr.bf16.mxu0 0
      %318 = vmatpush1.bf16.msra.mxu0 0
      %319 = vmatprep.subr.bf16.mxu0 0
      %320 = vmatpush1.bf16.msra.mxu0 0
      %321 = vmatprep.subr.bf16.mxu0 0
      %322 = vmatpush1.bf16.msra.mxu0 0
      %323 = vmatprep.subr.bf16.mxu0 0
      %324 = vmatpush1.bf16.msra.mxu0 0
      %325 = vmatprep.subr.bf16.mxu0 0
      %326 = vmatpush1.bf16.msra.mxu0 0
      %327 = vmatprep.subr.bf16.mxu0 0
      %328 = vmatpush1.bf16.msra.mxu0 0
      %329 = vmatprep.subr.bf16.mxu0 0
      %330 = vmatpush1.bf16.msra.mxu0 0
      %331 = vmatprep.subr.bf16.mxu0 0
      %332 = vmatpush1.bf16.msra.mxu0 0
      %333 = vmatprep.subr.bf16.mxu0 0
      %334 = vmatpush1.bf16.msra.mxu0 0
      %335 = vmatprep.subr.bf16.mxu0 0
      %336 = vmatpush1.bf16.msra.mxu0 0
      %337 = vmatprep.subr.bf16.mxu0 0
      %338 = vmatpush1.bf16.msra.mxu0 0
      %339 = vmatprep.mubr.bf16.mxu0 0
      %340 = vmatmul.mubr.bf16.gmra.mrb[0].mxu0 %v296
      %v341 = vpop.f32.mrb[0].mxu0
      %v342 = vadd.f32 %v266, %v341
      %v343 = vpop.f32.mrb[0].mxu0
      %v344 = vpop.f32.mrb[0].mxu0
      %v345 = vadd.f32 %v266, %v344
      %v346 = vpop.f32.mrb[0].mxu0
      %347 = vmatprep.mubr.bf16.mxu0 0
      %348 = vmatmul.mubr.bf16.gmra.mrb[0].mxu0 %v299
      %v349 = vpop.f32.mrb[0].mxu0
      %v350 = vadd.f32 %v266, %v349
      %v351 = vpop.f32.mrb[0].mxu0
      %v352 = vpop.f32.mrb[0].mxu0
      %v353 = vadd.f32 %v266, %v352
      %v354 = vpop.f32.mrb[0].mxu0
      %355 = vmatprep.mubr.bf16.mxu0 0
      %356 = vmatmul.mubr.bf16.gmra.mrb[0].mxu0 %v302
      %v357 = vpop.f32.mrb[0].mxu0
      %v358 = vadd.f32 %v266, %v357
      %v359 = vpop.f32.mrb[0].mxu0
      %v360 = vpop.f32.mrb[0].mxu0
      %v361 = vadd.f32 %v266, %v360
      %v362 = vpop.f32.mrb[0].mxu0
      %363 = vmatprep.mubr.bf16.mxu0 0
      %364 = vmatmul.mubr.bf16.gmra.mrb[0].mxu0 %v305
      %v365 = vpop.f32.mrb[0].mxu0
      %v366 = vadd.f32 %v266, %v365
      %v367 = vpop.f32.mrb[0].mxu0
      %v368 = vpop.f32.mrb[0].mxu0
      %v369 = vadd.f32 %v266, %v368
      %v370 = vpop.f32.mrb[0].mxu0
      %371 = vdwg.mxu0
      %v372 = vld [vmem:[%s242] sm:$0xff]
      %v373 = vld [vmem:[%s242 + $0x8] sm:$0xff]
      %v374 = vld [vmem:[%s242 + $0x10] sm:$0xff]
      %v375 = vld [vmem:[%s242 + $0x18] sm:$0xff]
      %v376 = vld [vmem:[%s242 + $0x20] sm:$0xff]
      %v377 = vld [vmem:[%s242 + $0x28] sm:$0xff]
      %v378 = vld [vmem:[%s242 + $0x30] sm:$0xff]
      %v379 = vld [vmem:[%s242 + $0x38] sm:$0xff]
      %v380 = vld [vmem:[%s3] sm:$0x1]
      %v382 = vlaneseq
      %v383 = vshrl.u32 %v382, 7
      %v384 = vsub.s32 0, %v383
      %v385 = vrot.slane %v380, %v384
      %v387 = vmul.f32 %v385, %v342
      %v388 = vmul.f32 %v385, %v345
      %v389 = vmul.f32 %v385, %v350
      %v390 = vmul.f32 %v385, %v353
      %v391 = vmul.f32 %v385, %v358
      %v392 = vmul.f32 %v385, %v361
      %v393 = vmul.f32 %v385, %v366
      %v394 = vmul.f32 %v385, %v369
      %v395 = vadd.f32 %v372, %v387
      %v396 = vadd.f32 %v373, %v388
      %v397 = vadd.f32 %v374, %v389
      %v398 = vadd.f32 %v375, %v390
      %v399 = vadd.f32 %v376, %v391
      %v400 = vadd.f32 %v377, %v392
      %v401 = vadd.f32 %v378, %v393
      %v402 = vadd.f32 %v379, %v394
      %403 = vst.msk [vmem:[%s248] sm:$0xff] %vm294, %v395
      %404 = vst.msk [vmem:[%s248 + $0x8] sm:$0xff] %vm294, %v396
      %405 = vst.msk [vmem:[%s248 + $0x10] sm:$0xff] %vm294, %v397
      %406 = vst.msk [vmem:[%s248 + $0x18] sm:$0xff] %vm294, %v398
      %407 = vst.msk [vmem:[%s248 + $0x20] sm:$0xff] %vm294, %v399
      %408 = vst.msk [vmem:[%s248 + $0x28] sm:$0xff] %vm294, %v400
      %409 = vst.msk [vmem:[%s248 + $0x30] sm:$0xff] %vm294, %v401
      %410 = vst.msk [vmem:[%s248 + $0x38] sm:$0xff] %vm294, %v402
      %s411 = smul.u32 8, %s16
      %p412 = scmp.lt.s32.totalorder %s411, 15
      %s413 = scalar_select %p412, %s411, 15
      %s414 = smul.addr %s413, 8
      %s415 = scalar_lea.vmem %s5, %s414
      // Predicated region
      $region41: #{_lambda_.7} parent=39 // pred_check
        %p416 = pneg %p149
      $region42: #{_lambda_.7} parent=39 // pred_check_branch
        %418 = sbr.rel (%p416) target = $region44
      $region43: #{_lambda_.7} parent=39 // pred_region
        %s419 = smul.u32 8, %s16
      $region44: #{_lambda_.7} parent=39 // pred_fallthru
        _
    $region40: #{_lambda_.7} parent=5 // pred_fallthru
      _
    %p420 = scmp.le.s32.totalorder 2, %s11
    // Predicated region
    $region45: #{_lambda_.7} parent=5 // pred_check
      %p421 = pneg %p420
    $region46: #{_lambda_.7} parent=5 // pred_check_branch
      %423 = sbr.rel (%p421) target = $region48
    $region47: #{_lambda_.7} parent=5 // pred_region
      %s424 = ssub.s32 %s11, 2
      // Predicated region
      $region49: #{_lambda_.7} parent=47 // pred_check
        %p425 = pneg %p155
      $region50: #{_lambda_.7} parent=47 // pred_check_branch
        %427 = sbr.rel (%p425) target = $region52
      $region51: #{_lambda_.7} parent=47 // pred_region
        %s428 = smul.u32 8, %s17
        %p429 = scmp.lt.s32.totalorder %s428, 15
        %s430 = scalar_select %p429, %s428, 15
        %s431 = smul.addr %s430, 8
        %s432 = scalar_lea.vmem %s5, %s431
      $region52: #{_lambda_.7} parent=47 // pred_fallthru
        _
    $region48: #{_lambda_.7} parent=5 // pred_fallthru
      _
  $region6: #{_lambda_.7} parent=0 // loop_footer
    %s15 = sadd.s32 1, %s11
  $region7: #{_lambda_.7} parent=0 // loop_footer_branch
    %10 = sbr.rel target = $region3
  $region8: #{_lambda_.7} parent=0 // loop_exit
    _

// kernel: _lambda_.8
$region0: #{_lambda_.8}
  #allocation0 [shape = 'u32[]', space=smem, size = 0x4, offset = 0x4, fixed_abs, tag = 'smem constant byte address 0x4 - core index']
  #allocation1 [shape = 'u32[144,128]{1,0:T(1,128)}', space=vmem, size = 0x12000, scoped, tag = 'internal scratch']
  %s0 = inlined_call_operand.vmem [shape: f32[128,16], index: 0, kind: input, shape index: {}]
  %s1 = inlined_call_operand.vmem [shape: f32[1,16], index: 1, kind: input, shape index: {}]
  %s2 = inlined_call_operand.vmem [shape: f32[1,16], index: 2, kind: input, shape index: {}]
  %s3 = inlined_call_operand.vmem [shape: bf16[16,64], index: 3, kind: input, shape index: {}]
  %s4 = inlined_call_operand.vmem [shape: f32[1,64], index: 4, kind: input, shape index: {}]
  %s5 = inlined_call_operand.vmem [shape: bf16[128,64], index: 5, kind: output, shape index: {}]
  %s6 = sld [smem:[#allocation0]]
  $region53: #{_lambda_.8} parent=0
    _
  %s8 = ssub.s32 1, %s6
  %s9 = scalar_select 0, %s8, %s6
  loop: start=0, step=1, limit=4
  $region2: #{_lambda_.8} parent=0 // loop_pre_header
    _
  $region3: #{_lambda_.8} parent=0 // loop_header
    %s11 = sphi 0, %s15
    %p12 = scmp.ge.s32.totalorder %s11, 4
    %s21 = sphi 0, %s23
    %s24 = sphi 0, %s21
    %s25 = sphi 0, %s24
    %s41 = sphi 0, %s25
    %s45 = sphi 0, %s45
    %s47 = sphi 0, %s45
    %s48 = sphi 0, %s47
    %s62 = sphi 0, %s48
    %s66 = sphi 0, %s66
    %s68 = sphi 0, %s66
    %s69 = sphi 0, %s68
    %s83 = sphi 0, %s69
    %s87 = sphi 0, %s87
    %s89 = sphi 0, %s87
    %s90 = sphi 0, %s89
    %s104 = sphi 0, %s90
    %s108 = sphi 0, %s108
    %s110 = sphi 0, %s108
    %s111 = sphi 0, %s110
    %s125 = sphi 0, %s111
    %s131 = sphi 0, %s133
    %s134 = sphi 0, %s131
    %s135 = sphi 0, %s134
    %s151 = sphi 0, %s135
  $region4: #{_lambda_.8} parent=0 // loop_header_branch
    %14 = sbr.rel (%p12) target = $region8
  $region5: #{_lambda_.8} parent=0 // loop_body
    %s16 = ssub.s32 %s11, 1
    %s17 = ssub.s32 %s11, 2
    %s18 = sadd.s32 %s11, 1
    %s19 = ssub.s32 %s11, %s18
    %p20 = scmp.eq.s32.totalorder %s19, 0
    %s22 = sadd.s32 %s21, 1
    %s23 = scalar_select %p20, %s21, %s22
    %p26 = pneg %p20
    %p27 = scmp.eq.s32.totalorder %s11, 1
    %p28 = por %p26, %p27
    %p29 = scmp.ne.s32.totalorder %s21, %s24
    %p30 = scmp.eq.s32.totalorder %s11, 0
    %p31 = por %p29, %p30
    %p32 = scmp.ne.s32.totalorder %s21, %s24
    %p33 = scmp.eq.s32.totalorder %s16, 1
    %p34 = por %p32, %p33
    %p35 = scmp.ne.s32.totalorder %s24, %s25
    %p36 = scmp.eq.s32.totalorder %s16, 0
    %p37 = por %p35, %p36
    %p38 = scmp.ne.s32.totalorder %s24, %s25
    %p39 = scmp.eq.s32.totalorder %s17, 1
    %p40 = por %p38, %p39
    %p42 = scmp.ne.s32.totalorder %s25, %s41
    %p43 = scmp.eq.s32.totalorder %s17, 0
    %p44 = por %p42, %p43
    %s46 = sadd.s32 %s45, 1
    %p49 = scmp.eq.s32.totalorder %s11, 1
    %p50 = scmp.ne.s32.totalorder %s45, %s47
    %p51 = scmp.eq.s32.totalorder %s11, 0
    %p52 = por %p50, %p51
    %p53 = scmp.ne.s32.totalorder %s45, %s47
    %p54 = scmp.eq.s32.totalorder %s16, 1
    %p55 = por %p53, %p54
    %p56 = scmp.ne.s32.totalorder %s47, %s48
    %p57 = scmp.eq.s32.totalorder %s16, 0
    %p58 = por %p56, %p57
    %p59 = scmp.ne.s32.totalorder %s47, %s48
    %p60 = scmp.eq.s32.totalorder %s17, 1
    %p61 = por %p59, %p60
    %p63 = scmp.ne.s32.totalorder %s48, %s62
    %p64 = scmp.eq.s32.totalorder %s17, 0
    %p65 = por %p63, %p64
    %s67 = sadd.s32 %s66, 1
    %p70 = scmp.eq.s32.totalorder %s11, 1
    %p71 = scmp.ne.s32.totalorder %s66, %s68
    %p72 = scmp.eq.s32.totalorder %s11, 0
    %p73 = por %p71, %p72
    %p74 = scmp.ne.s32.totalorder %s66, %s68
    %p75 = scmp.eq.s32.totalorder %s16, 1
    %p76 = por %p74, %p75
    %p77 = scmp.ne.s32.totalorder %s68, %s69
    %p78 = scmp.eq.s32.totalorder %s16, 0
    %p79 = por %p77, %p78
    %p80 = scmp.ne.s32.totalorder %s68, %s69
    %p81 = scmp.eq.s32.totalorder %s17, 1
    %p82 = por %p80, %p81
    %p84 = scmp.ne.s32.totalorder %s69, %s83
    %p85 = scmp.eq.s32.totalorder %s17, 0
    %p86 = por %p84, %p85
    %s88 = sadd.s32 %s87, 1
    %p91 = scmp.eq.s32.totalorder %s11, 1
    %p92 = scmp.ne.s32.totalorder %s87, %s89
    %p93 = scmp.eq.s32.totalorder %s11, 0
    %p94 = por %p92, %p93
    %p95 = scmp.ne.s32.totalorder %s87, %s89
    %p96 = scmp.eq.s32.totalorder %s16, 1
    %p97 = por %p95, %p96
    %p98 = scmp.ne.s32.totalorder %s89, %s90
    %p99 = scmp.eq.s32.totalorder %s16, 0
    %p100 = por %p98, %p99
    %p101 = scmp.ne.s32.totalorder %s89, %s90
    %p102 = scmp.eq.s32.totalorder %s17, 1
    %p103 = por %p101, %p102
    %p105 = scmp.ne.s32.totalorder %s90, %s104
    %p106 = scmp.eq.s32.totalorder %s17, 0
    %p107 = por %p105, %p106
    %s109 = sadd.s32 %s108, 1
    %p112 = scmp.eq.s32.totalorder %s11, 1
    %p113 = scmp.ne.s32.totalorder %s108, %s110
    %p114 = scmp.eq.s32.totalorder %s11, 0
    %p115 = por %p113, %p114
    %p116 = scmp.ne.s32.totalorder %s108, %s110
    %p117 = scmp.eq.s32.totalorder %s16, 1
    %p118 = por %p116, %p117
    %p119 = scmp.ne.s32.totalorder %s110, %s111
    %p120 = scmp.eq.s32.totalorder %s16, 0
    %p121 = por %p119, %p120
    %p122 = scmp.ne.s32.totalorder %s110, %s111
    %p123 = scmp.eq.s32.totalorder %s17, 1
    %p124 = por %p122, %p123
    %p126 = scmp.ne.s32.totalorder %s111, %s125
    %p127 = scmp.eq.s32.totalorder %s17, 0
    %p128 = por %p126, %p127
    %s129 = ssub.s32 %s11, %s18
    %p130 = scmp.eq.s32.totalorder %s129, 0
    %s132 = sadd.s32 %s131, 1
    %s133 = scalar_select %p130, %s131, %s132
    %p136 = pneg %p130
    %p137 = scmp.eq.s32.totalorder %s11, 1
    %p138 = por %p136, %p137
    %p139 = scmp.ne.s32.totalorder %s131, %s134
    %p140 = scmp.eq.s32.totalorder %s11, 0
    %p141 = por %p139, %p140
    %p142 = scmp.ne.s32.totalorder %s131, %s134
    %p143 = scmp.eq.s32.totalorder %s16, 1
    %p144 = por %p142, %p143
    %p145 = scmp.ne.s32.totalorder %s134, %s135
    %p146 = scmp.eq.s32.totalorder %s16, 0
    %p147 = por %p145, %p146
    %p148 = scmp.ne.s32.totalorder %s134, %s135
    %p149 = scmp.eq.s32.totalorder %s17, 1
    %p150 = por %p148, %p149
    %p152 = scmp.ne.s32.totalorder %s135, %s151
    %p153 = scmp.eq.s32.totalorder %s17, 0
    %p154 = por %p152, %p153
    %p155 = scmp.le.s32.totalorder 1, %s11
    %p156 = scmp.lt.s32.totalorder %s11, 3
    %p157 = pnand %p155, %p156
    %p158 = pneg %p157
    // Predicated region
    $region9: #{_lambda_.8} parent=5 // pred_check
      _
    $region10: #{_lambda_.8} parent=5 // pred_check_branch
      %160 = sbr.rel (%p157) target = $region12
    $region11: #{_lambda_.8} parent=5 // pred_region
      %s161 = ssub.s32 %s11, 1
      // Predicated region
      $region13: #{_lambda_.8} parent=11 // pred_check
        %p162 = pneg %p58
      $region14: #{_lambda_.8} parent=11 // pred_check_branch
        %164 = sbr.rel (%p162) target = $region16
      $region15: #{_lambda_.8} parent=11 // pred_region
        _
      $region16: #{_lambda_.8} parent=11 // pred_fallthru
        _
      // Predicated region
      $region17: #{_lambda_.8} parent=11 // pred_check
        %p165 = pneg %p79
      $region18: #{_lambda_.8} parent=11 // pred_check_branch
        %167 = sbr.rel (%p165) target = $region20
      $region19: #{_lambda_.8} parent=11 // pred_region
        _
      $region20: #{_lambda_.8} parent=11 // pred_fallthru
        _
      // Predicated region
      $region21: #{_lambda_.8} parent=11 // pred_check
        %p168 = pneg %p100
      $region22: #{_lambda_.8} parent=11 // pred_check_branch
        %170 = sbr.rel (%p168) target = $region24
      $region23: #{_lambda_.8} parent=11 // pred_region
        _
      $region24: #{_lambda_.8} parent=11 // pred_fallthru
        _
      // Predicated region
      $region25: #{_lambda_.8} parent=11 // pred_check
        %p171 = pneg %p121
      $region26: #{_lambda_.8} parent=11 // pred_check_branch
        %173 = sbr.rel (%p171) target = $region28
      $region27: #{_lambda_.8} parent=11 // pred_region
        _
      $region28: #{_lambda_.8} parent=11 // pred_fallthru
        _
    $region12: #{_lambda_.8} parent=5 // pred_fallthru
      _
    %p174 = scmp.lt.s32.totalorder %s11, 2
    // Predicated region
    $region29: #{_lambda_.8} parent=5 // pred_check
      %p175 = pneg %p174
    $region30: #{_lambda_.8} parent=5 // pred_check_branch
      %177 = sbr.rel (%p175) target = $region32
    $region31: #{_lambda_.8} parent=5 // pred_region
      // Predicated region
      $region33: #{_lambda_.8} parent=31 // pred_check
        %p178 = pneg %p31
      $region34: #{_lambda_.8} parent=31 // pred_check_branch
        %180 = sbr.rel (%p178) target = $region36
      $region35: #{_lambda_.8} parent=31 // pred_region
        %s181 = smul.u32 8, %s11
        %p182 = scmp.lt.s32.totalorder %s181, 15
        %s183 = scalar_select %p182, %s181, 15
        %s184 = smul.addr %s183, 8
        %s185 = scalar_lea.vmem %s0, %s184
        %s186 = smul.u32 8, %s11
      $region36: #{_lambda_.8} parent=31 // pred_fallthru
        _
    $region32: #{_lambda_.8} parent=5 // pred_fallthru
      _
    %p187 = scmp.le.s32.totalorder 1, %s11
    %p188 = scmp.lt.s32.totalorder %s11, 3
    %p189 = pnand %p187, %p188
    %p190 = pneg %p189
    // Predicated region
    $region37: #{_lambda_.8} parent=5 // pred_check
      _
    $region38: #{_lambda_.8} parent=5 // pred_check_branch
      %192 = sbr.rel (%p189) target = $region40
    $region39: #{_lambda_.8} parent=5 // pred_region
      %s193 = ssub.s32 %s11, 1
      %s194 = smul.u32 8, %s16
      %p195 = scmp.lt.s32.totalorder %s194, 15
      %s196 = scalar_select %p195, %s194, 15
      %s197 = smul.addr %s196, 8
      %s198 = scalar_lea.vmem %s0, %s197
      %p199 = pneg %p37
      %p200 = pneg %p34
      %p201 = pneg %p58
      %p202 = pneg %p55
      %p203 = pneg %p79
      %p204 = pneg %p76
      %p205 = pneg %p100
      %p206 = pneg %p97
      %p207 = pneg %p121
      %p208 = pneg %p118
      %p209 = pneg %p147
      %p210 = pneg %p144
      %s211 = smul.u32 8, %s16
      %p212 = scmp.lt.s32.totalorder %s211, 15
      %s213 = scalar_select %p212, %s211, 15
      %s214 = smul.addr %s213, 4
      %s215 = scalar_lea.vmem %s5, %s214
      %s216 = smul.u32 8, %s16
      %p217 = scmp.lt.s32.totalorder %s216, 15
      %s218 = scalar_select %p217, %s216, 15
      %s219 = smul.addr %s218, 8
      %s220 = scalar_lea.vmem %s0, %s219
      %s221 = smul.u32 8, %s16
      %s222 = smul.u32 8, %s16
      %p223 = scmp.lt.s32.totalorder %s222, 15
      %s224 = scalar_select %p223, %s222, 15
      %s225 = smul.addr %s224, 4
      %s226 = scalar_lea.vmem %s5, %s225
      %s227 = smul.u32 8, %s16
      %v229 = vld [vmem:[%s220] sm:$0xff]
      %v230 = vld [vmem:[%s220 + $0x8] sm:$0xff]
      %v231 = vld [vmem:[%s220 + $0x10] sm:$0xff]
      %v232 = vld [vmem:[%s220 + $0x18] sm:$0xff]
      %v233 = vld [vmem:[%s220 + $0x20] sm:$0xff]
      %v234 = vld [vmem:[%s220 + $0x28] sm:$0xff]
      %v235 = vld [vmem:[%s220 + $0x30] sm:$0xff]
      %v236 = vld [vmem:[%s220 + $0x38] sm:$0xff]
      %v237 = vld [vmem:[%s1] sm:$0x1]
      %v238 = vld [vmem:[%s2] sm:$0x1]
      %vm239 = vcmask 130048
      %v240 = vsel %vm239, %v229, 0.0
      %241 = vadd.xlane.f32.xlu0 %v240
      %v242 = vpop.xlane.xlu0 %241
      %v243 = vsel %vm239, %v230, 0.0
      %244 = vadd.xlane.f32.xlu0 %v243
      %v245 = vpop.xlane.xlu0 %244
      %v246 = vsel %vm239, %v231, 0.0
      %247 = vadd.xlane.f32.xlu0 %v246
      %v248 = vpop.xlane.xlu0 %247
      %v249 = vsel %vm239, %v232, 0.0
      %250 = vadd.xlane.f32.xlu0 %v249
      %v251 = vpop.xlane.xlu0 %250
      %v252 = vsel %vm239, %v233, 0.0
      %253 = vadd.xlane.f32.xlu0 %v252
      %v254 = vpop.xlane.xlu0 %253
      %v255 = vsel %vm239, %v234, 0.0
      %256 = vadd.xlane.f32.xlu0 %v255
      %v257 = vpop.xlane.xlu0 %256
      %v258 = vsel %vm239, %v235, 0.0
      %259 = vadd.xlane.f32.xlu0 %v258
      %v260 = vpop.xlane.xlu0 %259
      %v261 = vsel %vm239, %v236, 0.0
      %262 = vadd.xlane.f32.xlu0 %v261
      %v263 = vpop.xlane.xlu0 %262
      %v264 = vrcp.pop 16.0
      %v265 = vmul.f32 %v242, %v264
      %v266 = vmul.f32 %v245, %v264
      %v267 = vmul.f32 %v248, %v264
      %v268 = vmul.f32 %v251, %v264
      %v269 = vmul.f32 %v254, %v264
      %v270 = vmul.f32 %v257, %v264
      %v271 = vmul.f32 %v260, %v264
      %v272 = vmul.f32 %v263, %v264
      %v273 = vsub.f32 %v229, %v265
      %v274 = vsub.f32 %v230, %v266
      %v275 = vsub.f32 %v231, %v267
      %v276 = vsub.f32 %v232, %v268
      %v277 = vsub.f32 %v233, %v269
      %v278 = vsub.f32 %v234, %v270
      %v279 = vsub.f32 %v235, %v271
      %v280 = vsub.f32 %v236, %v272
      %v281 = vmul.f32 %v273, %v273
      %v282 = vmul.f32 %v274, %v274
      %v283 = vmul.f32 %v275, %v275
      %v284 = vmul.f32 %v276, %v276
      %v285 = vmul.f32 %v277, %v277
      %v286 = vmul.f32 %v278, %v278
      %v287 = vmul.f32 %v279, %v279
      %v288 = vmul.f32 %v280, %v280
      %v289 = vsel %vm239, %v281, 0.0
      %290 = vadd.xlane.f32.xlu0 %v289
      %v291 = vpop.xlane.xlu0 %290
      %v292 = vsel %vm239, %v282, 0.0
      %293 = vadd.xlane.f32.xlu0 %v292
      %v294 = vpop.xlane.xlu0 %293
      %v295 = vsel %vm239, %v283, 0.0
      %296 = vadd.xlane.f32.xlu0 %v295
      %v297 = vpop.xlane.xlu0 %296
      %v298 = vsel %vm239, %v284, 0.0
      %299 = vadd.xlane.f32.xlu0 %v298
      %v300 = vpop.xlane.xlu0 %299
      %v301 = vsel %vm239, %v285, 0.0
      %302 = vadd.xlane.f32.xlu0 %v301
      %v303 = vpop.xlane.xlu0 %302
      %v304 = vsel %vm239, %v286, 0.0
      %305 = vadd.xlane.f32.xlu0 %v304
      %v306 = vpop.xlane.xlu0 %305
      %v307 = vsel %vm239, %v287, 0.0
      %308 = vadd.xlane.f32.xlu0 %v307
      %v309 = vpop.xlane.xlu0 %308
      %v310 = vsel %vm239, %v288, 0.0
      %311 = vadd.xlane.f32.xlu0 %v310
      %v312 = vpop.xlane.xlu0 %311
      %v313 = vmul.f32 %v291, %v264
      %v314 = vmul.f32 %v294, %v264
      %v315 = vmul.f32 %v297, %v264
      %v316 = vmul.f32 %v300, %v264
      %v317 = vmul.f32 %v303, %v264
      %v318 = vmul.f32 %v306, %v264
      %v319 = vmul.f32 %v309, %v264
      %v320 = vmul.f32 %v312, %v264
      %v321 = vadd.f32 %v313, 1e-05
      %v322 = vadd.f32 %v314, 1e-05
      %v323 = vadd.f32 %v315, 1e-05
      %v324 = vadd.f32 %v316, 1e-05
      %v325 = vadd.f32 %v317, 1e-05
      %v326 = vadd.f32 %v318, 1e-05
      %v327 = vadd.f32 %v319, 1e-05
      %v328 = vadd.f32 %v320, 1e-05
      %v329 = vrsqrt.pop %v321
      %v330 = vrsqrt.pop %v322
      %v331 = vrsqrt.pop %v323
      %v332 = vrsqrt.pop %v324
      %v333 = vrsqrt.pop %v325
      %v334 = vrsqrt.pop %v326
      %v335 = vrsqrt.pop %v327
      %v336 = vrsqrt.pop %v328
      %v337 = vmul.f32 %v273, %v329
      %v338 = vmul.f32 %v274, %v330
      %v339 = vmul.f32 %v275, %v331
      %v340 = vmul.f32 %v276, %v332
      %v341 = vmul.f32 %v277, %v333
      %v342 = vmul.f32 %v278, %v334
      %v343 = vmul.f32 %v279, %v335
      %v344 = vmul.f32 %v280, %v336
      %v346 = vlaneseq
      %v347 = vshrl.u32 %v346, 7
      %v348 = vsub.s32 0, %v347
      %v349 = vrot.slane %v237, %v348
      %v351 = vmul.f32 %v337, %v349
      %v352 = vmul.f32 %v338, %v349
      %v353 = vmul.f32 %v339, %v349
      %v354 = vmul.f32 %v340, %v349
      %v355 = vmul.f32 %v341, %v349
      %v356 = vmul.f32 %v342, %v349
      %v357 = vmul.f32 %v343, %v349
      %v358 = vmul.f32 %v344, %v349
      %v360 = vlaneseq
      %v361 = vshrl.u32 %v360, 7
      %v362 = vsub.s32 0, %v361
      %v363 = vrot.slane %v238, %v362
      %v365 = vadd.f32 %v351, %v363
      %v366 = vadd.f32 %v352, %v363
      %v367 = vadd.f32 %v353, %v363
      %v368 = vadd.f32 %v354, %v363
      %v369 = vadd.f32 %v355, %v363
      %v370 = vadd.f32 %v356, %v363
      %v371 = vadd.f32 %v357, %v363
      %v372 = vadd.f32 %v358, %v363
      %v373 = vpack.c.bf16 %v366, %v365
      %v374 = vpack.c.bf16 %v368, %v367
      %v375 = vpack.c.bf16 %v370, %v369
      %v376 = vpack.c.bf16 %v372, %v371
      %v377 = vld [vmem:[%s3] sm:$0xf]
      %v378 = vld [vmem:[%s3 + $0x4] sm:$0xf]
      %v379 = vld [vmem:[%s4] sm:$0x1]
      %v381 = vlaneseq
      %v382 = vshrl.u32 %v381, 7
      %v383 = vsub.s32 0, %v382
      %v384 = vrot.slane %v379, %v383
      %v388 = vunpack.c.l.b16 %v377
      %v389 = vunpack.c.l.b16 %v378
      %v390 = vpack.c.b16 %v389, %v388
      %v393 = vsel %vm239, %v373, 0
      %v396 = vsel %vm239, %v374, 0
      %v399 = vsel %vm239, %v375, 0
      %v402 = vsel %vm239, %v376, 0
      %404 = vmatprep.subr.bf16.mxu0 0
      %405 = vmatpush1.bf16.msra.mxu0 %v390
      %406 = vmatprep.subr.bf16.mxu0 0
      %407 = vmatpush1.bf16.msra.mxu0 0
      %408 = vmatprep.subr.bf16.mxu0 0
      %409 = vmatpush1.bf16.msra.mxu0 0
      %410 = vmatprep.subr.bf16.mxu0 0
      %411 = vmatpush1.bf16.msra.mxu0 0
      %412 = vmatprep.subr.bf16.mxu0 0
      %413 = vmatpush1.bf16.msra.mxu0 0
      %414 = vmatprep.subr.bf16.mxu0 0
      %415 = vmatpush1.bf16.msra.mxu0 0
      %416 = vmatprep.subr.bf16.mxu0 0
      %417 = vmatpush1.bf16.msra.mxu0 0
      %418 = vmatprep.subr.bf16.mxu0 0
      %419 = vmatpush1.bf16.msra.mxu0 0
      %420 = vmatprep.subr.bf16.mxu0 0
      %421 = vmatpush1.bf16.msra.mxu0 0
      %422 = vmatprep.subr.bf16.mxu0 0
      %423 = vmatpush1.bf16.msra.mxu0 0
      %424 = vmatprep.subr.bf16.mxu0 0
      %425 = vmatpush1.bf16.msra.mxu0 0
      %426 = vmatprep.subr.bf16.mxu0 0
      %427 = vmatpush1.bf16.msra.mxu0 0
      %428 = vmatprep.subr.bf16.mxu0 0
      %429 = vmatpush1.bf16.msra.mxu0 0
      %430 = vmatprep.subr.bf16.mxu0 0
      %431 = vmatpush1.bf16.msra.mxu0 0
      %432 = vmatprep.subr.bf16.mxu0 0
      %433 = vmatpush1.bf16.msra.mxu0 0
      %434 = vmatprep.subr.bf16.mxu0 0
      %435 = vmatpush1.bf16.msra.mxu0 0
      %436 = vmatprep.mubr.bf16.mxu0 0
      %437 = vmatmul.mubr.bf16.gmra.mrb[0].mxu0 %v393
      %v438 = vpop.f32.mrb[0].mxu0
      %v439 = vadd.f32 %v384, %v438
      %v440 = vpop.f32.mrb[0].mxu0
      %v441 = vpop.f32.mrb[0].mxu0
      %v442 = vadd.f32 %v384, %v441
      %v443 = vpop.f32.mrb[0].mxu0
      %444 = vmatprep.mubr.bf16.mxu0 0
      %445 = vmatmul.mubr.bf16.gmra.mrb[0].mxu0 %v396
      %v446 = vpop.f32.mrb[0].mxu0
      %v447 = vadd.f32 %v384, %v446
      %v448 = vpop.f32.mrb[0].mxu0
      %v449 = vpop.f32.mrb[0].mxu0
      %v450 = vadd.f32 %v384, %v449
      %v451 = vpop.f32.mrb[0].mxu0
      %452 = vmatprep.mubr.bf16.mxu0 0
      %453 = vmatmul.mubr.bf16.gmra.mrb[0].mxu0 %v399
      %v454 = vpop.f32.mrb[0].mxu0
      %v455 = vadd.f32 %v384, %v454
      %v456 = vpop.f32.mrb[0].mxu0
      %v457 = vpop.f32.mrb[0].mxu0
      %v458 = vadd.f32 %v384, %v457
      %v459 = vpop.f32.mrb[0].mxu0
      %460 = vmatprep.mubr.bf16.mxu0 0
      %461 = vmatmul.mubr.bf16.gmra.mrb[0].mxu0 %v402
      %v462 = vpop.f32.mrb[0].mxu0
      %v463 = vadd.f32 %v384, %v462
      %v464 = vpop.f32.mrb[0].mxu0
      %v465 = vpop.f32.mrb[0].mxu0
      %v466 = vadd.f32 %v384, %v465
      %v467 = vpop.f32.mrb[0].mxu0
      %468 = vdwg.mxu0
      %v469 = vmul.f32 %v439, 0.5
      %v470 = vmul.f32 %v442, 0.5
      %v471 = vmul.f32 %v447, 0.5
      %v472 = vmul.f32 %v450, 0.5
      %v473 = vmul.f32 %v455, 0.5
      %v474 = vmul.f32 %v458, 0.5
      %v475 = vmul.f32 %v463, 0.5
      %v476 = vmul.f32 %v466, 0.5
      %v477 = vmul.f32 %v439, 0.70710677
      %v478 = vmul.f32 %v442, 0.70710677
      %v479 = vmul.f32 %v447, 0.70710677
      %v480 = vmul.f32 %v450, 0.70710677
      %v481 = vmul.f32 %v455, 0.70710677
      %v482 = vmul.f32 %v458, 0.70710677
      %v483 = vmul.f32 %v463, 0.70710677
      %v484 = vmul.f32 %v466, 0.70710677
      %v485 = vand.u32 2147483647, %v477
      %v486 = vand.u32 2147483647, %v478
      %v487 = vand.u32 2147483647, %v479
      %v488 = vand.u32 2147483647, %v480
      %v489 = vand.u32 2147483647, %v481
      %v490 = vand.u32 2147483647, %v482
      %v491 = vand.u32 2147483647, %v483
      %v492 = vand.u32 2147483647, %v484
      %v493 = vmul.f32 %v485, 0.3275911
      %v494 = vmul.f32 %v486, 0.3275911
      %v495 = vmul.f32 %v487, 0.3275911
      %v496 = vmul.f32 %v488, 0.3275911
      %v497 = vmul.f32 %v489, 0.3275911
      %v498 = vmul.f32 %v490, 0.3275911
      %v499 = vmul.f32 %v491, 0.3275911
      %v500 = vmul.f32 %v492, 0.3275911
      %v501 = vadd.f32 %v493, 1.0
      %v502 = vadd.f32 %v494, 1.0
      %v503 = vadd.f32 %v495, 1.0
      %v504 = vadd.f32 %v496, 1.0
      %v505 = vadd.f32 %v497, 1.0
      %v506 = vadd.f32 %v498, 1.0
      %v507 = vadd.f32 %v499, 1.0
      %v508 = vadd.f32 %v500, 1.0
      %v509 = vrcp.pop %v501
      %v510 = vmul.f32 1.0, %v509
      %v511 = vrcp.pop %v502
      %v512 = vmul.f32 1.0, %v511
      %v513 = vrcp.pop %v503
      %v514 = vmul.f32 1.0, %v513
      %v515 = vrcp.pop %v504
      %v516 = vmul.f32 1.0, %v515
      %v517 = vrcp.pop %v505
      %v518 = vmul.f32 1.0, %v517
      %v519 = vrcp.pop %v506
      %v520 = vmul.f32 1.0, %v519
      %v521 = vrcp.pop %v507
      %v522 = vmul.f32 1.0, %v521
      %v523 = vrcp.pop %v508
      %v524 = vmul.f32 1.0, %v523
      %v525 = vmul.f32 %v510, 1.0614054
      %v526 = vmul.f32 %v512, 1.0614054
      %v527 = vmul.f32 %v514, 1.0614054
      %v528 = vmul.f32 %v516, 1.0614054
      %v529 = vmul.f32 %v518, 1.0614054
      %v530 = vmul.f32 %v520, 1.0614054
      %v531 = vmul.f32 %v522, 1.0614054
      %v532 = vmul.f32 %v524, 1.0614054
      %v533 = vadd.f32 %v525, -1.4531521
      %v534 = vadd.f32 %v526, -1.4531521
      %v535 = vadd.f32 %v527, -1.4531521
      %v536 = vadd.f32 %v528, -1.4531521
      %v537 = vadd.f32 %v529, -1.4531521
      %v538 = vadd.f32 %v530, -1.4531521
      %v539 = vadd.f32 %v531, -1.4531521
      %v540 = vadd.f32 %v532, -1.4531521
      %v541 = vmul.f32 %v533, %v510
      %v542 = vmul.f32 %v534, %v512
      %v543 = vmul.f32 %v535, %v514
      %v544 = vmul.f32 %v536, %v516
      %v545 = vmul.f32 %v537, %v518
      %v546 = vmul.f32 %v538, %v520
      %v547 = vmul.f32 %v539, %v522
      %v548 = vmul.f32 %v540, %v524
      %v549 = vadd.f32 %v541, 1.4214138
      %v550 = vadd.f32 %v542, 1.4214138
      %v551 = vadd.f32 %v543, 1.4214138
      %v552 = vadd.f32 %v544, 1.4214138
      %v553 = vadd.f32 %v545, 1.4214138
      %v554 = vadd.f32 %v546, 1.4214138
      %v555 = vadd.f32 %v547, 1.4214138
      %v556 = vadd.f32 %v548, 1.4214138
      %v557 = vmul.f32 %v549, %v510
      %v558 = vmul.f32 %v550, %v512
      %v559 = vmul.f32 %v551, %v514
      %v560 = vmul.f32 %v552, %v516
      %v561 = vmul.f32 %v553, %v518
      %v562 = vmul.f32 %v554, %v520
      %v563 = vmul.f32 %v555, %v522
      %v564 = vmul.f32 %v556, %v524
      %v565 = vadd.f32 %v557, -0.28449672
      %v566 = vadd.f32 %v558, -0.28449672
      %v567 = vadd.f32 %v559, -0.28449672
      %v568 = vadd.f32 %v560, -0.28449672
      %v569 = vadd.f32 %v561, -0.28449672
      %v570 = vadd.f32 %v562, -0.28449672
      %v571 = vadd.f32 %v563, -0.28449672
      %v572 = vadd.f32 %v564, -0.28449672
      %v573 = vmul.f32 %v565, %v510
      %v574 = vmul.f32 %v566, %v512
      %v575 = vmul.f32 %v567, %v514
      %v576 = vmul.f32 %v568, %v516
      %v577 = vmul.f32 %v569, %v518
      %v578 = vmul.f32 %v570, %v520
      %v579 = vmul.f32 %v571, %v522
      %v580 = vmul.f32 %v572, %v524
      %v581 = vadd.f32 %v573, 0.2548296
      %v582 = vadd.f32 %v574, 0.2548296
      %v583 = vadd.f32 %v575, 0.2548296
      %v584 = vadd.f32 %v576, 0.2548296
      %v585 = vadd.f32 %v577, 0.2548296
      %v586 = vadd.f32 %v578, 0.2548296
      %v587 = vadd.f32 %v579, 0.2548296
      %v588 = vadd.f32 %v580, 0.2548296
      %v589 = vmul.f32 %v581, %v510
      %v590 = vmul.f32 %v582, %v512
      %v591 = vmul.f32 %v583, %v514
      %v592 = vmul.f32 %v584, %v516
      %v593 = vmul.f32 %v585, %v518
      %v594 = vmul.f32 %v586, %v520
      %v595 = vmul.f32 %v587, %v522
      %v596 = vmul.f32 %v588, %v524
      %v597 = vsub.f32 0.0, %v485
      %v598 = vsub.f32 0.0, %v486
      %v599 = vsub.f32 0.0, %v487
      %v600 = vsub.f32 0.0, %v488
      %v601 = vsub.f32 0.0, %v489
      %v602 = vsub.f32 0.0, %v490
      %v603 = vsub.f32 0.0, %v491
      %v604 = vsub.f32 0.0, %v492
      %v605 = vmul.f32 %v597, %v485
      %v606 = vmul.f32 %v598, %v486
      %v607 = vmul.f32 %v599, %v487
      %v608 = vmul.f32 %v600, %v488
      %v609 = vmul.f32 %v601, %v489
      %v610 = vmul.f32 %v602, %v490
      %v611 = vmul.f32 %v603, %v491
      %v612 = vmul.f32 %v604, %v492
      %v613 = vmul.f32 %v605, 1.442695
      %v614 = vpow.pop %v613
      %v615 = vmul.f32 %v606, 1.442695
      %v616 = vpow.pop %v615
      %v617 = vmul.f32 %v607, 1.442695
      %v618 = vpow.pop %v617
      %v619 = vmul.f32 %v608, 1.442695
      %v620 = vpow.pop %v619
      %v621 = vmul.f32 %v609, 1.442695
      %v622 = vpow.pop %v621
      %v623 = vmul.f32 %v610, 1.442695
      %v624 = vpow.pop %v623
      %v625 = vmul.f32 %v611, 1.442695
      %v626 = vpow.pop %v625
      %v627 = vmul.f32 %v612, 1.442695
      %v628 = vpow.pop %v627
      %v629 = vmul.f32 %v589, %v614
      %v630 = vmul.f32 %v590, %v616
      %v631 = vmul.f32 %v591, %v618
      %v632 = vmul.f32 %v592, %v620
      %v633 = vmul.f32 %v593, %v622
      %v634 = vmul.f32 %v594, %v624
      %v635 = vmul.f32 %v595, %v626
      %v636 = vmul.f32 %v596, %v628
      %v637 = vsub.f32 1.0, %v629
      %v638 = vsub.f32 1.0, %v630
      %v639 = vsub.f32 1.0, %v631
      %v640 = vsub.f32 1.0, %v632
      %v641 = vsub.f32 1.0, %v633
      %v642 = vsub.f32 1.0, %v634
      %v643 = vsub.f32 1.0, %v635
      %v644 = vsub.f32 1.0, %v636
      %vm645 = vcmp.lt.f32.partialorder %v477, 0.0
      %vm646 = vcmp.lt.f32.partialorder %v478, 0.0
      %vm647 = vcmp.lt.f32.partialorder %v479, 0.0
      %vm648 = vcmp.lt.f32.partialorder %v480, 0.0
      %vm649 = vcmp.lt.f32.partialorder %v481, 0.0
      %vm650 = vcmp.lt.f32.partialorder %v482, 0.0
      %vm651 = vcmp.lt.f32.partialorder %v483, 0.0
      %vm652 = vcmp.lt.f32.partialorder %v484, 0.0
      %v653 = vsub.f32 0.0, %v637
      %v654 = vsub.f32 0.0, %v638
      %v655 = vsub.f32 0.0, %v639
      %v656 = vsub.f32 0.0, %v640
      %v657 = vsub.f32 0.0, %v641
      %v658 = vsub.f32 0.0, %v642
      %v659 = vsub.f32 0.0, %v643
      %v660 = vsub.f32 0.0, %v644
      %v661 = vsel %vm645, %v653, %v637
      %v662 = vsel %vm646, %v654, %v638
      %v663 = vsel %vm647, %v655, %v639
      %v664 = vsel %vm648, %v656, %v640
      %v665 = vsel %vm649, %v657, %v641
      %v666 = vsel %vm650, %v658, %v642
      %v667 = vsel %vm651, %v659, %v643
      %v668 = vsel %vm652, %v660, %v644
      %v669 = vadd.f32 %v661, 1.0
      %v670 = vadd.f32 %v662, 1.0
      %v671 = vadd.f32 %v663, 1.0
      %v672 = vadd.f32 %v664, 1.0
      %v673 = vadd.f32 %v665, 1.0
      %v674 = vadd.f32 %v666, 1.0
      %v675 = vadd.f32 %v667, 1.0
      %v676 = vadd.f32 %v668, 1.0
      %v677 = vmul.f32 %v469, %v669
      %v678 = vmul.f32 %v470, %v670
      %v679 = vmul.f32 %v471, %v671
      %v680 = vmul.f32 %v472, %v672
      %v681 = vmul.f32 %v473, %v673
      %v682 = vmul.f32 %v474, %v674
      %v683 = vmul.f32 %v475, %v675
      %v684 = vmul.f32 %v476, %v676
      %v685 = vpack.c.bf16 %v678, %v677
      %v686 = vpack.c.bf16 %v680, %v679
      %v687 = vpack.c.bf16 %v682, %v681
      %v688 = vpack.c.bf16 %v684, %v683
      %v693 = vunpack.c.l.b16 %v685
      %v694 = vunpack.c.h.b16 %v685
      %v695 = vunpack.c.l.b16 %v686
      %v696 = vunpack.c.h.b16 %v686
      %v697 = vunpack.c.l.b16 %v687
      %v698 = vunpack.c.h.b16 %v687
      %v699 = vunpack.c.l.b16 %v688
      %v700 = vunpack.c.h.b16 %v688
      %v701 = vpack.c.b16 %v693, %v693
      %v702 = vpack.c.b16 %v694, %v694
      %v703 = vpack.c.b16 %v695, %v695
      %v704 = vpack.c.b16 %v696, %v696
      %v705 = vpack.c.b16 %v697, %v697
      %v706 = vpack.c.b16 %v698, %v698
      %v707 = vpack.c.b16 %v699, %v699
      %v708 = vpack.c.b16 %v700, %v700
      %vm717 = vcmask 519168
      %718 = vst.msk [vmem:[%s226] sm:$0xf] %vm717, %v701
      %719 = vst.msk [vmem:[%s226 + $0x4] sm:$0xf] %vm717, %v702
      %720 = vst.msk [vmem:[%s226 + $0x8] sm:$0xf] %vm717, %v703
      %721 = vst.msk [vmem:[%s226 + $0xc] sm:$0xf] %vm717, %v704
      %722 = vst.msk [vmem:[%s226 + $0x10] sm:$0xf] %vm717, %v705
      %723 = vst.msk [vmem:[%s226 + $0x14] sm:$0xf] %vm717, %v706
      %724 = vst.msk [vmem:[%s226 + $0x18] sm:$0xf] %vm717, %v707
      %725 = vst.msk [vmem:[%s226 + $0x1c] sm:$0xf] %vm717, %v708
      %s726 = smul.u32 8, %s16
      %p727 = scmp.lt.s32.totalorder %s726, 15
      %s728 = scalar_select %p727, %s726, 15
      %s729 = smul.addr %s728, 4
      %s730 = scalar_lea.vmem %s5, %s729
      // Predicated region
      $region41: #{_lambda_.8} parent=39 // pred_check
        %p731 = pneg %p144
      $region42: #{_lambda_.8} parent=39 // pred_check_branch
        %733 = sbr.rel (%p731) target = $region44
      $region43: #{_lambda_.8} parent=39 // pred_region
        %s734 = smul.u32 8, %s16
      $region44: #{_lambda_.8} parent=39 // pred_fallthru
        _
    $region40: #{_lambda_.8} parent=5 // pred_fallthru
      _
    %p735 = scmp.le.s32.totalorder 2, %s11
    // Predicated region
    $region45: #{_lambda_.8} parent=5 // pred_check
      %p736 = pneg %p735
    $region46: #{_lambda_.8} parent=5 // pred_check_branch
      %738 = sbr.rel (%p736) target = $region48
    $region47: #{_lambda_.8} parent=5 // pred_region
      %s739 = ssub.s32 %s11, 2
      // Predicated region
      $region49: #{_lambda_.8} parent=47 // pred_check
        %p740 = pneg %p150
      $region50: #{_lambda_.8} parent=47 // pred_check_branch
        %742 = sbr.rel (%p740) target = $region52
      $region51: #{_lambda_.8} parent=47 // pred_region
        %s743 = smul.u32 8, %s17
        %p744 = scmp.lt.s32.totalorder %s743, 15
        %s745 = scalar_select %p744, %s743, 15
        %s746 = smul.addr %s745, 4
        %s747 = scalar_lea.vmem %s5, %s746
      $region52: #{_lambda_.8} parent=47 // pred_fallthru
        _
    $region48: #{_lambda_.8} parent=5 // pred_fallthru
      _
  $region6: #{_lambda_.8} parent=0 // loop_footer
    %s15 = sadd.s32 1, %s11
  $region7: #{_lambda_.8} parent=0 // loop_footer_branch
    %10 = sbr.rel target = $region3
  $region8: #{_lambda_.8} parent=0 // loop_exit
    _

// kernel: _lambda_.9
$region0: #{_lambda_.9}
  #allocation0 [shape = 'u32[]', space=smem, size = 0x4, offset = 0x4, fixed_abs, tag = 'smem constant byte address 0x4 - core index']
  #allocation1 [shape = 'u32[144,128]{1,0:T(1,128)}', space=vmem, size = 0x12000, scoped, tag = 'internal scratch']
  %s0 = inlined_call_operand.vmem [shape: bf16[128,64], index: 0, kind: input, shape index: {}]
  %s1 = inlined_call_operand.vmem [shape: bf16[64,16], index: 1, kind: input, shape index: {}]
  %s2 = inlined_call_operand.vmem [shape: f32[1,16], index: 2, kind: input, shape index: {}]
  %s3 = inlined_call_operand.vmem [shape: f32[1,16], index: 3, kind: input, shape index: {}]
  %s4 = inlined_call_operand.vmem [shape: f32[128,16], index: 4, kind: input, shape index: {}]
  %s5 = inlined_call_operand.hbm [shape: f32[128,16], index: 5, kind: output, shape index: {}]
  %s6 = sld [smem:[#allocation0]]
  $region53: #{_lambda_.9} parent=0
    _
  %s8 = ssub.s32 1, %s6
  %s9 = scalar_select 0, %s8, %s6
  $region1: #{_lambda_.9} parent=0
    #allocation2 [shape = 'u8[65536]{0}', space=vmem, size = 0x10000, scoped, tag = 'output window, operand 0']
    #allocation3 [shape = 's32[2]{0}', space=sflag, size = 0x8, scoped, tag = 'scoped memory for _lambda_.9']
    %10 = vsyncpa [#allocation3], 0
    %s11 = scalar_lea.sflag [#allocation3], 1
    %12 = vsyncpa %s11, 0
    loop: start=0, step=1, limit=4
    $region2: #{_lambda_.9} parent=1 // loop_pre_header
      _
    $region3: #{_lambda_.9} parent=1 // loop_header
      %s14 = sphi 0, %s18
      %p15 = scmp.ge.s32.totalorder %s14, 4
      %s24 = sphi 0, %s26
      %s27 = sphi 0, %s24
      %s28 = sphi 0, %s27
      %s44 = sphi 0, %s28
      %s48 = sphi 0, %s48
      %s50 = sphi 0, %s48
      %s51 = sphi 0, %s50
      %s65 = sphi 0, %s51
      %s69 = sphi 0, %s69
      %s71 = sphi 0, %s69
      %s72 = sphi 0, %s71
      %s86 = sphi 0, %s72
      %s90 = sphi 0, %s90
      %s92 = sphi 0, %s90
      %s93 = sphi 0, %s92
      %s107 = sphi 0, %s93
      %s113 = sphi 0, %s115
      %s116 = sphi 0, %s113
      %s117 = sphi 0, %s116
      %s133 = sphi 0, %s117
      %s139 = sphi 0, %s141
      %s142 = sphi 0, %s139
      %s143 = sphi 0, %s142
      %s159 = sphi 0, %s143
    $region4: #{_lambda_.9} parent=1 // loop_header_branch
      %17 = sbr.rel (%p15) target = $region8
    $region5: #{_lambda_.9} parent=1 // loop_body
      %s19 = ssub.s32 %s14, 1
      %s20 = ssub.s32 %s14, 2
      %s21 = sadd.s32 %s14, 1
      %s22 = ssub.s32 %s14, %s21
      %p23 = scmp.eq.s32.totalorder %s22, 0
      %s25 = sadd.s32 %s24, 1
      %s26 = scalar_select %p23, %s24, %s25
      %p29 = pneg %p23
      %p30 = scmp.eq.s32.totalorder %s14, 1
      %p31 = por %p29, %p30
      %p32 = scmp.ne.s32.totalorder %s24, %s27
      %p33 = scmp.eq.s32.totalorder %s14, 0
      %p34 = por %p32, %p33
      %p35 = scmp.ne.s32.totalorder %s24, %s27
      %p36 = scmp.eq.s32.totalorder %s19, 1
      %p37 = por %p35, %p36
      %p38 = scmp.ne.s32.totalorder %s27, %s28
      %p39 = scmp.eq.s32.totalorder %s19, 0
      %p40 = por %p38, %p39
      %p41 = scmp.ne.s32.totalorder %s27, %s28
      %p42 = scmp.eq.s32.totalorder %s20, 1
      %p43 = por %p41, %p42
      %p45 = scmp.ne.s32.totalorder %s28, %s44
      %p46 = scmp.eq.s32.totalorder %s20, 0
      %p47 = por %p45, %p46
      %s49 = sadd.s32 %s48, 1
      %p52 = scmp.eq.s32.totalorder %s14, 1
      %p53 = scmp.ne.s32.totalorder %s48, %s50
      %p54 = scmp.eq.s32.totalorder %s14, 0
      %p55 = por %p53, %p54
      %p56 = scmp.ne.s32.totalorder %s48, %s50
      %p57 = scmp.eq.s32.totalorder %s19, 1
      %p58 = por %p56, %p57
      %p59 = scmp.ne.s32.totalorder %s50, %s51
      %p60 = scmp.eq.s32.totalorder %s19, 0
      %p61 = por %p59, %p60
      %p62 = scmp.ne.s32.totalorder %s50, %s51
      %p63 = scmp.eq.s32.totalorder %s20, 1
      %p64 = por %p62, %p63
      %p66 = scmp.ne.s32.totalorder %s51, %s65
      %p67 = scmp.eq.s32.totalorder %s20, 0
      %p68 = por %p66, %p67
      %s70 = sadd.s32 %s69, 1
      %p73 = scmp.eq.s32.totalorder %s14, 1
      %p74 = scmp.ne.s32.totalorder %s69, %s71
      %p75 = scmp.eq.s32.totalorder %s14, 0
      %p76 = por %p74, %p75
      %p77 = scmp.ne.s32.totalorder %s69, %s71
      %p78 = scmp.eq.s32.totalorder %s19, 1
      %p79 = por %p77, %p78
      %p80 = scmp.ne.s32.totalorder %s71, %s72
      %p81 = scmp.eq.s32.totalorder %s19, 0
      %p82 = por %p80, %p81
      %p83 = scmp.ne.s32.totalorder %s71, %s72
      %p84 = scmp.eq.s32.totalorder %s20, 1
      %p85 = por %p83, %p84
      %p87 = scmp.ne.s32.totalorder %s72, %s86
      %p88 = scmp.eq.s32.totalorder %s20, 0
      %p89 = por %p87, %p88
      %s91 = sadd.s32 %s90, 1
      %p94 = scmp.eq.s32.totalorder %s14, 1
      %p95 = scmp.ne.s32.totalorder %s90, %s92
      %p96 = scmp.eq.s32.totalorder %s14, 0
      %p97 = por %p95, %p96
      %p98 = scmp.ne.s32.totalorder %s90, %s92
      %p99 = scmp.eq.s32.totalorder %s19, 1
      %p100 = por %p98, %p99
      %p101 = scmp.ne.s32.totalorder %s92, %s93
      %p102 = scmp.eq.s32.totalorder %s19, 0
      %p103 = por %p101, %p102
      %p104 = scmp.ne.s32.totalorder %s92, %s93
      %p105 = scmp.eq.s32.totalorder %s20, 1
      %p106 = por %p104, %p105
      %p108 = scmp.ne.s32.totalorder %s93, %s107
      %p109 = scmp.eq.s32.totalorder %s20, 0
      %p110 = por %p108, %p109
      %s111 = ssub.s32 %s14, %s21
      %p112 = scmp.eq.s32.totalorder %s111, 0
      %s114 = sadd.s32 %s113, 1
      %s115 = scalar_select %p112, %s113, %s114
      %p118 = pneg %p112
      %p119 = scmp.eq.s32.totalorder %s14, 1
      %p120 = por %p118, %p119
      %p121 = scmp.ne.s32.totalorder %s113, %s116
      %p122 = scmp.eq.s32.totalorder %s14, 0
      %p123 = por %p121, %p122
      %p124 = scmp.ne.s32.totalorder %s113, %s116
      %p125 = scmp.eq.s32.totalorder %s19, 1
      %p126 = por %p124, %p125
      %p127 = scmp.ne.s32.totalorder %s116, %s117
      %p128 = scmp.eq.s32.totalorder %s19, 0
      %p129 = por %p127, %p128
      %p130 = scmp.ne.s32.totalorder %s116, %s117
      %p131 = scmp.eq.s32.totalorder %s20, 1
      %p132 = por %p130, %p131
      %p134 = scmp.ne.s32.totalorder %s117, %s133
      %p135 = scmp.eq.s32.totalorder %s20, 0
      %p136 = por %p134, %p135
      %s137 = ssub.s32 %s14, %s21
      %p138 = scmp.eq.s32.totalorder %s137, 0
      %s140 = sadd.s32 %s139, 1
      %s141 = scalar_select %p138, %s139, %s140
      %p144 = pneg %p138
      %p145 = scmp.eq.s32.totalorder %s14, 1
      %p146 = por %p144, %p145
      %p147 = scmp.ne.s32.totalorder %s139, %s142
      %p148 = scmp.eq.s32.totalorder %s14, 0
      %p149 = por %p147, %p148
      %p150 = scmp.ne.s32.totalorder %s139, %s142
      %p151 = scmp.eq.s32.totalorder %s19, 1
      %p152 = por %p150, %p151
      %p153 = scmp.ne.s32.totalorder %s142, %s143
      %p154 = scmp.eq.s32.totalorder %s19, 0
      %p155 = por %p153, %p154
      %p156 = scmp.ne.s32.totalorder %s142, %s143
      %p157 = scmp.eq.s32.totalorder %s20, 1
      %p158 = por %p156, %p157
      %p160 = scmp.ne.s32.totalorder %s143, %s159
      %p161 = scmp.eq.s32.totalorder %s20, 0
      %p162 = por %p160, %p161
      %p163 = scmp.le.s32.totalorder 1, %s14
      %p164 = scmp.lt.s32.totalorder %s14, 3
      %p165 = pnand %p163, %p164
      %p166 = pneg %p165
      // Predicated region
      $region9: #{_lambda_.9} parent=5 // pred_check
        _
      $region10: #{_lambda_.9} parent=5 // pred_check_branch
        %168 = sbr.rel (%p165) target = $region12
      $region11: #{_lambda_.9} parent=5 // pred_region
        %s169 = ssub.s32 %s14, 1
        // Predicated region
        $region13: #{_lambda_.9} parent=11 // pred_check
          %p170 = pneg %p61
        $region14: #{_lambda_.9} parent=11 // pred_check_branch
          %172 = sbr.rel (%p170) target = $region16
        $region15: #{_lambda_.9} parent=11 // pred_region
          _
        $region16: #{_lambda_.9} parent=11 // pred_fallthru
          _
        // Predicated region
        $region17: #{_lambda_.9} parent=11 // pred_check
          %p173 = pneg %p82
        $region18: #{_lambda_.9} parent=11 // pred_check_branch
          %175 = sbr.rel (%p173) target = $region20
        $region19: #{_lambda_.9} parent=11 // pred_region
          _
        $region20: #{_lambda_.9} parent=11 // pred_fallthru
          _
        // Predicated region
        $region21: #{_lambda_.9} parent=11 // pred_check
          %p176 = pneg %p103
        $region22: #{_lambda_.9} parent=11 // pred_check_branch
          %178 = sbr.rel (%p176) target = $region24
        $region23: #{_lambda_.9} parent=11 // pred_region
          _
        $region24: #{_lambda_.9} parent=11 // pred_fallthru
          _
      $region12: #{_lambda_.9} parent=5 // pred_fallthru
        _
      %p179 = scmp.lt.s32.totalorder %s14, 2
      // Predicated region
      $region25: #{_lambda_.9} parent=5 // pred_check
        %p180 = pneg %p179
      $region26: #{_lambda_.9} parent=5 // pred_check_branch
        %182 = sbr.rel (%p180) target = $region28
      $region27: #{_lambda_.9} parent=5 // pred_region
        // Predicated region
        $region29: #{_lambda_.9} parent=27 // pred_check
          %p183 = pneg %p34
        $region30: #{_lambda_.9} parent=27 // pred_check_branch
          %185 = sbr.rel (%p183) target = $region32
        $region31: #{_lambda_.9} parent=27 // pred_region
          %s186 = smul.u32 8, %s14
          %p187 = scmp.lt.s32.totalorder %s186, 15
          %s188 = scalar_select %p187, %s186, 15
          %s189 = smul.addr %s188, 4
          %s190 = scalar_lea.vmem %s0, %s189
          %s191 = smul.u32 8, %s14
        $region32: #{_lambda_.9} parent=27 // pred_fallthru
          _
        // Predicated region
        $region33: #{_lambda_.9} parent=27 // pred_check
          %p192 = pneg %p123
        $region34: #{_lambda_.9} parent=27 // pred_check_branch
          %194 = sbr.rel (%p192) target = $region36
        $region35: #{_lambda_.9} parent=27 // pred_region
          %s195 = smul.u32 8, %s14
          %p196 = scmp.lt.s32.totalorder %s195, 15
          %s197 = scalar_select %p196, %s195, 15
          %s198 = smul.addr %s197, 8
          %s199 = scalar_lea.vmem %s4, %s198
          %s200 = smul.u32 8, %s14
        $region36: #{_lambda_.9} parent=27 // pred_fallthru
          _
      $region28: #{_lambda_.9} parent=5 // pred_fallthru
        _
      %p201 = scmp.le.s32.totalorder 1, %s14
      %p202 = scmp.lt.s32.totalorder %s14, 3
      %p203 = pnand %p201, %p202
      %p204 = pneg %p203
      // Predicated region
      $region37: #{_lambda_.9} parent=5 // pred_check
        _
      $region38: #{_lambda_.9} parent=5 // pred_check_branch
        %206 = sbr.rel (%p203) target = $region40
      $region39: #{_lambda_.9} parent=5 // pred_region
        %s207 = ssub.s32 %s14, 1
        %s208 = smul.u32 8, %s19
        %p209 = scmp.lt.s32.totalorder %s208, 15
        %s210 = scalar_select %p209, %s208, 15
        %s211 = smul.addr %s210, 4
        %s212 = scalar_lea.vmem %s0, %s211
        %p213 = pneg %p40
        %p214 = pneg %p37
        %p215 = pneg %p61
        %p216 = pneg %p58
        %p217 = pneg %p82
        %p218 = pneg %p79
        %p219 = pneg %p103
        %p220 = pneg %p100
        %s221 = smul.u32 8, %s19
        %p222 = scmp.lt.s32.totalorder %s221, 15
        %s223 = scalar_select %p222, %s221, 15
        %s224 = smul.addr %s223, 8
        %s225 = scalar_lea.vmem %s4, %s224
        %p226 = pneg %p129
        %p227 = pneg %p126
        %p228 = pneg %p155
        %p229 = pneg %p152
        %s230 = sand.u32 %s142, 1
        %s231 = scalar_lea.sflag [#allocation3], %s230
        %s232 = sand.u32 %s142, 1
        %s233 = smul.addr %s232, 64
        %s234 = scalar_lea.vmem [#allocation2], %s233
        %s235 = smul.u32 8, %s19
        %p236 = scmp.lt.s32.totalorder %s235, 15
        %s237 = scalar_select %p236, %s235, 15
        %s238 = smul.addr %s237, 4
        %s239 = scalar_lea.vmem %s0, %s238
        %s240 = smul.u32 8, %s19
        %s241 = smul.u32 8, %s19
        %p242 = scmp.lt.s32.totalorder %s241, 15
        %s243 = scalar_select %p242, %s241, 15
        %s244 = smul.addr %s243, 8
        %s245 = scalar_lea.vmem %s4, %s244
        %s246 = smul.u32 8, %s19
        %s247 = smul.u32 8, %s19
        %v249 = vld [vmem:[%s239] sm:$0xf]
        %v250 = vld [vmem:[%s239 + $0x4] sm:$0xf]
        %v251 = vld [vmem:[%s239 + $0x8] sm:$0xf]
        %v252 = vld [vmem:[%s239 + $0xc] sm:$0xf]
        %v253 = vld [vmem:[%s239 + $0x10] sm:$0xf]
        %v254 = vld [vmem:[%s239 + $0x14] sm:$0xf]
        %v255 = vld [vmem:[%s239 + $0x18] sm:$0xf]
        %v256 = vld [vmem:[%s239 + $0x1c] sm:$0xf]
        %v257 = vld [vmem:[%s1] sm:$0xf]
        %v258 = vld [vmem:[%s1 + $0x4] sm:$0xf]
        %v259 = vld [vmem:[%s1 + $0x8] sm:$0xf]
        %v260 = vld [vmem:[%s1 + $0xc] sm:$0xf]
        %v261 = vld [vmem:[%s1 + $0x10] sm:$0xf]
        %v262 = vld [vmem:[%s1 + $0x14] sm:$0xf]
        %v263 = vld [vmem:[%s1 + $0x18] sm:$0xf]
        %v264 = vld [vmem:[%s1 + $0x1c] sm:$0xf]
        %v265 = vld [vmem:[%s2] sm:$0x1]
        %v267 = vlaneseq
        %v268 = vshrl.u32 %v267, 7
        %v269 = vsub.s32 0, %v268
        %v270 = vrot.slane %v265, %v269
        %v280 = vunpack.c.l.b16 %v249
        %v281 = vunpack.c.l.b16 %v250
        %v282 = vunpack.c.l.b16 %v251
        %v283 = vunpack.c.l.b16 %v252
        %v284 = vunpack.c.l.b16 %v253
        %v285 = vunpack.c.l.b16 %v254
        %v286 = vunpack.c.l.b16 %v255
        %v287 = vunpack.c.l.b16 %v256
        %v288 = vpack.c.b16 %v281, %v280
        %v289 = vpack.c.b16 %v283, %v282
        %v290 = vpack.c.b16 %v285, %v284
        %v291 = vpack.c.b16 %v287, %v286
        %v300 = vunpack.c.l.b16 %v257
        %v301 = vunpack.c.l.b16 %v258
        %v302 = vunpack.c.l.b16 %v259
        %v303 = vunpack.c.l.b16 %v260
        %v304 = vunpack.c.l.b16 %v261
        %v305 = vunpack.c.l.b16 %v262
        %v306 = vunpack.c.l.b16 %v263
        %v307 = vunpack.c.l.b16 %v264
        %v308 = vpack.c.b16 %v301, %v300
        %v309 = vpack.c.b16 %v303, %v302
        %v310 = vpack.c.b16 %v305, %v304
        %v311 = vpack.c.b16 %v307, %v306
        %vm316 = vcmask 523264
        %v318 = vsel %vm316, %v288, 0
        %v321 = vsel %vm316, %v289, 0
        %v324 = vsel %vm316, %v290, 0
        %v327 = vsel %vm316, %v291, 0
        %329 = vmatprep.subr.bf16.mxu0 0
        %330 = vmatpush1.bf16.msra.mxu0 %v308
        %331 = vmatprep.subr.bf16.mxu0 0
        %332 = vmatpush1.bf16.msra.mxu0 %v309
        %333 = vmatprep.subr.bf16.mxu0 0
        %334 = vmatpush1.bf16.msra.mxu0 %v310
        %335 = vmatprep.subr.bf16.mxu0 0
        %336 = vmatpush1.bf16.msra.mxu0 %v311
        %337 = vmatprep.subr.bf16.mxu0 0
        %338 = vmatpush1.bf16.msra.mxu0 0
        %339 = vmatprep.subr.bf16.mxu0 0
        %340 = vmatpush1.bf16.msra.mxu0 0
        %341 = vmatprep.subr.bf16.mxu0 0
        %342 = vmatpush1.bf16.msra.mxu0 0
        %343 = vmatprep.subr.bf16.mxu0 0
        %344 = vmatpush1.bf16.msra.mxu0 0
        %345 = vmatprep.subr.bf16.mxu0 0
        %346 = vmatpush1.bf16.msra.mxu0 0
        %347 = vmatprep.subr.bf16.mxu0 0
        %348 = vmatpush1.bf16.msra.mxu0 0
        %349 = vmatprep.subr.bf16.mxu0 0
        %350 = vmatpush1.bf16.msra.mxu0 0
        %351 = vmatprep.subr.bf16.mxu0 0
        %352 = vmatpush1.bf16.msra.mxu0 0
        %353 = vmatprep.subr.bf16.mxu0 0
        %354 = vmatpush1.bf16.msra.mxu0 0
        %355 = vmatprep.subr.bf16.mxu0 0
        %356 = vmatpush1.bf16.msra.mxu0 0
        %357 = vmatprep.subr.bf16.mxu0 0
        %358 = vmatpush1.bf16.msra.mxu0 0
        %359 = vmatprep.subr.bf16.mxu0 0
        %360 = vmatpush1.bf16.msra.mxu0 0
        %361 = vmatprep.mubr.bf16.mxu0 0
        %362 = vmatmul.mubr.bf16.gmra.mrb[0].mxu0 %v318
        %v363 = vpop.f32.mrb[0].mxu0
        %v364 = vadd.f32 %v270, %v363
        %v365 = vpop.f32.mrb[0].mxu0
        %v366 = vpop.f32.mrb[0].mxu0
        %v367 = vadd.f32 %v270, %v366
        %v368 = vpop.f32.mrb[0].mxu0
        %369 = vmatprep.mubr.bf16.mxu0 0
        %370 = vmatmul.mubr.bf16.gmra.mrb[0].mxu0 %v321
        %v371 = vpop.f32.mrb[0].mxu0
        %v372 = vadd.f32 %v270, %v371
        %v373 = vpop.f32.mrb[0].mxu0
        %v374 = vpop.f32.mrb[0].mxu0
        %v375 = vadd.f32 %v270, %v374
        %v376 = vpop.f32.mrb[0].mxu0
        %377 = vmatprep.mubr.bf16.mxu0 0
        %378 = vmatmul.mubr.bf16.gmra.mrb[0].mxu0 %v324
        %v379 = vpop.f32.mrb[0].mxu0
        %v380 = vadd.f32 %v270, %v379
        %v381 = vpop.f32.mrb[0].mxu0
        %v382 = vpop.f32.mrb[0].mxu0
        %v383 = vadd.f32 %v270, %v382
        %v384 = vpop.f32.mrb[0].mxu0
        %385 = vmatprep.mubr.bf16.mxu0 0
        %386 = vmatmul.mubr.bf16.gmra.mrb[0].mxu0 %v327
        %v387 = vpop.f32.mrb[0].mxu0
        %v388 = vadd.f32 %v270, %v387
        %v389 = vpop.f32.mrb[0].mxu0
        %v390 = vpop.f32.mrb[0].mxu0
        %v391 = vadd.f32 %v270, %v390
        %v392 = vpop.f32.mrb[0].mxu0
        %393 = vdwg.mxu0
        %v394 = vld [vmem:[%s245] sm:$0xff]
        %v395 = vld [vmem:[%s245 + $0x8] sm:$0xff]
        %v396 = vld [vmem:[%s245 + $0x10] sm:$0xff]
        %v397 = vld [vmem:[%s245 + $0x18] sm:$0xff]
        %v398 = vld [vmem:[%s245 + $0x20] sm:$0xff]
        %v399 = vld [vmem:[%s245 + $0x28] sm:$0xff]
        %v400 = vld [vmem:[%s245 + $0x30] sm:$0xff]
        %v401 = vld [vmem:[%s245 + $0x38] sm:$0xff]
        %v402 = vld [vmem:[%s3] sm:$0x1]
        %v404 = vlaneseq
        %v405 = vshrl.u32 %v404, 7
        %v406 = vsub.s32 0, %v405
        %v407 = vrot.slane %v402, %v406
        %v409 = vmul.f32 %v407, %v364
        %v410 = vmul.f32 %v407, %v367
        %v411 = vmul.f32 %v407, %v372
        %v412 = vmul.f32 %v407, %v375
        %v413 = vmul.f32 %v407, %v380
        %v414 = vmul.f32 %v407, %v383
        %v415 = vmul.f32 %v407, %v388
        %v416 = vmul.f32 %v407, %v391
        %v417 = vadd.f32 %v394, %v409
        %v418 = vadd.f32 %v395, %v410
        %v419 = vadd.f32 %v396, %v411
        %v420 = vadd.f32 %v397, %v412
        %v421 = vadd.f32 %v398, %v413
        %v422 = vadd.f32 %v399, %v414
        %v423 = vadd.f32 %v400, %v415
        %v424 = vadd.f32 %v401, %v416
        %vm425 = vcmask 130048
        %426 = vst.msk [vmem:[%s234] sm:$0xff] %vm425, %v417
        %427 = vst.msk [vmem:[%s234 + $0x8] sm:$0xff] %vm425, %v418
        %428 = vst.msk [vmem:[%s234 + $0x10] sm:$0xff] %vm425, %v419
        %429 = vst.msk [vmem:[%s234 + $0x18] sm:$0xff] %vm425, %v420
        %430 = vst.msk [vmem:[%s234 + $0x20] sm:$0xff] %vm425, %v421
        %431 = vst.msk [vmem:[%s234 + $0x28] sm:$0xff] %vm425, %v422
        %432 = vst.msk [vmem:[%s234 + $0x30] sm:$0xff] %vm425, %v423
        %433 = vst.msk [vmem:[%s234 + $0x38] sm:$0xff] %vm425, %v424
        %s434 = sand.u32 %s142, 1
        %s435 = scalar_lea.sflag [#allocation3], %s434
        %s436 = sand.u32 %s142, 1
        %s437 = smul.addr %s436, 64
        %s438 = scalar_lea.vmem [#allocation2], %s437
        // Predicated region
        $region41: #{_lambda_.9} parent=39 // pred_check
          %p439 = pneg %p152
        $region42: #{_lambda_.9} parent=39 // pred_check_branch
          %441 = sbr.rel (%p439) target = $region44
        $region43: #{_lambda_.9} parent=39 // pred_region
          %s442 = smul.u32 8, %s19
          %s444 = ssub.s32 1024, 1024
          %445 = vsyncadd %s435, %s444
          %s446 = smul.addr %s442, 128
          %s447 = scalar_lea.hbm %s5, %s446
          %s448 = sshll.u32 %s438, 4
          %s449 = int_to_ptr.vmem [resolvable:$true] %s448
          %454 = dma.vmem_to_hbm [thread:$0]  %s449, 1024, %s447, %s435, 128, 128, 8
        $region44: #{_lambda_.9} parent=39 // pred_fallthru
          _
      $region40: #{_lambda_.9} parent=5 // pred_fallthru
        _
      %p455 = scmp.le.s32.totalorder 2, %s14
      // Predicated region
      $region45: #{_lambda_.9} parent=5 // pred_check
        %p456 = pneg %p455
      $region46: #{_lambda_.9} parent=5 // pred_check_branch
        %458 = sbr.rel (%p456) target = $region48
      $region47: #{_lambda_.9} parent=5 // pred_region
        %s459 = ssub.s32 %s14, 2
        // Predicated region
        $region49: #{_lambda_.9} parent=47 // pred_check
          %p460 = pneg %p158
        $region50: #{_lambda_.9} parent=47 // pred_check_branch
          %462 = sbr.rel (%p460) target = $region52
        $region51: #{_lambda_.9} parent=47 // pred_region
          %s463 = sand.u32 %s143, 1
          %s464 = scalar_lea.sflag [#allocation3], %s463
          %s465 = sand.u32 %s143, 1
          %s466 = smul.addr %s465, 64
          %s467 = scalar_lea.vmem [#allocation2], %s466
          %468 = dma.done %s464, 1024
        $region52: #{_lambda_.9} parent=47 // pred_fallthru
          _
      $region48: #{_lambda_.9} parent=5 // pred_fallthru
        _
    $region6: #{_lambda_.9} parent=1 // loop_footer
      %s18 = sadd.s32 1, %s14
    $region7: #{_lambda_.9} parent=1 // loop_footer_branch
      %13 = sbr.rel target = $region3
    $region8: #{_lambda_.9} parent=1 // loop_exit
      _
    %469 = vsyncpa [#allocation3], 1
    %s470 = scalar_lea.sflag [#allocation3], 1
    %471 = vsyncpa %s470, 1

// kernel: _lambda_.6
$region0: #{_lambda_.6}
  #allocation0 [shape = 'u32[]', space=smem, size = 0x4, offset = 0x4, fixed_abs, tag = 'smem constant byte address 0x4 - core index']
  #allocation1 [shape = 'u32[144,128]{1,0:T(1,128)}', space=vmem, size = 0x12000, scoped, tag = 'internal scratch']
  %s0 = inlined_call_operand.vmem [shape: bf16[2,8,8,16], index: 0, kind: input, shape index: {}]
  %s1 = inlined_call_operand.vmem [shape: bf16[2,2,2,36,32], index: 1, kind: input, shape index: {}]
  %s2 = inlined_call_operand.vmem [shape: bf16[8,48], index: 2, kind: input, shape index: {}]
  %s3 = inlined_call_operand.vmem [shape: f32[16,8], index: 3, kind: input, shape index: {}]
  %s4 = inlined_call_operand.vmem [shape: f32[12,36], index: 4, kind: input, shape index: {}]
  %s5 = inlined_call_operand.vmem [shape: f32[2,2,1,36], index: 5, kind: input, shape index: {}]
  %s6 = inlined_call_operand.vmem [shape: bf16[2,8,8,16], index: 6, kind: output, shape index: {}]
  %s7 = sld [smem:[#allocation0]]
  $region57: #{_lambda_.6} parent=0
    _
  %s9 = ssub.s32 1, %s7
  %s10 = scalar_select 0, %s9, %s7
  loop: start=0, step=1, limit=6
  $region2: #{_lambda_.6} parent=0 // loop_pre_header
    _
  $region3: #{_lambda_.6} parent=0 // loop_header
    %s12 = sphi 0, %s16
    %p13 = scmp.ge.s32.totalorder %s12, 6
    %s19 = sphi 0, %s31
    %s20 = sphi 0, %s27
    %s21 = sphi 0, %s19
    %s22 = sphi 0, %s20
    %s23 = sphi 0, %s21
    %s24 = sphi 0, %s22
    %s36 = sphi 0, %s38
    %s39 = sphi 0, %s36
    %s40 = sphi 0, %s39
    %s56 = sphi 0, %s40
    %s64 = sphi 0, %s66
    %s67 = sphi 0, %s64
    %s68 = sphi 0, %s67
    %s84 = sphi 0, %s68
    %s88 = sphi 0, %s88
    %s90 = sphi 0, %s88
    %s91 = sphi 0, %s90
    %s105 = sphi 0, %s91
    %s109 = sphi 0, %s109
    %s111 = sphi 0, %s109
    %s112 = sphi 0, %s111
    %s126 = sphi 0, %s112
    %s130 = sphi 0, %s130
    %s132 = sphi 0, %s130
    %s133 = sphi 0, %s132
    %s147 = sphi 0, %s133
    %s153 = sphi 0, %s155
    %s156 = sphi 0, %s153
    %s157 = sphi 0, %s156
    %s173 = sphi 0, %s157
    %s181 = sphi 0, %s183
    %s184 = sphi 0, %s181
    %s185 = sphi 0, %s184
    %s201 = sphi 0, %s185
  $region4: #{_lambda_.6} parent=0 // loop_header_branch
    %15 = sbr.rel (%p13) target = $region8
  $region5: #{_lambda_.6} parent=0 // loop_body
    %s17 = ssub.s32 %s12, 1
    %s18 = ssub.s32 %s12, 2
    %s25 = sadd.s32 1, %s20
    %p26 = scmp.ge.s32.totalorder %s25, 2
    %s27 = scalar_select %p26, 0, %s25
    %s28 = sadd.s32 1, %s19
    %s29 = scalar_select %p26, %s28, %s19
    %p30 = scmp.ge.s32.totalorder %s29, 2
    %s31 = scalar_select %p30, 0, %s29
    %s32 = ssub.s32 %s19, %s31
    %s33 = ssub.s32 %s20, %s27
    %s34 = sor.u32 %s32, %s33
    %p35 = scmp.eq.s32.totalorder %s34, 0
    %s37 = sadd.s32 %s36, 1
    %s38 = scalar_select %p35, %s36, %s37
    %p41 = pneg %p35
    %p42 = scmp.eq.s32.totalorder %s12, 3
    %p43 = por %p41, %p42
    %p44 = scmp.ne.s32.totalorder %s36, %s39
    %p45 = scmp.eq.s32.totalorder %s12, 0
    %p46 = por %p44, %p45
    %p47 = scmp.ne.s32.totalorder %s36, %s39
    %p48 = scmp.eq.s32.totalorder %s17, 3
    %p49 = por %p47, %p48
    %p50 = scmp.ne.s32.totalorder %s39, %s40
    %p51 = scmp.eq.s32.totalorder %s17, 0
    %p52 = por %p50, %p51
    %p53 = scmp.ne.s32.totalorder %s39, %s40
    %p54 = scmp.eq.s32.totalorder %s18, 3
    %p55 = por %p53, %p54
    %p57 = scmp.ne.s32.totalorder %s40, %s56
    %p58 = scmp.eq.s32.totalorder %s18, 0
    %p59 = por %p57, %p58
    %s60 = ssub.s32 %s19, %s31
    %s61 = ssub.s32 %s20, %s27
    %s62 = sor.u32 %s60, %s61
    %p63 = scmp.eq.s32.totalorder %s62, 0
    %s65 = sadd.s32 %s64, 1
    %s66 = scalar_select %p63, %s64, %s65
    %p69 = pneg %p63
    %p70 = scmp.eq.s32.totalorder %s12, 3
    %p71 = por %p69, %p70
    %p72 = scmp.ne.s32.totalorder %s64, %s67
    %p73 = scmp.eq.s32.totalorder %s12, 0
    %p74 = por %p72, %p73
    %p75 = scmp.ne.s32.totalorder %s64, %s67
    %p76 = scmp.eq.s32.totalorder %s17, 3
    %p77 = por %p75, %p76
    %p78 = scmp.ne.s32.totalorder %s67, %s68
    %p79 = scmp.eq.s32.totalorder %s17, 0
    %p80 = por %p78, %p79
    %p81 = scmp.ne.s32.totalorder %s67, %s68
    %p82 = scmp.eq.s32.totalorder %s18, 3
    %p83 = por %p81, %p82
    %p85 = scmp.ne.s32.totalorder %s68, %s84
    %p86 = scmp.eq.s32.totalorder %s18, 0
    %p87 = por %p85, %p86
    %s89 = sadd.s32 %s88, 1
    %p92 = scmp.eq.s32.totalorder %s12, 3
    %p93 = scmp.ne.s32.totalorder %s88, %s90
    %p94 = scmp.eq.s32.totalorder %s12, 0
    %p95 = por %p93, %p94
    %p96 = scmp.ne.s32.totalorder %s88, %s90
    %p97 = scmp.eq.s32.totalorder %s17, 3
    %p98 = por %p96, %p97
    %p99 = scmp.ne.s32.totalorder %s90, %s91
    %p100 = scmp.eq.s32.totalorder %s17, 0
    %p101 = por %p99, %p100
    %p102 = scmp.ne.s32.totalorder %s90, %s91
    %p103 = scmp.eq.s32.totalorder %s18, 3
    %p104 = por %p102, %p103
    %p106 = scmp.ne.s32.totalorder %s91, %s105
    %p107 = scmp.eq.s32.totalorder %s18, 0
    %p108 = por %p106, %p107
    %s110 = sadd.s32 %s109, 1
    %p113 = scmp.eq.s32.totalorder %s12, 3
    %p114 = scmp.ne.s32.totalorder %s109, %s111
    %p115 = scmp.eq.s32.totalorder %s12, 0
    %p116 = por %p114, %p115
    %p117 = scmp.ne.s32.totalorder %s109, %s111
    %p118 = scmp.eq.s32.totalorder %s17, 3
    %p119 = por %p117, %p118
    %p120 = scmp.ne.s32.totalorder %s111, %s112
    %p121 = scmp.eq.s32.totalorder %s17, 0
    %p122 = por %p120, %p121
    %p123 = scmp.ne.s32.totalorder %s111, %s112
    %p124 = scmp.eq.s32.totalorder %s18, 3
    %p125 = por %p123, %p124
    %p127 = scmp.ne.s32.totalorder %s112, %s126
    %p128 = scmp.eq.s32.totalorder %s18, 0
    %p129 = por %p127, %p128
    %s131 = sadd.s32 %s130, 1
    %p134 = scmp.eq.s32.totalorder %s12, 3
    %p135 = scmp.ne.s32.totalorder %s130, %s132
    %p136 = scmp.eq.s32.totalorder %s12, 0
    %p137 = por %p135, %p136
    %p138 = scmp.ne.s32.totalorder %s130, %s132
    %p139 = scmp.eq.s32.totalorder %s17, 3
    %p140 = por %p138, %p139
    %p141 = scmp.ne.s32.totalorder %s132, %s133
    %p142 = scmp.eq.s32.totalorder %s17, 0
    %p143 = por %p141, %p142
    %p144 = scmp.ne.s32.totalorder %s132, %s133
    %p145 = scmp.eq.s32.totalorder %s18, 3
    %p146 = por %p144, %p145
    %p148 = scmp.ne.s32.totalorder %s133, %s147
    %p149 = scmp.eq.s32.totalorder %s18, 0
    %p150 = por %p148, %p149
    %s151 = ssub.s32 %s20, %s27
    %p152 = scmp.eq.s32.totalorder %s151, 0
    %s154 = sadd.s32 %s153, 1
    %s155 = scalar_select %p152, %s153, %s154
    %p158 = pneg %p152
    %p159 = scmp.eq.s32.totalorder %s12, 3
    %p160 = por %p158, %p159
    %p161 = scmp.ne.s32.totalorder %s153, %s156
    %p162 = scmp.eq.s32.totalorder %s12, 0
    %p163 = por %p161, %p162
    %p164 = scmp.ne.s32.totalorder %s153, %s156
    %p165 = scmp.eq.s32.totalorder %s17, 3
    %p166 = por %p164, %p165
    %p167 = scmp.ne.s32.totalorder %s156, %s157
    %p168 = scmp.eq.s32.totalorder %s17, 0
    %p169 = por %p167, %p168
    %p170 = scmp.ne.s32.totalorder %s156, %s157
    %p171 = scmp.eq.s32.totalorder %s18, 3
    %p172 = por %p170, %p171
    %p174 = scmp.ne.s32.totalorder %s157, %s173
    %p175 = scmp.eq.s32.totalorder %s18, 0
    %p176 = por %p174, %p175
    %s177 = ssub.s32 %s19, %s31
    %s178 = ssub.s32 %s20, %s27
    %s179 = sor.u32 %s177, %s178
    %p180 = scmp.eq.s32.totalorder %s179, 0
    %s182 = sadd.s32 %s181, 1
    %s183 = scalar_select %p180, %s181, %s182
    %p186 = pneg %p180
    %p187 = scmp.eq.s32.totalorder %s12, 3
    %p188 = por %p186, %p187
    %p189 = scmp.ne.s32.totalorder %s181, %s184
    %p190 = scmp.eq.s32.totalorder %s12, 0
    %p191 = por %p189, %p190
    %p192 = scmp.ne.s32.totalorder %s181, %s184
    %p193 = scmp.eq.s32.totalorder %s17, 3
    %p194 = por %p192, %p193
    %p195 = scmp.ne.s32.totalorder %s184, %s185
    %p196 = scmp.eq.s32.totalorder %s17, 0
    %p197 = por %p195, %p196
    %p198 = scmp.ne.s32.totalorder %s184, %s185
    %p199 = scmp.eq.s32.totalorder %s18, 3
    %p200 = por %p198, %p199
    %p202 = scmp.ne.s32.totalorder %s185, %s201
    %p203 = scmp.eq.s32.totalorder %s18, 0
    %p204 = por %p202, %p203
    %p205 = scmp.le.s32.totalorder 1, %s12
    %p206 = scmp.lt.s32.totalorder %s12, 5
    %p207 = pnand %p205, %p206
    %p208 = pneg %p207
    // Predicated region
    $region9: #{_lambda_.6} parent=5 // pred_check
      _
    $region10: #{_lambda_.6} parent=5 // pred_check_branch
      %210 = sbr.rel (%p207) target = $region12
    $region11: #{_lambda_.6} parent=5 // pred_region
      %s211 = ssub.s32 %s12, 1
      // Predicated region
      $region13: #{_lambda_.6} parent=11 // pred_check
        %p212 = pneg %p101
      $region14: #{_lambda_.6} parent=11 // pred_check_branch
        %214 = sbr.rel (%p212) target = $region16
      $region15: #{_lambda_.6} parent=11 // pred_region
        _
      $region16: #{_lambda_.6} parent=11 // pred_fallthru
        _
      // Predicated region
      $region17: #{_lambda_.6} parent=11 // pred_check
        %p215 = pneg %p122
      $region18: #{_lambda_.6} parent=11 // pred_check_branch
        %217 = sbr.rel (%p215) target = $region20
      $region19: #{_lambda_.6} parent=11 // pred_region
        _
      $region20: #{_lambda_.6} parent=11 // pred_fallthru
        _
      // Predicated region
      $region21: #{_lambda_.6} parent=11 // pred_check
        %p218 = pneg %p143
      $region22: #{_lambda_.6} parent=11 // pred_check_branch
        %220 = sbr.rel (%p218) target = $region24
      $region23: #{_lambda_.6} parent=11 // pred_region
        _
      $region24: #{_lambda_.6} parent=11 // pred_fallthru
        _
    $region12: #{_lambda_.6} parent=5 // pred_fallthru
      _
    %p221 = scmp.lt.s32.totalorder %s12, 4
    // Predicated region
    $region25: #{_lambda_.6} parent=5 // pred_check
      %p222 = pneg %p221
    $region26: #{_lambda_.6} parent=5 // pred_check_branch
      %224 = sbr.rel (%p222) target = $region28
    $region27: #{_lambda_.6} parent=5 // pred_region
      // Predicated region
      $region29: #{_lambda_.6} parent=27 // pred_check
        %p225 = pneg %p46
      $region30: #{_lambda_.6} parent=27 // pred_check_branch
        %227 = sbr.rel (%p225) target = $region32
      $region31: #{_lambda_.6} parent=27 // pred_region
        %s228 = smul.u32 4, %s20
        %p229 = scmp.lt.s32.totalorder %s19, 1
        %s230 = scalar_select %p229, %s19, 1
        %p231 = scmp.lt.s32.totalorder %s228, 7
        %s232 = scalar_select %p231, %s228, 7
        %s233 = smul.addr %s230, 8
        %s234 = sadd.s32 %s232, %s233
        %s235 = smul.addr %s234, 4
        %s236 = scalar_lea.vmem %s0, %s235
        %s237 = smul.u32 4, %s20
      $region32: #{_lambda_.6} parent=27 // pred_fallthru
        _
      // Predicated region
      $region33: #{_lambda_.6} parent=27 // pred_check
        %p238 = pneg %p74
      $region34: #{_lambda_.6} parent=27 // pred_check_branch
        %240 = sbr.rel (%p238) target = $region36
      $region35: #{_lambda_.6} parent=27 // pred_region
        %p241 = scmp.lt.s32.totalorder %s19, 1
        %s242 = scalar_select %p241, %s19, 1
        %p243 = scmp.lt.s32.totalorder %s20, 1
        %s244 = scalar_select %p243, %s20, 1
        %s245 = smul.addr %s244, 10
        %s246 = smul.addr %s242, 20
        %s247 = sadd.s32 %s245, %s246
        %s248 = smul.addr %s247, 4
        %s249 = scalar_lea.vmem %s1, %s248
      $region36: #{_lambda_.6} parent=27 // pred_fallthru
        _
      // Predicated region
      $region37: #{_lambda_.6} parent=27 // pred_check
        %p250 = pneg %p163
      $region38: #{_lambda_.6} parent=27 // pred_check_branch
        %252 = sbr.rel (%p250) target = $region40
      $region39: #{_lambda_.6} parent=27 // pred_region
        %p253 = scmp.lt.s32.totalorder %s20, 1
        %s254 = scalar_select %p253, %s20, 1
        %s255 = smul.addr %s254, 2
        %s256 = scalar_lea.vmem %s5, %s255
      $region40: #{_lambda_.6} parent=27 // pred_fallthru
        _
    $region28: #{_lambda_.6} parent=5 // pred_fallthru
      _
    %p257 = scmp.le.s32.totalorder 1, %s12
    %p258 = scmp.lt.s32.totalorder %s12, 5
    %p259 = pnand %p257, %p258
    %p260 = pneg %p259
    // Predicated region
    $region41: #{_lambda_.6} parent=5 // pred_check
      _
    $region42: #{_lambda_.6} parent=5 // pred_check_branch
      %262 = sbr.rel (%p259) target = $region44
    $region43: #{_lambda_.6} parent=5 // pred_region
      %s263 = ssub.s32 %s12, 1
      %s264 = smul.u32 4, %s22
      %p265 = scmp.lt.s32.totalorder %s21, 1
      %s266 = scalar_select %p265, %s21, 1
      %p267 = scmp.lt.s32.totalorder %s264, 7
      %s268 = scalar_select %p267, %s264, 7
      %s269 = smul.addr %s266, 8
      %s270 = sadd.s32 %s268, %s269
      %s271 = smul.addr %s270, 4
      %s272 = scalar_lea.vmem %s0, %s271
      %p273 = pneg %p52
      %p274 = pneg %p49
      %p275 = scmp.lt.s32.totalorder %s21, 1
      %s276 = scalar_select %p275, %s21, 1
      %p277 = scmp.lt.s32.totalorder %s22, 1
      %s278 = scalar_select %p277, %s22, 1
      %s279 = smul.addr %s278, 10
      %s280 = smul.addr %s276, 20
      %s281 = sadd.s32 %s279, %s280
      %s282 = smul.addr %s281, 4
      %s283 = scalar_lea.vmem %s1, %s282
      %p284 = pneg %p80
      %p285 = pneg %p77
      %p286 = pneg %p101
      %p287 = pneg %p98
      %p288 = pneg %p122
      %p289 = pneg %p119
      %p290 = pneg %p143
      %p291 = pneg %p140
      %p292 = scmp.lt.s32.totalorder %s22, 1
      %s293 = scalar_select %p292, %s22, 1
      %s294 = smul.addr %s293, 2
      %s295 = scalar_lea.vmem %s5, %s294
      %p296 = pneg %p169
      %p297 = pneg %p166
      %p298 = pneg %p197
      %p299 = pneg %p194
      %s300 = smul.u32 4, %s22
      %p301 = scmp.lt.s32.totalorder %s21, 1
      %s302 = scalar_select %p301, %s21, 1
      %p303 = scmp.lt.s32.totalorder %s300, 7
      %s304 = scalar_select %p303, %s300, 7
      %s305 = smul.addr %s302, 8
      %s306 = sadd.s32 %s304, %s305
      %s307 = smul.addr %s306, 4
      %s308 = scalar_lea.vmem %s6, %s307
      %s309 = smul.u32 4, %s22
      %p310 = scmp.lt.s32.totalorder %s21, 1
      %s311 = scalar_select %p310, %s21, 1
      %p312 = scmp.lt.s32.totalorder %s309, 7
      %s313 = scalar_select %p312, %s309, 7
      %s314 = smul.addr %s311, 8
      %s315 = sadd.s32 %s313, %s314
      %s316 = smul.addr %s315, 4
      %s317 = scalar_lea.vmem %s0, %s316
      %s318 = smul.u32 4, %s22
      %p319 = scmp.lt.s32.totalorder %s21, 1
      %s320 = scalar_select %p319, %s21, 1
      %p321 = scmp.lt.s32.totalorder %s22, 1
      %s322 = scalar_select %p321, %s22, 1
      %s323 = smul.addr %s322, 10
      %s324 = smul.addr %s320, 20
      %s325 = sadd.s32 %s323, %s324
      %s326 = smul.addr %s325, 4
      %s327 = scalar_lea.vmem %s1, %s326
      %p328 = scmp.lt.s32.totalorder %s22, 1
      %s329 = scalar_select %p328, %s22, 1
      %s330 = smul.addr %s329, 2
      %s331 = scalar_lea.vmem %s5, %s330
      %s332 = smul.u32 4, %s22
      %p333 = scmp.lt.s32.totalorder %s21, 1
      %s334 = scalar_select %p333, %s21, 1
      %p335 = scmp.lt.s32.totalorder %s332, 7
      %s336 = scalar_select %p335, %s332, 7
      %s337 = smul.addr %s334, 8
      %s338 = sadd.s32 %s336, %s337
      %s339 = smul.addr %s338, 4
      %s340 = scalar_lea.vmem %s6, %s339
      %s341 = smul.u32 4, %s22
      %v343 = vld [vmem:[%s317] sm:$0xf]
      %v344 = vld [vmem:[%s317 + $0x4] sm:$0xf]
      %v345 = vld [vmem:[%s317 + $0x8] sm:$0xf]
      %v346 = vld [vmem:[%s317 + $0xc] sm:$0xf]
      %v347 = vld [vmem:[%s2] sm:$0xf]
      %v348 = vld [vmem:[%s3] sm:$0xff]
      %v349 = vld [vmem:[%s3 + $0x8] sm:$0xff]
      %v350 = vld [vmem:[%s4] sm:$0xff]
      %v351 = vld [vmem:[%s4 + $0x8] sm:$0xf]
      %v352 = vld [vmem:[%s327] sm:$0xf]
      %v353 = vld [vmem:[%s327 + $0x4] sm:$0xf]
      %v354 = vld [vmem:[%s327 + $0x8] sm:$0xf]
      %v355 = vld [vmem:[%s327 + $0xc] sm:$0xf]
      %v356 = vld [vmem:[%s327 + $0x10] sm:$0x3]
      %v357 = vld [vmem:[%s331] sm:$0x1]
      %v362 = vcombine.low %v343, %v344
      %v363 = vcombine.low %v345, %v346
      %v365 = vunpack.c.l.s4 1983009808
      %v366 = vunpack.c.0.s8 %v365
      %v367 = vlaneseq
      %v368 = vshrl.u32 %v367, 7
      %v369 = vsub.s32 %v366, %v368
      %v370 = vrot.slane %v362, %v369
      %v372 = vunpack.c.l.s4 1983009808
      %v373 = vunpack.c.0.s8 %v372
      %v374 = vlaneseq
      %v375 = vshrl.u32 %v374, 7
      %v376 = vsub.s32 %v373, %v375
      %v377 = vrot.slane %v363, %v376
      %v378 = vcombine.low %v370, %v377
      %v384 = vunpack.c.l.b16 %v352
      %v385 = vunpack.c.l.b16 %v353
      %v386 = vunpack.c.l.b16 %v354
      %v387 = vunpack.c.l.b16 %v355
      %v388 = vunpack.c.l.b16 %v356
      %v389 = vpack.c.b16 %v385, %v384
      %v390 = vpack.c.b16 %v387, %v386
      %v391 = vpack.c.b16 %v388, %v388
      %vm392 = vcmask 64512
      %v394 = vsel %vm392, %v378, 0
      %v397 = vsel %vm392, %v389, 0
      %v400 = vsel %vm392, %v390, 0
      %v403 = vsel %vm392, %v391, 0
      %405 = vmatprep.subr.bf16.mxu0 0
      %406 = vmatpush1.bf16.xpose.msra.mxu0 %v397
      %407 = vmatprep.subr.bf16.mxu0 0
      %408 = vmatpush1.bf16.xpose.msra.mxu0 %v400
      %409 = vmatprep.subr.bf16.mxu0 0
      %410 = vmatpush1.bf16.xpose.msra.mxu0 %v403
      %411 = vmatprep.subr.bf16.mxu0 0
      %412 = vmatpush1.bf16.xpose.msra.mxu0 0
      %413 = vmatprep.subr.bf16.mxu0 0
      %414 = vmatpush1.bf16.xpose.msra.mxu0 0
      %415 = vmatprep.subr.bf16.mxu0 0
      %416 = vmatpush1.bf16.xpose.msra.mxu0 0
      %417 = vmatprep.subr.bf16.mxu0 0
      %418 = vmatpush1.bf16.xpose.msra.mxu0 0
      %419 = vmatprep.subr.bf16.mxu0 0
      %420 = vmatpush1.bf16.xpose.msra.mxu0 0
      %421 = vmatprep.subr.bf16.mxu0 0
      %422 = vmatpush1.bf16.xpose.msra.mxu0 0
      %423 = vmatprep.subr.bf16.mxu0 0
      %424 = vmatpush1.bf16.xpose.msra.mxu0 0
      %425 = vmatprep.subr.bf16.mxu0 0
      %426 = vmatpush1.bf16.xpose.msra.mxu0 0
      %427 = vmatprep.subr.bf16.mxu0 0
      %428 = vmatpush1.bf16.xpose.msra.mxu0 0
      %429 = vmatprep.subr.bf16.mxu0 0
      %430 = vmatpush1.bf16.xpose.msra.mxu0 0
      %431 = vmatprep.subr.bf16.mxu0 0
      %432 = vmatpush1.bf16.xpose.msra.mxu0 0
      %433 = vmatprep.subr.bf16.mxu0 0
      %434 = vmatpush1.bf16.xpose.msra.mxu0 0
      %435 = vmatprep.subr.bf16.mxu0 0
      %436 = vmatpush1.bf16.xpose.msra.mxu0 0
      %437 = vmatprep.mubr.bf16.mxu0 0
      %438 = vmatmul.mubr.bf16.gmra.mrb[0].mxu0 %v394
      %v439 = vpop.f32.mrb[0].mxu0
      %v440 = vadd.f32 0.0, %v439
      %v441 = vpop.f32.mrb[0].mxu0
      %v442 = vpop.f32.mrb[0].mxu0
      %v443 = vadd.f32 0.0, %v442
      %v444 = vpop.f32.mrb[0].mxu0
      %445 = vdwg.mxu0
      %vm446 = vcmask 1043456
      %v448 = vsel %vm446, %v347, 0
      %450 = vmatprep.subr.bf16.mxu0 0
      %451 = vmatpush1.bf16.msra.mxu0 %v448
      %452 = vmatprep.subr.bf16.mxu0 0
      %453 = vmatpush1.bf16.msra.mxu0 0
      %454 = vmatprep.subr.bf16.mxu0 0
      %455 = vmatpush1.bf16.msra.mxu0 0
      %456 = vmatprep.subr.bf16.mxu0 0
      %457 = vmatpush1.bf16.msra.mxu0 0
      %458 = vmatprep.subr.bf16.mxu0 0
      %459 = vmatpush1.bf16.msra.mxu0 0
      %460 = vmatprep.subr.bf16.mxu0 0
      %461 = vmatpush1.bf16.msra.mxu0 0
      %462 = vmatprep.subr.bf16.mxu0 0
      %463 = vmatpush1.bf16.msra.mxu0 0
      %464 = vmatprep.subr.bf16.mxu0 0
      %465 = vmatpush1.bf16.msra.mxu0 0
      %466 = vmatprep.subr.bf16.mxu0 0
      %467 = vmatpush1.bf16.msra.mxu0 0
      %468 = vmatprep.subr.bf16.mxu0 0
      %469 = vmatpush1.bf16.msra.mxu0 0
      %470 = vmatprep.subr.bf16.mxu0 0
      %471 = vmatpush1.bf16.msra.mxu0 0
      %472 = vmatprep.subr.bf16.mxu0 0
      %473 = vmatpush1.bf16.msra.mxu0 0
      %474 = vmatprep.subr.bf16.mxu0 0
      %475 = vmatpush1.bf16.msra.mxu0 0
      %476 = vmatprep.subr.bf16.mxu0 0
      %477 = vmatpush1.bf16.msra.mxu0 0
      %478 = vmatprep.subr.bf16.mxu0 0
      %479 = vmatpush1.bf16.msra.mxu0 0
      %480 = vmatprep.subr.bf16.mxu0 0
      %481 = vmatpush1.bf16.msra.mxu0 0
      %482 = vmatprep.mubr.bf16.mxu0 0
      %483 = vmatmul.mubr.bf16.gmra.mrb[0].mxu0 %v394
      %v484 = vpop.f32.mrb[0].mxu0
      %v485 = vadd.f32 0.0, %v484
      %v486 = vpop.f32.mrb[0].mxu0
      %v487 = vpop.f32.mrb[0].mxu0
      %v488 = vadd.f32 0.0, %v487
      %v489 = vpop.f32.mrb[0].mxu0
      %490 = vdwg.mxu0
      %492 = vset.pattern.permute.xlu0 0
      %493 = vperm.xlu0 %492, %v348
      %v494 = vpop.permute.xlu0 %493
      %497 = vset.pattern.permute.xlu0 0
      %498 = vperm.xlu0 %497, %v349
      %v499 = vpop.permute.xlu0 %498
      %v501 = vmul.f32 %v485, %v494
      %v502 = vmul.f32 %v488, %v499
      %v503 = vadd.f32 %v501, 0.0
      %v504 = vadd.f32 %v502, 0.0
      %505 = vset.pattern.permute.xlu0 4
      %506 = vperm.xlu0 %505, %v348
      %v507 = vpop.permute.xlu0 %506
      %509 = vset.pattern.permute.xlu0 4
      %510 = vperm.xlu0 %509, %v349
      %v511 = vpop.permute.xlu0 %510
      %v513 = vmul.f32 %v485, %v507
      %v514 = vmul.f32 %v488, %v511
      %v515 = vadd.f32 %v513, 0.0
      %v516 = vadd.f32 %v514, 0.0
      %517 = vset.pattern.permute.xlu0 1
      %518 = vperm.xlu0 %517, %v348
      %v519 = vpop.permute.xlu0 %518
      %521 = vset.pattern.permute.xlu0 1
      %522 = vperm.xlu0 %521, %v349
      %v523 = vpop.permute.xlu0 %522
      %v525 = vmul.f32 %v485, %v519
      %v526 = vmul.f32 %v488, %v523
      %529 = vrot.lane.b32.xlu0 %v525, 122
      %v530 = vpop.permute.xlu0 %529
      %531 = vrot.lane.b32.xlu0 %v526, 122
      %v532 = vpop.permute.xlu0 %531
      %v535 = vadd.f32 %v503, %v530
      %v536 = vadd.f32 %v504, %v532
      %537 = vset.pattern.permute.xlu0 5
      %538 = vperm.xlu0 %537, %v348
      %v539 = vpop.permute.xlu0 %538
      %541 = vset.pattern.permute.xlu0 5
      %542 = vperm.xlu0 %541, %v349
      %v543 = vpop.permute.xlu0 %542
      %v545 = vmul.f32 %v485, %v539
      %v546 = vmul.f32 %v488, %v543
      %549 = vrot.lane.b32.xlu0 %v545, 122
      %v550 = vpop.permute.xlu0 %549
      %551 = vrot.lane.b32.xlu0 %v546, 122
      %v552 = vpop.permute.xlu0 %551
      %v555 = vadd.f32 %v515, %v550
      %v556 = vadd.f32 %v516, %v552
      %557 = vset.pattern.permute.xlu0 2
      %558 = vperm.xlu0 %557, %v348
      %v559 = vpop.permute.xlu0 %558
      %561 = vset.pattern.permute.xlu0 2
      %562 = vperm.xlu0 %561, %v349
      %v563 = vpop.permute.xlu0 %562
      %v565 = vmul.f32 %v485, %v559
      %v566 = vmul.f32 %v488, %v563
      %569 = vrot.lane.b32.xlu0 %v565, 116
      %v570 = vpop.permute.xlu0 %569
      %571 = vrot.lane.b32.xlu0 %v566, 116
      %v572 = vpop.permute.xlu0 %571
      %v575 = vadd.f32 %v535, %v570
      %v576 = vadd.f32 %v536, %v572
      %577 = vset.pattern.permute.xlu0 6
      %578 = vperm.xlu0 %577, %v348
      %v579 = vpop.permute.xlu0 %578
      %581 = vset.pattern.permute.xlu0 6
      %582 = vperm.xlu0 %581, %v349
      %v583 = vpop.permute.xlu0 %582
      %v585 = vmul.f32 %v485, %v579
      %v586 = vmul.f32 %v488, %v583
      %589 = vrot.lane.b32.xlu0 %v585, 116
      %v590 = vpop.permute.xlu0 %589
      %591 = vrot.lane.b32.xlu0 %v586, 116
      %v592 = vpop.permute.xlu0 %591
      %v595 = vadd.f32 %v555, %v590
      %v596 = vadd.f32 %v556, %v592
      %597 = vset.pattern.permute.xlu0 3
      %598 = vperm.xlu0 %597, %v348
      %v599 = vpop.permute.xlu0 %598
      %601 = vset.pattern.permute.xlu0 3
      %602 = vperm.xlu0 %601, %v349
      %v603 = vpop.permute.xlu0 %602
      %v605 = vmul.f32 %v485, %v599
      %v606 = vmul.f32 %v488, %v603
      %609 = vrot.lane.b32.xlu0 %v605, 110
      %v610 = vpop.permute.xlu0 %609
      %611 = vrot.lane.b32.xlu0 %v606, 110
      %v612 = vpop.permute.xlu0 %611
      %v615 = vadd.f32 %v575, %v610
      %v616 = vadd.f32 %v576, %v612
      %617 = vset.pattern.permute.xlu0 7
      %618 = vperm.xlu0 %617, %v348
      %v619 = vpop.permute.xlu0 %618
      %621 = vset.pattern.permute.xlu0 7
      %622 = vperm.xlu0 %621, %v349
      %v623 = vpop.permute.xlu0 %622
      %v625 = vmul.f32 %v485, %v619
      %v626 = vmul.f32 %v488, %v623
      %629 = vrot.lane.b32.xlu0 %v625, 110
      %v630 = vpop.permute.xlu0 %629
      %631 = vrot.lane.b32.xlu0 %v626, 110
      %v632 = vpop.permute.xlu0 %631
      %v635 = vadd.f32 %v595, %v630
      %v636 = vadd.f32 %v596, %v632
      %639 = vrot.lane.b32.xlu0 %v635, 110
      %v640 = vpop.permute.xlu0 %639
      %641 = vrot.lane.b32.xlu0 %v636, 110
      %v642 = vpop.permute.xlu0 %641
      %vm645 = vcmask 48128
      %v646 = vsel %vm645, %v615, %v640
      %v647 = vsel %vm645, %v616, %v642
      %vm648 = vcmask 97280
      %v650 = vsel %vm648, %v646, 0
      %v653 = vsel %vm648, %v647, 0
      %v656 = vsel %vm446, %v351, 0
      %658 = vmatprep.subr.mxu0 0.0
      %659 = vmatpush1.msra.mxu0 %v350
      %660 = vmatprep.subr.mxu0 0.0
      %661 = vmatpush1.msra.mxu0 %v656
      %662 = vmatprep.subr.mxu0 0.0
      %663 = vmatpush1.msra.mxu0 0.0
      %664 = vmatprep.subr.mxu0 0.0
      %665 = vmatpush1.msra.mxu0 0.0
      %666 = vmatprep.subr.mxu0 0.0
      %667 = vmatpush1.msra.mxu0 0.0
      %668 = vmatprep.subr.mxu0 0.0
      %669 = vmatpush1.msra.mxu0 0.0
      %670 = vmatprep.subr.mxu0 0.0
      %671 = vmatpush1.msra.mxu0 0.0
      %672 = vmatprep.subr.mxu0 0.0
      %673 = vmatpush1.msra.mxu0 0.0
      %674 = vmatprep.subr.mxu0 0.0
      %675 = vmatpush1.msra.mxu0 0.0
      %676 = vmatprep.subr.mxu0 0.0
      %677 = vmatpush1.msra.mxu0 0.0
      %678 = vmatprep.subr.mxu0 0.0
      %679 = vmatpush1.msra.mxu0 0.0
      %680 = vmatprep.subr.mxu0 0.0
      %681 = vmatpush1.msra.mxu0 0.0
      %682 = vmatprep.subr.mxu0 0.0
      %683 = vmatpush1.msra.mxu0 0.0
      %684 = vmatprep.subr.mxu0 0.0
      %685 = vmatpush1.msra.mxu0 0.0
      %686 = vmatprep.subr.mxu0 0.0
      %687 = vmatpush1.msra.mxu0 0.0
      %688 = vmatprep.subr.mxu0 0.0
      %689 = vmatpush1.msra.mxu0 0.0
      %690 = vmatprep.subr.mxu0 0.0
      %691 = vmatpush1.msra.mxu0 0.0
      %692 = vmatprep.subr.mxu0 0.0
      %693 = vmatpush1.msra.mxu0 0.0
      %694 = vmatprep.subr.mxu0 0.0
      %695 = vmatpush1.msra.mxu0 0.0
      %696 = vmatprep.subr.mxu0 0.0
      %697 = vmatpush1.msra.mxu0 0.0
      %698 = vmatprep.subr.mxu0 0.0
      %699 = vmatpush1.msra.mxu0 0.0
      %700 = vmatprep.subr.mxu0 0.0
      %701 = vmatpush1.msra.mxu0 0.0
      %702 = vmatprep.subr.mxu0 0.0
      %703 = vmatpush1.msra.mxu0 0.0
      %704 = vmatprep.subr.mxu0 0.0
      %705 = vmatpush1.msra.mxu0 0.0
      %706 = vmatprep.subr.mxu0 0.0
      %707 = vmatpush1.msra.mxu0 0.0
      %708 = vmatprep.subr.mxu0 0.0
      %709 = vmatpush1.msra.mxu0 0.0
      %710 = vmatprep.subr.mxu0 0.0
      %711 = vmatpush1.msra.mxu0 0.0
      %712 = vmatprep.subr.mxu0 0.0
      %713 = vmatpush1.msra.mxu0 0.0
      %714 = vmatprep.subr.mxu0 0.0
      %715 = vmatpush1.msra.mxu0 0.0
      %716 = vmatprep.subr.mxu0 0.0
      %717 = vmatpush1.msra.mxu0 0.0
      %718 = vmatprep.subr.mxu0 0.0
      %719 = vmatpush1.msra.mxu0 0.0
      %720 = vmatprep.subr.mxu0 0.0
      %721 = vmatpush1.msra.mxu0 0.0
      %722 = vmatprep.mubr.f32.mxu0 0.0
      %723 = vmatmul.mubr.f32.gmra.mrb[0].mxu0 %v650
      %v724 = vpop.f32.mrb[0].mxu0
      %v725 = vadd.f32 0.0, %v724
      %v726 = vpop.f32.mrb[0].mxu0
      %727 = vmatprep.mubr.f32.mxu0 0.0
      %728 = vmatmul.mubr.f32.gmra.mrb[0].mxu0 %v653
      %v729 = vpop.f32.mrb[0].mxu0
      %v730 = vadd.f32 0.0, %v729
      %v731 = vpop.f32.mrb[0].mxu0
      %732 = vdwg.mxu0
      %v733 = vmul.f32 %v440, 0.35355338
      %v734 = vmul.f32 %v443, 0.35355338
      %v735 = vadd.f32 %v733, %v725
      %v736 = vadd.f32 %v734, %v730
      %v738 = vlaneseq
      %v739 = vshrl.u32 %v738, 7
      %v740 = vsub.s32 0, %v739
      %v741 = vrot.slane %v357, %v740
      %v743 = vadd.f32 %v735, %v741
      %v744 = vadd.f32 %v736, %v741
      %vm745 = vcmask 293888
      %v746 = vsel %vm745, %v743, -inf
      %747 = vmax.xlane.f32.xlu0 %v746
      %v748 = vpop.xlane.xlu0 %747
      %v749 = vsel %vm745, %v744, -inf
      %750 = vmax.xlane.f32.xlu0 %v749
      %v751 = vpop.xlane.xlu0 %750
      %v752 = vsub.f32 %v743, %v748
      %v753 = vsub.f32 %v744, %v751
      %v754 = vmul.f32 %v752, 1.442695
      %v755 = vpow.pop %v754
      %v756 = vmul.f32 %v753, 1.442695
      %v757 = vpow.pop %v756
      %v758 = vsel %vm745, %v755, 0.0
      %759 = vadd.xlane.f32.xlu0 %v758
      %v760 = vpop.xlane.xlu0 %759
      %v761 = vsel %vm745, %v757, 0.0
      %762 = vadd.xlane.f32.xlu0 %v761
      %v763 = vpop.xlane.xlu0 %762
      %v764 = vrcp.pop %v760
      %v765 = vrcp.pop %v763
      %v766 = vmul.f32 %v755, %v764
      %v767 = vmul.f32 %v757, %v765
      %v768 = vpack.c.bf16 %v767, %v766
      %769 = vrot.lane.b32.xlu0 %v389, 120
      %v770 = vpop.permute.xlu0 %769
      %771 = vrot.lane.b32.xlu0 %v390, 120
      %v772 = vpop.permute.xlu0 %771
      %773 = vrot.lane.b32.xlu0 %v391, 120
      %v774 = vpop.permute.xlu0 %773
      %v778 = vsel %vm745, %v768, 0
      %vm780 = vcmask 1041408
      %v782 = vsel %vm780, %v774, 0
      %784 = vmatprep.subr.bf16.mxu0 0
      %785 = vmatpush1.bf16.msra.mxu0 %v770
      %786 = vmatprep.subr.bf16.mxu0 0
      %787 = vmatpush1.bf16.msra.mxu0 %v772
      %788 = vmatprep.subr.bf16.mxu0 0
      %789 = vmatpush1.bf16.msra.mxu0 %v782
      %790 = vmatprep.subr.bf16.mxu0 0
      %791 = vmatpush1.bf16.msra.mxu0 0
      %792 = vmatprep.subr.bf16.mxu0 0
      %793 = vmatpush1.bf16.msra.mxu0 0
      %794 = vmatprep.subr.bf16.mxu0 0
      %795 = vmatpush1.bf16.msra.mxu0 0
      %796 = vmatprep.subr.bf16.mxu0 0
      %797 = vmatpush1.bf16.msra.mxu0 0
      %798 = vmatprep.subr.bf16.mxu0 0
      %799 = vmatpush1.bf16.msra.mxu0 0
      %800 = vmatprep.subr.bf16.mxu0 0
      %801 = vmatpush1.bf16.msra.mxu0 0
      %802 = vmatprep.subr.bf16.mxu0 0
      %803 = vmatpush1.bf16.msra.mxu0 0
      %804 = vmatprep.subr.bf16.mxu0 0
      %805 = vmatpush1.bf16.msra.mxu0 0
      %806 = vmatprep.subr.bf16.mxu0 0
      %807 = vmatpush1.bf16.msra.mxu0 0
      %808 = vmatprep.subr.bf16.mxu0 0
      %809 = vmatpush1.bf16.msra.mxu0 0
      %810 = vmatprep.subr.bf16.mxu0 0
      %811 = vmatpush1.bf16.msra.mxu0 0
      %812 = vmatprep.subr.bf16.mxu0 0
      %813 = vmatpush1.bf16.msra.mxu0 0
      %814 = vmatprep.subr.bf16.mxu0 0
      %815 = vmatpush1.bf16.msra.mxu0 0
      %816 = vmatprep.mubr.bf16.mxu0 0
      %817 = vmatmul.mubr.bf16.gmra.mrb[0].mxu0 %v778
      %v818 = vpop.f32.mrb[0].mxu0
      %v819 = vadd.f32 0.0, %v818
      %v820 = vpop.f32.mrb[0].mxu0
      %v821 = vpop.f32.mrb[0].mxu0
      %v822 = vadd.f32 0.0, %v821
      %v823 = vpop.f32.mrb[0].mxu0
      %824 = vdwg.mxu0
      %v825 = vpack.c.bf16 %v822, %v819
      %v827 = vcombine.high %v825, %v825
      %v829 = vunpack.c.l.s4 1983009808
      %v830 = vunpack.c.0.s8 %v829
      %v831 = vlaneseq
      %v832 = vshrl.u32 %v831, 7
      %v833 = vsub.s32 %v830, %v832
      %v834 = vrot.slane %v825, %v833
      %v836 = vunpack.c.l.s4 1983009808
      %v837 = vunpack.c.0.s8 %v836
      %v838 = vlaneseq
      %v839 = vshrl.u32 %v838, 7
      %v840 = vsub.s32 %v837, %v839
      %v841 = vrot.slane %v827, %v840
      %v842 = vcombine.high %v834, %v834
      %v843 = vcombine.high %v841, %v841
      %vm848 = vcmask 58368
      %849 = vst.msk [vmem:[%s340] sm:$0x3] %vm848, %v834
      %850 = vst.msk [vmem:[%s340 + $0x4] sm:$0x3] %vm848, %v842
      %851 = vst.msk [vmem:[%s340 + $0x8] sm:$0x3] %vm848, %v841
      %852 = vst.msk [vmem:[%s340 + $0xc] sm:$0x3] %vm848, %v843
      %853 = vrot.lane.b32.xlu0 %v378, 120
      %v854 = vpop.permute.xlu0 %853
      %855 = vrot.lane.b32.xlu0 %v389, 112
      %v856 = vpop.permute.xlu0 %855
      %857 = vrot.lane.b32.xlu0 %v390, 112
      %v858 = vpop.permute.xlu0 %857
      %859 = vrot.lane.b32.xlu0 %v391, 112
      %v860 = vpop.permute.xlu0 %859
      %v862 = vsel %vm392, %v854, 0
      %v865 = vsel %vm392, %v856, 0
      %v868 = vsel %vm392, %v858, 0
      %v871 = vsel %vm392, %v860, 0
      %873 = vmatprep.subr.bf16.mxu0 0
      %874 = vmatpush1.bf16.xpose.msra.mxu0 %v865
      %875 = vmatprep.subr.bf16.mxu0 0
      %876 = vmatpush1.bf16.xpose.msra.mxu0 %v868
      %877 = vmatprep.subr.bf16.mxu0 0
      %878 = vmatpush1.bf16.xpose.msra.mxu0 %v871
      %879 = vmatprep.subr.bf16.mxu0 0
      %880 = vmatpush1.bf16.xpose.msra.mxu0 0
      %881 = vmatprep.subr.bf16.mxu0 0
      %882 = vmatpush1.bf16.xpose.msra.mxu0 0
      %883 = vmatprep.subr.bf16.mxu0 0
      %884 = vmatpush1.bf16.xpose.msra.mxu0 0
      %885 = vmatprep.subr.bf16.mxu0 0
      %886 = vmatpush1.bf16.xpose.msra.mxu0 0
      %887 = vmatprep.subr.bf16.mxu0 0
      %888 = vmatpush1.bf16.xpose.msra.mxu0 0
      %889 = vmatprep.subr.bf16.mxu0 0
      %890 = vmatpush1.bf16.xpose.msra.mxu0 0
      %891 = vmatprep.subr.bf16.mxu0 0
      %892 = vmatpush1.bf16.xpose.msra.mxu0 0
      %893 = vmatprep.subr.bf16.mxu0 0
      %894 = vmatpush1.bf16.xpose.msra.mxu0 0
      %895 = vmatprep.subr.bf16.mxu0 0
      %896 = vmatpush1.bf16.xpose.msra.mxu0 0
      %897 = vmatprep.subr.bf16.mxu0 0
      %898 = vmatpush1.bf16.xpose.msra.mxu0 0
      %899 = vmatprep.subr.bf16.mxu0 0
      %900 = vmatpush1.bf16.xpose.msra.mxu0 0
      %901 = vmatprep.subr.bf16.mxu0 0
      %902 = vmatpush1.bf16.xpose.msra.mxu0 0
      %903 = vmatprep.subr.bf16.mxu0 0
      %904 = vmatpush1.bf16.xpose.msra.mxu0 0
      %905 = vmatprep.mubr.bf16.mxu0 0
      %906 = vmatmul.mubr.bf16.gmra.mrb[0].mxu0 %v862
      %v907 = vpop.f32.mrb[0].mxu0
      %v908 = vadd.f32 0.0, %v907
      %v909 = vpop.f32.mrb[0].mxu0
      %v910 = vpop.f32.mrb[0].mxu0
      %v911 = vadd.f32 0.0, %v910
      %v912 = vpop.f32.mrb[0].mxu0
      %913 = vdwg.mxu0
      %914 = vmatprep.subr.bf16.mxu0 0
      %915 = vmatpush1.bf16.msra.mxu0 %v448
      %916 = vmatprep.subr.bf16.mxu0 0
      %917 = vmatpush1.bf16.msra.mxu0 0
      %918 = vmatprep.subr.bf16.mxu0 0
      %919 = vmatpush1.bf16.msra.mxu0 0
      %920 = vmatprep.subr.bf16.mxu0 0
      %921 = vmatpush1.bf16.msra.mxu0 0
      %922 = vmatprep.subr.bf16.mxu0 0
      %923 = vmatpush1.bf16.msra.mxu0 0
      %924 = vmatprep.subr.bf16.mxu0 0
      %925 = vmatpush1.bf16.msra.mxu0 0
      %926 = vmatprep.subr.bf16.mxu0 0
      %927 = vmatpush1.bf16.msra.mxu0 0
      %928 = vmatprep.subr.bf16.mxu0 0
      %929 = vmatpush1.bf16.msra.mxu0 0
      %930 = vmatprep.subr.bf16.mxu0 0
      %931 = vmatpush1.bf16.msra.mxu0 0
      %932 = vmatprep.subr.bf16.mxu0 0
      %933 = vmatpush1.bf16.msra.mxu0 0
      %934 = vmatprep.subr.bf16.mxu0 0
      %935 = vmatpush1.bf16.msra.mxu0 0
      %936 = vmatprep.subr.bf16.mxu0 0
      %937 = vmatpush1.bf16.msra.mxu0 0
      %938 = vmatprep.subr.bf16.mxu0 0
      %939 = vmatpush1.bf16.msra.mxu0 0
      %940 = vmatprep.subr.bf16.mxu0 0
      %941 = vmatpush1.bf16.msra.mxu0 0
      %942 = vmatprep.subr.bf16.mxu0 0
      %943 = vmatpush1.bf16.msra.mxu0 0
      %944 = vmatprep.subr.bf16.mxu0 0
      %945 = vmatpush1.bf16.msra.mxu0 0
      %946 = vmatprep.mubr.bf16.mxu0 0
      %947 = vmatmul.mubr.bf16.gmra.mrb[0].mxu0 %v862
      %v948 = vpop.f32.mrb[0].mxu0
      %v949 = vadd.f32 0.0, %v948
      %v950 = vpop.f32.mrb[0].mxu0
      %v951 = vpop.f32.mrb[0].mxu0
      %v952 = vadd.f32 0.0, %v951
      %v953 = vpop.f32.mrb[0].mxu0
      %954 = vdwg.mxu0
      %v955 = vmul.f32 %v949, %v494
      %v956 = vmul.f32 %v952, %v499
      %v957 = vadd.f32 %v955, 0.0
      %v958 = vadd.f32 %v956, 0.0
      %v959 = vmul.f32 %v949, %v507
      %v960 = vmul.f32 %v952, %v511
      %v961 = vadd.f32 %v959, 0.0
      %v962 = vadd.f32 %v960, 0.0
      %v963 = vmul.f32 %v949, %v519
      %v964 = vmul.f32 %v952, %v523
      %967 = vrot.lane.b32.xlu0 %v963, 122
      %v968 = vpop.permute.xlu0 %967
      %969 = vrot.lane.b32.xlu0 %v964, 122
      %v970 = vpop.permute.xlu0 %969
      %v973 = vadd.f32 %v957, %v968
      %v974 = vadd.f32 %v958, %v970
      %v975 = vmul.f32 %v949, %v539
      %v976 = vmul.f32 %v952, %v543
      %979 = vrot.lane.b32.xlu0 %v975, 122
      %v980 = vpop.permute.xlu0 %979
      %981 = vrot.lane.b32.xlu0 %v976, 122
      %v982 = vpop.permute.xlu0 %981
      %v985 = vadd.f32 %v961, %v980
      %v986 = vadd.f32 %v962, %v982
      %v987 = vmul.f32 %v949, %v559
      %v988 = vmul.f32 %v952, %v563
      %991 = vrot.lane.b32.xlu0 %v987, 116
      %v992 = vpop.permute.xlu0 %991
      %993 = vrot.lane.b32.xlu0 %v988, 116
      %v994 = vpop.permute.xlu0 %993
      %v997 = vadd.f32 %v973, %v992
      %v998 = vadd.f32 %v974, %v994
      %v999 = vmul.f32 %v949, %v579
      %v1000 = vmul.f32 %v952, %v583
      %1003 = vrot.lane.b32.xlu0 %v999, 116
      %v1004 = vpop.permute.xlu0 %1003
      %1005 = vrot.lane.b32.xlu0 %v1000, 116
      %v1006 = vpop.permute.xlu0 %1005
      %v1009 = vadd.f32 %v985, %v1004
      %v1010 = vadd.f32 %v986, %v1006
      %v1011 = vmul.f32 %v949, %v599
      %v1012 = vmul.f32 %v952, %v603
      %1015 = vrot.lane.b32.xlu0 %v1011, 110
      %v1016 = vpop.permute.xlu0 %1015
      %1017 = vrot.lane.b32.xlu0 %v1012, 110
      %v1018 = vpop.permute.xlu0 %1017
      %v1021 = vadd.f32 %v997, %v1016
      %v1022 = vadd.f32 %v998, %v1018
      %v1023 = vmul.f32 %v949, %v619
      %v1024 = vmul.f32 %v952, %v623
      %1027 = vrot.lane.b32.xlu0 %v1023, 110
      %v1028 = vpop.permute.xlu0 %1027
      %1029 = vrot.lane.b32.xlu0 %v1024, 110
      %v1030 = vpop.permute.xlu0 %1029
      %v1033 = vadd.f32 %v1009, %v1028
      %v1034 = vadd.f32 %v1010, %v1030
      %1037 = vrot.lane.b32.xlu0 %v1033, 110
      %v1038 = vpop.permute.xlu0 %1037
      %1039 = vrot.lane.b32.xlu0 %v1034, 110
      %v1040 = vpop.permute.xlu0 %1039
      %v1043 = vsel %vm645, %v1021, %v1038
      %v1044 = vsel %vm645, %v1022, %v1040
      %v1046 = vsel %vm648, %v1043, 0
      %v1049 = vsel %vm648, %v1044, 0
      %1051 = vmatprep.subr.mxu0 0.0
      %1052 = vmatpush1.msra.mxu0 %v350
      %1053 = vmatprep.subr.mxu0 0.0
      %1054 = vmatpush1.msra.mxu0 %v656
      %1055 = vmatprep.subr.mxu0 0.0
      %1056 = vmatpush1.msra.mxu0 0.0
      %1057 = vmatprep.subr.mxu0 0.0
      %1058 = vmatpush1.msra.mxu0 0.0
      %1059 = vmatprep.subr.mxu0 0.0
      %1060 = vmatpush1.msra.mxu0 0.0
      %1061 = vmatprep.subr.mxu0 0.0
      %1062 = vmatpush1.msra.mxu0 0.0
      %1063 = vmatprep.subr.mxu0 0.0
      %1064 = vmatpush1.msra.mxu0 0.0
      %1065 = vmatprep.subr.mxu0 0.0
      %1066 = vmatpush1.msra.mxu0 0.0
      %1067 = vmatprep.subr.mxu0 0.0
      %1068 = vmatpush1.msra.mxu0 0.0
      %1069 = vmatprep.subr.mxu0 0.0
      %1070 = vmatpush1.msra.mxu0 0.0
      %1071 = vmatprep.subr.mxu0 0.0
      %1072 = vmatpush1.msra.mxu0 0.0
      %1073 = vmatprep.subr.mxu0 0.0
      %1074 = vmatpush1.msra.mxu0 0.0
      %1075 = vmatprep.subr.mxu0 0.0
      %1076 = vmatpush1.msra.mxu0 0.0
      %1077 = vmatprep.subr.mxu0 0.0
      %1078 = vmatpush1.msra.mxu0 0.0
      %1079 = vmatprep.subr.mxu0 0.0
      %1080 = vmatpush1.msra.mxu0 0.0
      %1081 = vmatprep.subr.mxu0 0.0
      %1082 = vmatpush1.msra.mxu0 0.0
      %1083 = vmatprep.subr.mxu0 0.0
      %1084 = vmatpush1.msra.mxu0 0.0
      %1085 = vmatprep.subr.mxu0 0.0
      %1086 = vmatpush1.msra.mxu0 0.0
      %1087 = vmatprep.subr.mxu0 0.0
      %1088 = vmatpush1.msra.mxu0 0.0
      %1089 = vmatprep.subr.mxu0 0.0
      %1090 = vmatpush1.msra.mxu0 0.0
      %1091 = vmatprep.subr.mxu0 0.0
      %1092 = vmatpush1.msra.mxu0 0.0
      %1093 = vmatprep.subr.mxu0 0.0
      %1094 = vmatpush1.msra.mxu0 0.0
      %1095 = vmatprep.subr.mxu0 0.0
      %1096 = vmatpush1.msra.mxu0 0.0
      %1097 = vmatprep.subr.mxu0 0.0
      %1098 = vmatpush1.msra.mxu0 0.0
      %1099 = vmatprep.subr.mxu0 0.0
      %1100 = vmatpush1.msra.mxu0 0.0
      %1101 = vmatprep.subr.mxu0 0.0
      %1102 = vmatpush1.msra.mxu0 0.0
      %1103 = vmatprep.subr.mxu0 0.0
      %1104 = vmatpush1.msra.mxu0 0.0
      %1105 = vmatprep.subr.mxu0 0.0
      %1106 = vmatpush1.msra.mxu0 0.0
      %1107 = vmatprep.subr.mxu0 0.0
      %1108 = vmatpush1.msra.mxu0 0.0
      %1109 = vmatprep.subr.mxu0 0.0
      %1110 = vmatpush1.msra.mxu0 0.0
      %1111 = vmatprep.subr.mxu0 0.0
      %1112 = vmatpush1.msra.mxu0 0.0
      %1113 = vmatprep.subr.mxu0 0.0
      %1114 = vmatpush1.msra.mxu0 0.0
      %1115 = vmatprep.mubr.f32.mxu0 0.0
      %1116 = vmatmul.mubr.f32.gmra.mrb[0].mxu0 %v1046
      %v1117 = vpop.f32.mrb[0].mxu0
      %v1118 = vadd.f32 0.0, %v1117
      %v1119 = vpop.f32.mrb[0].mxu0
      %1120 = vmatprep.mubr.f32.mxu0 0.0
      %1121 = vmatmul.mubr.f32.gmra.mrb[0].mxu0 %v1049
      %v1122 = vpop.f32.mrb[0].mxu0
      %v1123 = vadd.f32 0.0, %v1122
      %v1124 = vpop.f32.mrb[0].mxu0
      %1125 = vdwg.mxu0
      %v1126 = vmul.f32 %v908, 0.35355338
      %v1127 = vmul.f32 %v911, 0.35355338
      %v1128 = vadd.f32 %v1126, %v1118
      %v1129 = vadd.f32 %v1127, %v1123
      %v1130 = vadd.f32 %v1128, %v741
      %v1131 = vadd.f32 %v1129, %v741
      %v1132 = vsel %vm745, %v1130, -inf
      %1133 = vmax.xlane.f32.xlu0 %v1132
      %v1134 = vpop.xlane.xlu0 %1133
      %v1135 = vsel %vm745, %v1131, -inf
      %1136 = vmax.xlane.f32.xlu0 %v1135
      %v1137 = vpop.xlane.xlu0 %1136
      %v1138 = vsub.f32 %v1130, %v1134
      %v1139 = vsub.f32 %v1131, %v1137
      %v1140 = vmul.f32 %v1138, 1.442695
      %v1141 = vpow.pop %v1140
      %v1142 = vmul.f32 %v1139, 1.442695
      %v1143 = vpow.pop %v1142
      %v1144 = vsel %vm745, %v1141, 0.0
      %1145 = vadd.xlane.f32.xlu0 %v1144
      %v1146 = vpop.xlane.xlu0 %1145
      %v1147 = vsel %vm745, %v1143, 0.0
      %1148 = vadd.xlane.f32.xlu0 %v1147
      %v1149 = vpop.xlane.xlu0 %1148
      %v1150 = vrcp.pop %v1146
      %v1151 = vrcp.pop %v1149
      %v1152 = vmul.f32 %v1141, %v1150
      %v1153 = vmul.f32 %v1143, %v1151
      %v1154 = vpack.c.bf16 %v1153, %v1152
      %1155 = vrot.lane.b32.xlu0 %v389, 104
      %v1156 = vpop.permute.xlu0 %1155
      %1157 = vrot.lane.b32.xlu0 %v390, 104
      %v1158 = vpop.permute.xlu0 %1157
      %1159 = vrot.lane.b32.xlu0 %v391, 104
      %v1160 = vpop.permute.xlu0 %1159
      %v1164 = vsel %vm745, %v1154, 0
      %v1167 = vsel %vm780, %v1160, 0
      %1169 = vmatprep.subr.bf16.mxu0 0
      %1170 = vmatpush1.bf16.msra.mxu0 %v1156
      %1171 = vmatprep.subr.bf16.mxu0 0
      %1172 = vmatpush1.bf16.msra.mxu0 %v1158
      %1173 = vmatprep.subr.bf16.mxu0 0
      %1174 = vmatpush1.bf16.msra.mxu0 %v1167
      %1175 = vmatprep.subr.bf16.mxu0 0
      %1176 = vmatpush1.bf16.msra.mxu0 0
      %1177 = vmatprep.subr.bf16.mxu0 0
      %1178 = vmatpush1.bf16.msra.mxu0 0
      %1179 = vmatprep.subr.bf16.mxu0 0
      %1180 = vmatpush1.bf16.msra.mxu0 0
      %1181 = vmatprep.subr.bf16.mxu0 0
      %1182 = vmatpush1.bf16.msra.mxu0 0
      %1183 = vmatprep.subr.bf16.mxu0 0
      %1184 = vmatpush1.bf16.msra.mxu0 0
      %1185 = vmatprep.subr.bf16.mxu0 0
      %1186 = vmatpush1.bf16.msra.mxu0 0
      %1187 = vmatprep.subr.bf16.mxu0 0
      %1188 = vmatpush1.bf16.msra.mxu0 0
      %1189 = vmatprep.subr.bf16.mxu0 0
      %1190 = vmatpush1.bf16.msra.mxu0 0
      %1191 = vmatprep.subr.bf16.mxu0 0
      %1192 = vmatpush1.bf16.msra.mxu0 0
      %1193 = vmatprep.subr.bf16.mxu0 0
      %1194 = vmatpush1.bf16.msra.mxu0 0
      %1195 = vmatprep.subr.bf16.mxu0 0
      %1196 = vmatpush1.bf16.msra.mxu0 0
      %1197 = vmatprep.subr.bf16.mxu0 0
      %1198 = vmatpush1.bf16.msra.mxu0 0
      %1199 = vmatprep.subr.bf16.mxu0 0
      %1200 = vmatpush1.bf16.msra.mxu0 0
      %1201 = vmatprep.mubr.bf16.mxu0 0
      %1202 = vmatmul.mubr.bf16.gmra.mrb[0].mxu0 %v1164
      %v1203 = vpop.f32.mrb[0].mxu0
      %v1204 = vadd.f32 0.0, %v1203
      %v1205 = vpop.f32.mrb[0].mxu0
      %v1206 = vpop.f32.mrb[0].mxu0
      %v1207 = vadd.f32 0.0, %v1206
      %v1208 = vpop.f32.mrb[0].mxu0
      %1209 = vdwg.mxu0
      %v1210 = vpack.c.bf16 %v1207, %v1204
      %v1212 = vcombine.high %v1210, %v1210
      %v1214 = vunpack.c.l.s4 1983009808
      %v1215 = vunpack.c.0.s8 %v1214
      %v1216 = vlaneseq
      %v1217 = vshrl.u32 %v1216, 7
      %v1218 = vsub.s32 %v1215, %v1217
      %v1219 = vrot.slane %v1210, %v1218
      %v1221 = vunpack.c.l.s4 1983009808
      %v1222 = vunpack.c.0.s8 %v1221
      %v1223 = vlaneseq
      %v1224 = vshrl.u32 %v1223, 7
      %v1225 = vsub.s32 %v1222, %v1224
      %v1226 = vrot.slane %v1212, %v1225
      %v1227 = vcombine.high %v1219, %v1219
      %v1228 = vcombine.high %v1226, %v1226
      %v1230 = vunpack.c.l.s4 1983009808
      %v1231 = vunpack.c.0.s8 %v1230
      %v1232 = vlaneseq
      %v1233 = vshrl.u32 %v1232, 7
      %v1234 = vsub.s32 %v1231, %v1233
      %v1235 = vrot.slane %v1219, %v1234
      %v1237 = vunpack.c.l.s4 1983009808
      %v1238 = vunpack.c.0.s8 %v1237
      %v1239 = vlaneseq
      %v1240 = vshrl.u32 %v1239, 7
      %v1241 = vsub.s32 %v1238, %v1240
      %v1242 = vrot.slane %v1227, %v1241
      %v1244 = vunpack.c.l.s4 1983009808
      %v1245 = vunpack.c.0.s8 %v1244
      %v1246 = vlaneseq
      %v1247 = vshrl.u32 %v1246, 7
      %v1248 = vsub.s32 %v1245, %v1247
      %v1249 = vrot.slane %v1226, %v1248
      %v1251 = vunpack.c.l.s4 1983009808
      %v1252 = vunpack.c.0.s8 %v1251
      %v1253 = vlaneseq
      %v1254 = vshrl.u32 %v1253, 7
      %v1255 = vsub.s32 %v1252, %v1254
      %v1256 = vrot.slane %v1228, %v1255
      %1257 = vrot.lane.b32.xlu0 %v1235, 8
      %v1258 = vpop.permute.xlu0 %1257
      %1259 = vrot.lane.b32.xlu0 %v1242, 8
      %v1260 = vpop.permute.xlu0 %1259
      %1261 = vrot.lane.b32.xlu0 %v1249, 8
      %v1262 = vpop.permute.xlu0 %1261
      %1263 = vrot.lane.b32.xlu0 %v1256, 8
      %v1264 = vpop.permute.xlu0 %1263
      %vm1269 = vcmask 123968
      %1270 = vst.msk [vmem:[%s340] sm:$0x3] %vm1269, %v1258
      %1271 = vst.msk [vmem:[%s340 + $0x4] sm:$0x3] %vm1269, %v1260
      %1272 = vst.msk [vmem:[%s340 + $0x8] sm:$0x3] %vm1269, %v1262
      %1273 = vst.msk [vmem:[%s340 + $0xc] sm:$0x3] %vm1269, %v1264
      %v1275 = vunpack.c.l.s4 1983009808
      %v1276 = vunpack.c.0.s8 %v1275
      %v1277 = vlaneseq
      %v1278 = vshrl.u32 %v1277, 7
      %v1279 = vsub.s32 %v1276, %v1278
      %v1280 = vrot.slane %v343, %v1279
      %v1281 = vcombine.high %v1280, %v1280
      %v1283 = vunpack.c.l.s4 1983009808
      %v1284 = vunpack.c.0.s8 %v1283
      %v1285 = vlaneseq
      %v1286 = vshrl.u32 %v1285, 7
      %v1287 = vsub.s32 %v1284, %v1286
      %v1288 = vrot.slane %v344, %v1287
      %v1289 = vcombine.high %v1288, %v1288
      %v1291 = vunpack.c.l.s4 1983009808
      %v1292 = vunpack.c.0.s8 %v1291
      %v1293 = vlaneseq
      %v1294 = vshrl.u32 %v1293, 7
      %v1295 = vsub.s32 %v1292, %v1294
      %v1296 = vrot.slane %v345, %v1295
      %v1297 = vcombine.high %v1296, %v1296
      %v1299 = vunpack.c.l.s4 1983009808
      %v1300 = vunpack.c.0.s8 %v1299
      %v1301 = vlaneseq
      %v1302 = vshrl.u32 %v1301, 7
      %v1303 = vsub.s32 %v1300, %v1302
      %v1304 = vrot.slane %v346, %v1303
      %v1305 = vcombine.high %v1304, %v1304
      %s1306 = scalar_lea.vmem %s327, 20
      %v1307 = vld [vmem:[%s1306] sm:$0xf]
      %v1308 = vld [vmem:[%s1306 + $0x4] sm:$0xf]
      %v1309 = vld [vmem:[%s1306 + $0x8] sm:$0xf]
      %v1310 = vld [vmem:[%s1306 + $0xc] sm:$0xf]
      %v1311 = vld [vmem:[%s1306 + $0x10] sm:$0x3]
      %s1312 = scalar_lea.vmem %s331, 1
      %v1313 = vld [vmem:[%s1312] sm:$0x1]
      %v1314 = vcombine.low %v1281, %v1289
      %v1315 = vcombine.low %v1297, %v1305
      %v1317 = vunpack.c.l.s4 1983009808
      %v1318 = vunpack.c.0.s8 %v1317
      %v1319 = vlaneseq
      %v1320 = vshrl.u32 %v1319, 7
      %v1321 = vsub.s32 %v1318, %v1320
      %v1322 = vrot.slane %v1314, %v1321
      %v1324 = vunpack.c.l.s4 1983009808
      %v1325 = vunpack.c.0.s8 %v1324
      %v1326 = vlaneseq
      %v1327 = vshrl.u32 %v1326, 7
      %v1328 = vsub.s32 %v1325, %v1327
      %v1329 = vrot.slane %v1315, %v1328
      %v1330 = vcombine.low %v1322, %v1329
      %v1336 = vunpack.c.l.b16 %v1307
      %v1337 = vunpack.c.l.b16 %v1308
      %v1338 = vunpack.c.l.b16 %v1309
      %v1339 = vunpack.c.l.b16 %v1310
      %v1340 = vunpack.c.l.b16 %v1311
      %v1341 = vpack.c.b16 %v1337, %v1336
      %v1342 = vpack.c.b16 %v1339, %v1338
      %v1343 = vpack.c.b16 %v1340, %v1340
      %v1345 = vsel %vm392, %v1330, 0
      %v1348 = vsel %vm392, %v1341, 0
      %v1351 = vsel %vm392, %v1342, 0
      %v1354 = vsel %vm392, %v1343, 0
      %1356 = vmatprep.subr.bf16.mxu0 0
      %1357 = vmatpush1.bf16.xpose.msra.mxu0 %v1348
      %1358 = vmatprep.subr.bf16.mxu0 0
      %1359 = vmatpush1.bf16.xpose.msra.mxu0 %v1351
      %1360 = vmatprep.subr.bf16.mxu0 0
      %1361 = vmatpush1.bf16.xpose.msra.mxu0 %v1354
      %1362 = vmatprep.subr.bf16.mxu0 0
      %1363 = vmatpush1.bf16.xpose.msra.mxu0 0
      %1364 = vmatprep.subr.bf16.mxu0 0
      %1365 = vmatpush1.bf16.xpose.msra.mxu0 0
      %1366 = vmatprep.subr.bf16.mxu0 0
      %1367 = vmatpush1.bf16.xpose.msra.mxu0 0
      %1368 = vmatprep.subr.bf16.mxu0 0
      %1369 = vmatpush1.bf16.xpose.msra.mxu0 0
      %1370 = vmatprep.subr.bf16.mxu0 0
      %1371 = vmatpush1.bf16.xpose.msra.mxu0 0
      %1372 = vmatprep.subr.bf16.mxu0 0
      %1373 = vmatpush1.bf16.xpose.msra.mxu0 0
      %1374 = vmatprep.subr.bf16.mxu0 0
      %1375 = vmatpush1.bf16.xpose.msra.mxu0 0
      %1376 = vmatprep.subr.bf16.mxu0 0
      %1377 = vmatpush1.bf16.xpose.msra.mxu0 0
      %1378 = vmatprep.subr.bf16.mxu0 0
      %1379 = vmatpush1.bf16.xpose.msra.mxu0 0
      %1380 = vmatprep.subr.bf16.mxu0 0
      %1381 = vmatpush1.bf16.xpose.msra.mxu0 0
      %1382 = vmatprep.subr.bf16.mxu0 0
      %1383 = vmatpush1.bf16.xpose.msra.mxu0 0
      %1384 = vmatprep.subr.bf16.mxu0 0
      %1385 = vmatpush1.bf16.xpose.msra.mxu0 0
      %1386 = vmatprep.subr.bf16.mxu0 0
      %1387 = vmatpush1.bf16.xpose.msra.mxu0 0
      %1388 = vmatprep.mubr.bf16.mxu0 0
      %1389 = vmatmul.mubr.bf16.gmra.mrb[0].mxu0 %v1345
      %v1390 = vpop.f32.mrb[0].mxu0
      %v1391 = vadd.f32 0.0, %v1390
      %v1392 = vpop.f32.mrb[0].mxu0
      %v1393 = vpop.f32.mrb[0].mxu0
      %v1394 = vadd.f32 0.0, %v1393
      %v1395 = vpop.f32.mrb[0].mxu0
      %1396 = vdwg.mxu0
      %1397 = vmatprep.subr.bf16.mxu0 0
      %1398 = vmatpush1.bf16.msra.mxu0 %v448
      %1399 = vmatprep.subr.bf16.mxu0 0
      %1400 = vmatpush1.bf16.msra.mxu0 0
      %1401 = vmatprep.subr.bf16.mxu0 0
      %1402 = vmatpush1.bf16.msra.mxu0 0
      %1403 = vmatprep.subr.bf16.mxu0 0
      %1404 = vmatpush1.bf16.msra.mxu0 0
      %1405 = vmatprep.subr.bf16.mxu0 0
      %1406 = vmatpush1.bf16.msra.mxu0 0
      %1407 = vmatprep.subr.bf16.mxu0 0
      %1408 = vmatpush1.bf16.msra.mxu0 0
      %1409 = vmatprep.subr.bf16.mxu0 0
      %1410 = vmatpush1.bf16.msra.mxu0 0
      %1411 = vmatprep.subr.bf16.mxu0 0
      %1412 = vmatpush1.bf16.msra.mxu0 0
      %1413 = vmatprep.subr.bf16.mxu0 0
      %1414 = vmatpush1.bf16.msra.mxu0 0
      %1415 = vmatprep.subr.bf16.mxu0 0
      %1416 = vmatpush1.bf16.msra.mxu0 0
      %1417 = vmatprep.subr.bf16.mxu0 0
      %1418 = vmatpush1.bf16.msra.mxu0 0
      %1419 = vmatprep.subr.bf16.mxu0 0
      %1420 = vmatpush1.bf16.msra.mxu0 0
      %1421 = vmatprep.subr.bf16.mxu0 0
      %1422 = vmatpush1.bf16.msra.mxu0 0
      %1423 = vmatprep.subr.bf16.mxu0 0
      %1424 = vmatpush1.bf16.msra.mxu0 0
      %1425 = vmatprep.subr.bf16.mxu0 0
      %1426 = vmatpush1.bf16.msra.mxu0 0
      %1427 = vmatprep.subr.bf16.mxu0 0
      %1428 = vmatpush1.bf16.msra.mxu0 0
      %1429 = vmatprep.mubr.bf16.mxu0 0
      %1430 = vmatmul.mubr.bf16.gmra.mrb[0].mxu0 %v1345
      %v1431 = vpop.f32.mrb[0].mxu0
      %v1432 = vadd.f32 0.0, %v1431
      %v1433 = vpop.f32.mrb[0].mxu0
      %v1434 = vpop.f32.mrb[0].mxu0
      %v1435 = vadd.f32 0.0, %v1434
      %v1436 = vpop.f32.mrb[0].mxu0
      %1437 = vdwg.mxu0
      %v1438 = vmul.f32 %v1432, %v494
      %v1439 = vmul.f32 %v1435, %v499
      %v1440 = vadd.f32 %v1438, 0.0
      %v1441 = vadd.f32 %v1439, 0.0
      %v1442 = vmul.f32 %v1432, %v507
      %v1443 = vmul.f32 %v1435, %v511
      %v1444 = vadd.f32 %v1442, 0.0
      %v1445 = vadd.f32 %v1443, 0.0
      %v1446 = vmul.f32 %v1432, %v519
      %v1447 = vmul.f32 %v1435, %v523
      %1450 = vrot.lane.b32.xlu0 %v1446, 122
      %v1451 = vpop.permute.xlu0 %1450
      %1452 = vrot.lane.b32.xlu0 %v1447, 122
      %v1453 = vpop.permute.xlu0 %1452
      %v1456 = vadd.f32 %v1440, %v1451
      %v1457 = vadd.f32 %v1441, %v1453
      %v1458 = vmul.f32 %v1432, %v539
      %v1459 = vmul.f32 %v1435, %v543
      %1462 = vrot.lane.b32.xlu0 %v1458, 122
      %v1463 = vpop.permute.xlu0 %1462
      %1464 = vrot.lane.b32.xlu0 %v1459, 122
      %v1465 = vpop.permute.xlu0 %1464
      %v1468 = vadd.f32 %v1444, %v1463
      %v1469 = vadd.f32 %v1445, %v1465
      %v1470 = vmul.f32 %v1432, %v559
      %v1471 = vmul.f32 %v1435, %v563
      %1474 = vrot.lane.b32.xlu0 %v1470, 116
      %v1475 = vpop.permute.xlu0 %1474
      %1476 = vrot.lane.b32.xlu0 %v1471, 116
      %v1477 = vpop.permute.xlu0 %1476
      %v1480 = vadd.f32 %v1456, %v1475
      %v1481 = vadd.f32 %v1457, %v1477
      %v1482 = vmul.f32 %v1432, %v579
      %v1483 = vmul.f32 %v1435, %v583
      %1486 = vrot.lane.b32.xlu0 %v1482, 116
      %v1487 = vpop.permute.xlu0 %1486
      %1488 = vrot.lane.b32.xlu0 %v1483, 116
      %v1489 = vpop.permute.xlu0 %1488
      %v1492 = vadd.f32 %v1468, %v1487
      %v1493 = vadd.f32 %v1469, %v1489
      %v1494 = vmul.f32 %v1432, %v599
      %v1495 = vmul.f32 %v1435, %v603
      %1498 = vrot.lane.b32.xlu0 %v1494, 110
      %v1499 = vpop.permute.xlu0 %1498
      %1500 = vrot.lane.b32.xlu0 %v1495, 110
      %v1501 = vpop.permute.xlu0 %1500
      %v1504 = vadd.f32 %v1480, %v1499
      %v1505 = vadd.f32 %v1481, %v1501
      %v1506 = vmul.f32 %v1432, %v619
      %v1507 = vmul.f32 %v1435, %v623
      %1510 = vrot.lane.b32.xlu0 %v1506, 110
      %v1511 = vpop.permute.xlu0 %1510
      %1512 = vrot.lane.b32.xlu0 %v1507, 110
      %v1513 = vpop.permute.xlu0 %1512
      %v1516 = vadd.f32 %v1492, %v1511
      %v1517 = vadd.f32 %v1493, %v1513
      %1520 = vrot.lane.b32.xlu0 %v1516, 110
      %v1521 = vpop.permute.xlu0 %1520
      %1522 = vrot.lane.b32.xlu0 %v1517, 110
      %v1523 = vpop.permute.xlu0 %1522
      %v1526 = vsel %vm645, %v1504, %v1521
      %v1527 = vsel %vm645, %v1505, %v1523
      %v1529 = vsel %vm648, %v1526, 0
      %v1532 = vsel %vm648, %v1527, 0
      %1534 = vmatprep.subr.mxu0 0.0
      %1535 = vmatpush1.msra.mxu0 %v350
      %1536 = vmatprep.subr.mxu0 0.0
      %1537 = vmatpush1.msra.mxu0 %v656
      %1538 = vmatprep.subr.mxu0 0.0
      %1539 = vmatpush1.msra.mxu0 0.0
      %1540 = vmatprep.subr.mxu0 0.0
      %1541 = vmatpush1.msra.mxu0 0.0
      %1542 = vmatprep.subr.mxu0 0.0
      %1543 = vmatpush1.msra.mxu0 0.0
      %1544 = vmatprep.subr.mxu0 0.0
      %1545 = vmatpush1.msra.mxu0 0.0
      %1546 = vmatprep.subr.mxu0 0.0
      %1547 = vmatpush1.msra.mxu0 0.0
      %1548 = vmatprep.subr.mxu0 0.0
      %1549 = vmatpush1.msra.mxu0 0.0
      %1550 = vmatprep.subr.mxu0 0.0
      %1551 = vmatpush1.msra.mxu0 0.0
      %1552 = vmatprep.subr.mxu0 0.0
      %1553 = vmatpush1.msra.mxu0 0.0
      %1554 = vmatprep.subr.mxu0 0.0
      %1555 = vmatpush1.msra.mxu0 0.0
      %1556 = vmatprep.subr.mxu0 0.0
      %1557 = vmatpush1.msra.mxu0 0.0
      %1558 = vmatprep.subr.mxu0 0.0
      %1559 = vmatpush1.msra.mxu0 0.0
      %1560 = vmatprep.subr.mxu0 0.0
      %1561 = vmatpush1.msra.mxu0 0.0
      %1562 = vmatprep.subr.mxu0 0.0
      %1563 = vmatpush1.msra.mxu0 0.0
      %1564 = vmatprep.subr.mxu0 0.0
      %1565 = vmatpush1.msra.mxu0 0.0
      %1566 = vmatprep.subr.mxu0 0.0
      %1567 = vmatpush1.msra.mxu0 0.0
      %1568 = vmatprep.subr.mxu0 0.0
      %1569 = vmatpush1.msra.mxu0 0.0
      %1570 = vmatprep.subr.mxu0 0.0
      %1571 = vmatpush1.msra.mxu0 0.0
      %1572 = vmatprep.subr.mxu0 0.0
      %1573 = vmatpush1.msra.mxu0 0.0
      %1574 = vmatprep.subr.mxu0 0.0
      %1575 = vmatpush1.msra.mxu0 0.0
      %1576 = vmatprep.subr.mxu0 0.0
      %1577 = vmatpush1.msra.mxu0 0.0
      %1578 = vmatprep.subr.mxu0 0.0
      %1579 = vmatpush1.msra.mxu0 0.0
      %1580 = vmatprep.subr.mxu0 0.0
      %1581 = vmatpush1.msra.mxu0 0.0
      %1582 = vmatprep.subr.mxu0 0.0
      %1583 = vmatpush1.msra.mxu0 0.0
      %1584 = vmatprep.subr.mxu0 0.0
      %1585 = vmatpush1.msra.mxu0 0.0
      %1586 = vmatprep.subr.mxu0 0.0
      %1587 = vmatpush1.msra.mxu0 0.0
      %1588 = vmatprep.subr.mxu0 0.0
      %1589 = vmatpush1.msra.mxu0 0.0
      %1590 = vmatprep.subr.mxu0 0.0
      %1591 = vmatpush1.msra.mxu0 0.0
      %1592 = vmatprep.subr.mxu0 0.0
      %1593 = vmatpush1.msra.mxu0 0.0
      %1594 = vmatprep.subr.mxu0 0.0
      %1595 = vmatpush1.msra.mxu0 0.0
      %1596 = vmatprep.subr.mxu0 0.0
      %1597 = vmatpush1.msra.mxu0 0.0
      %1598 = vmatprep.mubr.f32.mxu0 0.0
      %1599 = vmatmul.mubr.f32.gmra.mrb[0].mxu0 %v1529
      %v1600 = vpop.f32.mrb[0].mxu0
      %v1601 = vadd.f32 0.0, %v1600
      %v1602 = vpop.f32.mrb[0].mxu0
      %1603 = vmatprep.mubr.f32.mxu0 0.0
      %1604 = vmatmul.mubr.f32.gmra.mrb[0].mxu0 %v1532
      %v1605 = vpop.f32.mrb[0].mxu0
      %v1606 = vadd.f32 0.0, %v1605
      %v1607 = vpop.f32.mrb[0].mxu0
      %1608 = vdwg.mxu0
      %v1609 = vmul.f32 %v1391, 0.35355338
      %v1610 = vmul.f32 %v1394, 0.35355338
      %v1611 = vadd.f32 %v1609, %v1601
      %v1612 = vadd.f32 %v1610, %v1606
      %v1614 = vlaneseq
      %v1615 = vshrl.u32 %v1614, 7
      %v1616 = vsub.s32 0, %v1615
      %v1617 = vrot.slane %v1313, %v1616
      %v1619 = vadd.f32 %v1611, %v1617
      %v1620 = vadd.f32 %v1612, %v1617
      %v1621 = vsel %vm745, %v1619, -inf
      %1622 = vmax.xlane.f32.xlu0 %v1621
      %v1623 = vpop.xlane.xlu0 %1622
      %v1624 = vsel %vm745, %v1620, -inf
      %1625 = vmax.xlane.f32.xlu0 %v1624
      %v1626 = vpop.xlane.xlu0 %1625
      %v1627 = vsub.f32 %v1619, %v1623
      %v1628 = vsub.f32 %v1620, %v1626
      %v1629 = vmul.f32 %v1627, 1.442695
      %v1630 = vpow.pop %v1629
      %v1631 = vmul.f32 %v1628, 1.442695
      %v1632 = vpow.pop %v1631
      %v1633 = vsel %vm745, %v1630, 0.0
      %1634 = vadd.xlane.f32.xlu0 %v1633
      %v1635 = vpop.xlane.xlu0 %1634
      %v1636 = vsel %vm745, %v1632, 0.0
      %1637 = vadd.xlane.f32.xlu0 %v1636
      %v1638 = vpop.xlane.xlu0 %1637
      %v1639 = vrcp.pop %v1635
      %v1640 = vrcp.pop %v1638
      %v1641 = vmul.f32 %v1630, %v1639
      %v1642 = vmul.f32 %v1632, %v1640
      %v1643 = vpack.c.bf16 %v1642, %v1641
      %1644 = vrot.lane.b32.xlu0 %v1341, 120
      %v1645 = vpop.permute.xlu0 %1644
      %1646 = vrot.lane.b32.xlu0 %v1342, 120
      %v1647 = vpop.permute.xlu0 %1646
      %1648 = vrot.lane.b32.xlu0 %v1343, 120
      %v1649 = vpop.permute.xlu0 %1648
      %v1653 = vsel %vm745, %v1643, 0
      %v1656 = vsel %vm780, %v1649, 0
      %1658 = vmatprep.subr.bf16.mxu0 0
      %1659 = vmatpush1.bf16.msra.mxu0 %v1645
      %1660 = vmatprep.subr.bf16.mxu0 0
      %1661 = vmatpush1.bf16.msra.mxu0 %v1647
      %1662 = vmatprep.subr.bf16.mxu0 0
      %1663 = vmatpush1.bf16.msra.mxu0 %v1656
      %1664 = vmatprep.subr.bf16.mxu0 0
      %1665 = vmatpush1.bf16.msra.mxu0 0
      %1666 = vmatprep.subr.bf16.mxu0 0
      %1667 = vmatpush1.bf16.msra.mxu0 0
      %1668 = vmatprep.subr.bf16.mxu0 0
      %1669 = vmatpush1.bf16.msra.mxu0 0
      %1670 = vmatprep.subr.bf16.mxu0 0
      %1671 = vmatpush1.bf16.msra.mxu0 0
      %1672 = vmatprep.subr.bf16.mxu0 0
      %1673 = vmatpush1.bf16.msra.mxu0 0
      %1674 = vmatprep.subr.bf16.mxu0 0
      %1675 = vmatpush1.bf16.msra.mxu0 0
      %1676 = vmatprep.subr.bf16.mxu0 0
      %1677 = vmatpush1.bf16.msra.mxu0 0
      %1678 = vmatprep.subr.bf16.mxu0 0
      %1679 = vmatpush1.bf16.msra.mxu0 0
      %1680 = vmatprep.subr.bf16.mxu0 0
      %1681 = vmatpush1.bf16.msra.mxu0 0
      %1682 = vmatprep.subr.bf16.mxu0 0
      %1683 = vmatpush1.bf16.msra.mxu0 0
      %1684 = vmatprep.subr.bf16.mxu0 0
      %1685 = vmatpush1.bf16.msra.mxu0 0
      %1686 = vmatprep.subr.bf16.mxu0 0
      %1687 = vmatpush1.bf16.msra.mxu0 0
      %1688 = vmatprep.subr.bf16.mxu0 0
      %1689 = vmatpush1.bf16.msra.mxu0 0
      %1690 = vmatprep.mubr.bf16.mxu0 0
      %1691 = vmatmul.mubr.bf16.gmra.mrb[0].mxu0 %v1653
      %v1692 = vpop.f32.mrb[0].mxu0
      %v1693 = vadd.f32 0.0, %v1692
      %v1694 = vpop.f32.mrb[0].mxu0
      %v1695 = vpop.f32.mrb[0].mxu0
      %v1696 = vadd.f32 0.0, %v1695
      %v1697 = vpop.f32.mrb[0].mxu0
      %1698 = vdwg.mxu0
      %v1699 = vpack.c.bf16 %v1696, %v1693
      %v1701 = vcombine.high %v1699, %v1699
      %v1703 = vunpack.c.l.s4 1983009808
      %v1704 = vunpack.c.0.s8 %v1703
      %v1705 = vlaneseq
      %v1706 = vshrl.u32 %v1705, 7
      %v1707 = vsub.s32 %v1704, %v1706
      %v1708 = vrot.slane %v1699, %v1707
      %v1710 = vunpack.c.l.s4 1983009808
      %v1711 = vunpack.c.0.s8 %v1710
      %v1712 = vlaneseq
      %v1713 = vshrl.u32 %v1712, 7
      %v1714 = vsub.s32 %v1711, %v1713
      %v1715 = vrot.slane %v1701, %v1714
      %v1716 = vcombine.high %v1708, %v1708
      %v1717 = vcombine.high %v1715, %v1715
      %v1718 = vcombine.low %v1708, %v1708
      %v1720 = vunpack.c.l.s4 1983009808
      %v1721 = vunpack.c.0.s8 %v1720
      %v1722 = vlaneseq
      %v1723 = vshrl.u32 %v1722, 7
      %v1724 = vsub.s32 %v1721, %v1723
      %v1725 = vrot.slane %v1718, %v1724
      %v1726 = vcombine.low %v1716, %v1716
      %v1728 = vunpack.c.l.s4 1983009808
      %v1729 = vunpack.c.0.s8 %v1728
      %v1730 = vlaneseq
      %v1731 = vshrl.u32 %v1730, 7
      %v1732 = vsub.s32 %v1729, %v1731
      %v1733 = vrot.slane %v1726, %v1732
      %v1734 = vcombine.low %v1715, %v1715
      %v1736 = vunpack.c.l.s4 1983009808
      %v1737 = vunpack.c.0.s8 %v1736
      %v1738 = vlaneseq
      %v1739 = vshrl.u32 %v1738, 7
      %v1740 = vsub.s32 %v1737, %v1739
      %v1741 = vrot.slane %v1734, %v1740
      %v1742 = vcombine.low %v1717, %v1717
      %v1744 = vunpack.c.l.s4 1983009808
      %v1745 = vunpack.c.0.s8 %v1744
      %v1746 = vlaneseq
      %v1747 = vshrl.u32 %v1746, 7
      %v1748 = vsub.s32 %v1745, %v1747
      %v1749 = vrot.slane %v1742, %v1748
      %vm1754 = vcmask 60418
      %1755 = vst.msk [vmem:[%s340] sm:$0xc] %vm1754, %v1725
      %1756 = vst.msk [vmem:[%s340 + $0x4] sm:$0xc] %vm1754, %v1733
      %1757 = vst.msk [vmem:[%s340 + $0x8] sm:$0xc] %vm1754, %v1741
      %1758 = vst.msk [vmem:[%s340 + $0xc] sm:$0xc] %vm1754, %v1749
      %1759 = vrot.lane.b32.xlu0 %v1330, 120
      %v1760 = vpop.permute.xlu0 %1759
      %1761 = vrot.lane.b32.xlu0 %v1341, 112
      %v1762 = vpop.permute.xlu0 %1761
      %1763 = vrot.lane.b32.xlu0 %v1342, 112
      %v1764 = vpop.permute.xlu0 %1763
      %1765 = vrot.lane.b32.xlu0 %v1343, 112
      %v1766 = vpop.permute.xlu0 %1765
      %v1768 = vsel %vm392, %v1760, 0
      %v1771 = vsel %vm392, %v1762, 0
      %v1774 = vsel %vm392, %v1764, 0
      %v1777 = vsel %vm392, %v1766, 0
      %1779 = vmatprep.subr.bf16.mxu0 0
      %1780 = vmatpush1.bf16.xpose.msra.mxu0 %v1771
      %1781 = vmatprep.subr.bf16.mxu0 0
      %1782 = vmatpush1.bf16.xpose.msra.mxu0 %v1774
      %1783 = vmatprep.subr.bf16.mxu0 0
      %1784 = vmatpush1.bf16.xpose.msra.mxu0 %v1777
      %1785 = vmatprep.subr.bf16.mxu0 0
      %1786 = vmatpush1.bf16.xpose.msra.mxu0 0
      %1787 = vmatprep.subr.bf16.mxu0 0
      %1788 = vmatpush1.bf16.xpose.msra.mxu0 0
      %1789 = vmatprep.subr.bf16.mxu0 0
      %1790 = vmatpush1.bf16.xpose.msra.mxu0 0
      %1791 = vmatprep.subr.bf16.mxu0 0
      %1792 = vmatpush1.bf16.xpose.msra.mxu0 0
      %1793 = vmatprep.subr.bf16.mxu0 0
      %1794 = vmatpush1.bf16.xpose.msra.mxu0 0
      %1795 = vmatprep.subr.bf16.mxu0 0
      %1796 = vmatpush1.bf16.xpose.msra.mxu0 0
      %1797 = vmatprep.subr.bf16.mxu0 0
      %1798 = vmatpush1.bf16.xpose.msra.mxu0 0
      %1799 = vmatprep.subr.bf16.mxu0 0
      %1800 = vmatpush1.bf16.xpose.msra.mxu0 0
      %1801 = vmatprep.subr.bf16.mxu0 0
      %1802 = vmatpush1.bf16.xpose.msra.mxu0 0
      %1803 = vmatprep.subr.bf16.mxu0 0
      %1804 = vmatpush1.bf16.xpose.msra.mxu0 0
      %1805 = vmatprep.subr.bf16.mxu0 0
      %1806 = vmatpush1.bf16.xpose.msra.mxu0 0
      %1807 = vmatprep.subr.bf16.mxu0 0
      %1808 = vmatpush1.bf16.xpose.msra.mxu0 0
      %1809 = vmatprep.subr.bf16.mxu0 0
      %1810 = vmatpush1.bf16.xpose.msra.mxu0 0
      %1811 = vmatprep.mubr.bf16.mxu0 0
      %1812 = vmatmul.mubr.bf16.gmra.mrb[0].mxu0 %v1768
      %v1813 = vpop.f32.mrb[0].mxu0
      %v1814 = vadd.f32 0.0, %v1813
      %v1815 = vpop.f32.mrb[0].mxu0
      %v1816 = vpop.f32.mrb[0].mxu0
      %v1817 = vadd.f32 0.0, %v1816
      %v1818 = vpop.f32.mrb[0].mxu0
      %1819 = vdwg.mxu0
      %1820 = vmatprep.subr.bf16.mxu0 0
      %1821 = vmatpush1.bf16.msra.mxu0 %v448
      %1822 = vmatprep.subr.bf16.mxu0 0
      %1823 = vmatpush1.bf16.msra.mxu0 0
      %1824 = vmatprep.subr.bf16.mxu0 0
      %1825 = vmatpush1.bf16.msra.mxu0 0
      %1826 = vmatprep.subr.bf16.mxu0 0
      %1827 = vmatpush1.bf16.msra.mxu0 0
      %1828 = vmatprep.subr.bf16.mxu0 0
      %1829 = vmatpush1.bf16.msra.mxu0 0
      %1830 = vmatprep.subr.bf16.mxu0 0
      %1831 = vmatpush1.bf16.msra.mxu0 0
      %1832 = vmatprep.subr.bf16.mxu0 0
      %1833 = vmatpush1.bf16.msra.mxu0 0
      %1834 = vmatprep.subr.bf16.mxu0 0
      %1835 = vmatpush1.bf16.msra.mxu0 0
      %1836 = vmatprep.subr.bf16.mxu0 0
      %1837 = vmatpush1.bf16.msra.mxu0 0
      %1838 = vmatprep.subr.bf16.mxu0 0
      %1839 = vmatpush1.bf16.msra.mxu0 0
      %1840 = vmatprep.subr.bf16.mxu0 0
      %1841 = vmatpush1.bf16.msra.mxu0 0
      %1842 = vmatprep.subr.bf16.mxu0 0
      %1843 = vmatpush1.bf16.msra.mxu0 0
      %1844 = vmatprep.subr.bf16.mxu0 0
      %1845 = vmatpush1.bf16.msra.mxu0 0
      %1846 = vmatprep.subr.bf16.mxu0 0
      %1847 = vmatpush1.bf16.msra.mxu0 0
      %1848 = vmatprep.subr.bf16.mxu0 0
      %1849 = vmatpush1.bf16.msra.mxu0 0
      %1850 = vmatprep.subr.bf16.mxu0 0
      %1851 = vmatpush1.bf16.msra.mxu0 0
      %1852 = vmatprep.mubr.bf16.mxu0 0
      %1853 = vmatmul.mubr.bf16.gmra.mrb[0].mxu0 %v1768
      %v1854 = vpop.f32.mrb[0].mxu0
      %v1855 = vadd.f32 0.0, %v1854
      %v1856 = vpop.f32.mrb[0].mxu0
      %v1857 = vpop.f32.mrb[0].mxu0
      %v1858 = vadd.f32 0.0, %v1857
      %v1859 = vpop.f32.mrb[0].mxu0
      %1860 = vdwg.mxu0
      %v1861 = vmul.f32 %v1855, %v494
      %v1862 = vmul.f32 %v1858, %v499
      %v1863 = vadd.f32 %v1861, 0.0
      %v1864 = vadd.f32 %v1862, 0.0
      %v1865 = vmul.f32 %v1855, %v507
      %v1866 = vmul.f32 %v1858, %v511
      %v1867 = vadd.f32 %v1865, 0.0
      %v1868 = vadd.f32 %v1866, 0.0
      %v1869 = vmul.f32 %v1855, %v519
      %v1870 = vmul.f32 %v1858, %v523
      %1873 = vrot.lane.b32.xlu0 %v1869, 122
      %v1874 = vpop.permute.xlu0 %1873
      %1875 = vrot.lane.b32.xlu0 %v1870, 122
      %v1876 = vpop.permute.xlu0 %1875
      %v1879 = vadd.f32 %v1863, %v1874
      %v1880 = vadd.f32 %v1864, %v1876
      %v1881 = vmul.f32 %v1855, %v539
      %v1882 = vmul.f32 %v1858, %v543
      %1885 = vrot.lane.b32.xlu0 %v1881, 122
      %v1886 = vpop.permute.xlu0 %1885
      %1887 = vrot.lane.b32.xlu0 %v1882, 122
      %v1888 = vpop.permute.xlu0 %1887
      %v1891 = vadd.f32 %v1867, %v1886
      %v1892 = vadd.f32 %v1868, %v1888
      %v1893 = vmul.f32 %v1855, %v559
      %v1894 = vmul.f32 %v1858, %v563
      %1897 = vrot.lane.b32.xlu0 %v1893, 116
      %v1898 = vpop.permute.xlu0 %1897
      %1899 = vrot.lane.b32.xlu0 %v1894, 116
      %v1900 = vpop.permute.xlu0 %1899
      %v1903 = vadd.f32 %v1879, %v1898
      %v1904 = vadd.f32 %v1880, %v1900
      %v1905 = vmul.f32 %v1855, %v579
      %v1906 = vmul.f32 %v1858, %v583
      %1909 = vrot.lane.b32.xlu0 %v1905, 116
      %v1910 = vpop.permute.xlu0 %1909
      %1911 = vrot.lane.b32.xlu0 %v1906, 116
      %v1912 = vpop.permute.xlu0 %1911
      %v1915 = vadd.f32 %v1891, %v1910
      %v1916 = vadd.f32 %v1892, %v1912
      %v1917 = vmul.f32 %v1855, %v599
      %v1918 = vmul.f32 %v1858, %v603
      %1921 = vrot.lane.b32.xlu0 %v1917, 110
      %v1922 = vpop.permute.xlu0 %1921
      %1923 = vrot.lane.b32.xlu0 %v1918, 110
      %v1924 = vpop.permute.xlu0 %1923
      %v1927 = vadd.f32 %v1903, %v1922
      %v1928 = vadd.f32 %v1904, %v1924
      %v1929 = vmul.f32 %v1855, %v619
      %v1930 = vmul.f32 %v1858, %v623
      %1933 = vrot.lane.b32.xlu0 %v1929, 110
      %v1934 = vpop.permute.xlu0 %1933
      %1935 = vrot.lane.b32.xlu0 %v1930, 110
      %v1936 = vpop.permute.xlu0 %1935
      %v1939 = vadd.f32 %v1915, %v1934
      %v1940 = vadd.f32 %v1916, %v1936
      %1943 = vrot.lane.b32.xlu0 %v1939, 110
      %v1944 = vpop.permute.xlu0 %1943
      %1945 = vrot.lane.b32.xlu0 %v1940, 110
      %v1946 = vpop.permute.xlu0 %1945
      %v1949 = vsel %vm645, %v1927, %v1944
      %v1950 = vsel %vm645, %v1928, %v1946
      %v1952 = vsel %vm648, %v1949, 0
      %v1955 = vsel %vm648, %v1950, 0
      %1957 = vmatprep.subr.mxu0 0.0
      %1958 = vmatpush1.msra.mxu0 %v350
      %1959 = vmatprep.subr.mxu0 0.0
      %1960 = vmatpush1.msra.mxu0 %v656
      %1961 = vmatprep.subr.mxu0 0.0
      %1962 = vmatpush1.msra.mxu0 0.0
      %1963 = vmatprep.subr.mxu0 0.0
      %1964 = vmatpush1.msra.mxu0 0.0
      %1965 = vmatprep.subr.mxu0 0.0
      %1966 = vmatpush1.msra.mxu0 0.0
      %1967 = vmatprep.subr.mxu0 0.0
      %1968 = vmatpush1.msra.mxu0 0.0
      %1969 = vmatprep.subr.mxu0 0.0
      %1970 = vmatpush1.msra.mxu0 0.0
      %1971 = vmatprep.subr.mxu0 0.0
      %1972 = vmatpush1.msra.mxu0 0.0
      %1973 = vmatprep.subr.mxu0 0.0
      %1974 = vmatpush1.msra.mxu0 0.0
      %1975 = vmatprep.subr.mxu0 0.0
      %1976 = vmatpush1.msra.mxu0 0.0
      %1977 = vmatprep.subr.mxu0 0.0
      %1978 = vmatpush1.msra.mxu0 0.0
      %1979 = vmatprep.subr.mxu0 0.0
      %1980 = vmatpush1.msra.mxu0 0.0
      %1981 = vmatprep.subr.mxu0 0.0
      %1982 = vmatpush1.msra.mxu0 0.0
      %1983 = vmatprep.subr.mxu0 0.0
      %1984 = vmatpush1.msra.mxu0 0.0
      %1985 = vmatprep.subr.mxu0 0.0
      %1986 = vmatpush1.msra.mxu0 0.0
      %1987 = vmatprep.subr.mxu0 0.0
      %1988 = vmatpush1.msra.mxu0 0.0
      %1989 = vmatprep.subr.mxu0 0.0
      %1990 = vmatpush1.msra.mxu0 0.0
      %1991 = vmatprep.subr.mxu0 0.0
      %1992 = vmatpush1.msra.mxu0 0.0
      %1993 = vmatprep.subr.mxu0 0.0
      %1994 = vmatpush1.msra.mxu0 0.0
      %1995 = vmatprep.subr.mxu0 0.0
      %1996 = vmatpush1.msra.mxu0 0.0
      %1997 = vmatprep.subr.mxu0 0.0
      %1998 = vmatpush1.msra.mxu0 0.0
      %1999 = vmatprep.subr.mxu0 0.0
      %2000 = vmatpush1.msra.mxu0 0.0
      %2001 = vmatprep.subr.mxu0 0.0
      %2002 = vmatpush1.msra.mxu0 0.0
      %2003 = vmatprep.subr.mxu0 0.0
      %2004 = vmatpush1.msra.mxu0 0.0
      %2005 = vmatprep.subr.mxu0 0.0
      %2006 = vmatpush1.msra.mxu0 0.0
      %2007 = vmatprep.subr.mxu0 0.0
      %2008 = vmatpush1.msra.mxu0 0.0
      %2009 = vmatprep.subr.mxu0 0.0
      %2010 = vmatpush1.msra.mxu0 0.0
      %2011 = vmatprep.subr.mxu0 0.0
      %2012 = vmatpush1.msra.mxu0 0.0
      %2013 = vmatprep.subr.mxu0 0.0
      %2014 = vmatpush1.msra.mxu0 0.0
      %2015 = vmatprep.subr.mxu0 0.0
      %2016 = vmatpush1.msra.mxu0 0.0
      %2017 = vmatprep.subr.mxu0 0.0
      %2018 = vmatpush1.msra.mxu0 0.0
      %2019 = vmatprep.subr.mxu0 0.0
      %2020 = vmatpush1.msra.mxu0 0.0
      %2021 = vmatprep.mubr.f32.mxu0 0.0
      %2022 = vmatmul.mubr.f32.gmra.mrb[0].mxu0 %v1952
      %v2023 = vpop.f32.mrb[0].mxu0
      %v2024 = vadd.f32 0.0, %v2023
      %v2025 = vpop.f32.mrb[0].mxu0
      %2026 = vmatprep.mubr.f32.mxu0 0.0
      %2027 = vmatmul.mubr.f32.gmra.mrb[0].mxu0 %v1955
      %v2028 = vpop.f32.mrb[0].mxu0
      %v2029 = vadd.f32 0.0, %v2028
      %v2030 = vpop.f32.mrb[0].mxu0
      %2031 = vdwg.mxu0
      %v2032 = vmul.f32 %v1814, 0.35355338
      %v2033 = vmul.f32 %v1817, 0.35355338
      %v2034 = vadd.f32 %v2032, %v2024
      %v2035 = vadd.f32 %v2033, %v2029
      %v2036 = vadd.f32 %v2034, %v1617
      %v2037 = vadd.f32 %v2035, %v1617
      %v2038 = vsel %vm745, %v2036, -inf
      %2039 = vmax.xlane.f32.xlu0 %v2038
      %v2040 = vpop.xlane.xlu0 %2039
      %v2041 = vsel %vm745, %v2037, -inf
      %2042 = vmax.xlane.f32.xlu0 %v2041
      %v2043 = vpop.xlane.xlu0 %2042
      %v2044 = vsub.f32 %v2036, %v2040
      %v2045 = vsub.f32 %v2037, %v2043
      %v2046 = vmul.f32 %v2044, 1.442695
      %v2047 = vpow.pop %v2046
      %v2048 = vmul.f32 %v2045, 1.442695
      %v2049 = vpow.pop %v2048
      %v2050 = vsel %vm745, %v2047, 0.0
      %2051 = vadd.xlane.f32.xlu0 %v2050
      %v2052 = vpop.xlane.xlu0 %2051
      %v2053 = vsel %vm745, %v2049, 0.0
      %2054 = vadd.xlane.f32.xlu0 %v2053
      %v2055 = vpop.xlane.xlu0 %2054
      %v2056 = vrcp.pop %v2052
      %v2057 = vrcp.pop %v2055
      %v2058 = vmul.f32 %v2047, %v2056
      %v2059 = vmul.f32 %v2049, %v2057
      %v2060 = vpack.c.bf16 %v2059, %v2058
      %2061 = vrot.lane.b32.xlu0 %v1341, 104
      %v2062 = vpop.permute.xlu0 %2061
      %2063 = vrot.lane.b32.xlu0 %v1342, 104
      %v2064 = vpop.permute.xlu0 %2063
      %2065 = vrot.lane.b32.xlu0 %v1343, 104
      %v2066 = vpop.permute.xlu0 %2065
      %v2070 = vsel %vm745, %v2060, 0
      %v2073 = vsel %vm780, %v2066, 0
      %2075 = vmatprep.subr.bf16.mxu0 0
      %2076 = vmatpush1.bf16.msra.mxu0 %v2062
      %2077 = vmatprep.subr.bf16.mxu0 0
      %2078 = vmatpush1.bf16.msra.mxu0 %v2064
      %2079 = vmatprep.subr.bf16.mxu0 0
      %2080 = vmatpush1.bf16.msra.mxu0 %v2073
      %2081 = vmatprep.subr.bf16.mxu0 0
      %2082 = vmatpush1.bf16.msra.mxu0 0
      %2083 = vmatprep.subr.bf16.mxu0 0
      %2084 = vmatpush1.bf16.msra.mxu0 0
      %2085 = vmatprep.subr.bf16.mxu0 0
      %2086 = vmatpush1.bf16.msra.mxu0 0
      %2087 = vmatprep.subr.bf16.mxu0 0
      %2088 = vmatpush1.bf16.msra.mxu0 0
      %2089 = vmatprep.subr.bf16.mxu0 0
      %2090 = vmatpush1.bf16.msra.mxu0 0
      %2091 = vmatprep.subr.bf16.mxu0 0
      %2092 = vmatpush1.bf16.msra.mxu0 0
      %2093 = vmatprep.subr.bf16.mxu0 0
      %2094 = vmatpush1.bf16.msra.mxu0 0
      %2095 = vmatprep.subr.bf16.mxu0 0
      %2096 = vmatpush1.bf16.msra.mxu0 0
      %2097 = vmatprep.subr.bf16.mxu0 0
      %2098 = vmatpush1.bf16.msra.mxu0 0
      %2099 = vmatprep.subr.bf16.mxu0 0
      %2100 = vmatpush1.bf16.msra.mxu0 0
      %2101 = vmatprep.subr.bf16.mxu0 0
      %2102 = vmatpush1.bf16.msra.mxu0 0
      %2103 = vmatprep.subr.bf16.mxu0 0
      %2104 = vmatpush1.bf16.msra.mxu0 0
      %2105 = vmatprep.subr.bf16.mxu0 0
      %2106 = vmatpush1.bf16.msra.mxu0 0
      %2107 = vmatprep.mubr.bf16.mxu0 0
      %2108 = vmatmul.mubr.bf16.gmra.mrb[0].mxu0 %v2070
      %v2109 = vpop.f32.mrb[0].mxu0
      %v2110 = vadd.f32 0.0, %v2109
      %v2111 = vpop.f32.mrb[0].mxu0
      %v2112 = vpop.f32.mrb[0].mxu0
      %v2113 = vadd.f32 0.0, %v2112
      %v2114 = vpop.f32.mrb[0].mxu0
      %2115 = vdwg.mxu0
      %v2116 = vpack.c.bf16 %v2113, %v2110
      %v2118 = vcombine.high %v2116, %v2116
      %v2120 = vunpack.c.l.s4 1983009808
      %v2121 = vunpack.c.0.s8 %v2120
      %v2122 = vlaneseq
      %v2123 = vshrl.u32 %v2122, 7
      %v2124 = vsub.s32 %v2121, %v2123
      %v2125 = vrot.slane %v2116, %v2124
      %v2127 = vunpack.c.l.s4 1983009808
      %v2128 = vunpack.c.0.s8 %v2127
      %v2129 = vlaneseq
      %v2130 = vshrl.u32 %v2129, 7
      %v2131 = vsub.s32 %v2128, %v2130
      %v2132 = vrot.slane %v2118, %v2131
      %v2133 = vcombine.high %v2125, %v2125
      %v2134 = vcombine.high %v2132, %v2132
      %v2135 = vcombine.low %v2125, %v2125
      %v2137 = vunpack.c.l.s4 1983009808
      %v2138 = vunpack.c.0.s8 %v2137
      %v2139 = vlaneseq
      %v2140 = vshrl.u32 %v2139, 7
      %v2141 = vsub.s32 %v2138, %v2140
      %v2142 = vrot.slane %v2135, %v2141
      %v2143 = vcombine.low %v2133, %v2133
      %v2145 = vunpack.c.l.s4 1983009808
      %v2146 = vunpack.c.0.s8 %v2145
      %v2147 = vlaneseq
      %v2148 = vshrl.u32 %v2147, 7
      %v2149 = vsub.s32 %v2146, %v2148
      %v2150 = vrot.slane %v2143, %v2149
      %v2151 = vcombine.low %v2132, %v2132
      %v2153 = vunpack.c.l.s4 1983009808
      %v2154 = vunpack.c.0.s8 %v2153
      %v2155 = vlaneseq
      %v2156 = vshrl.u32 %v2155, 7
      %v2157 = vsub.s32 %v2154, %v2156
      %v2158 = vrot.slane %v2151, %v2157
      %v2159 = vcombine.low %v2134, %v2134
      %v2161 = vunpack.c.l.s4 1983009808
      %v2162 = vunpack.c.0.s8 %v2161
      %v2163 = vlaneseq
      %v2164 = vshrl.u32 %v2163, 7
      %v2165 = vsub.s32 %v2162, %v2164
      %v2166 = vrot.slane %v2159, %v2165
      %2167 = vrot.lane.b32.xlu0 %v2142, 8
      %v2168 = vpop.permute.xlu0 %2167
      %2169 = vrot.lane.b32.xlu0 %v2150, 8
      %v2170 = vpop.permute.xlu0 %2169
      %2171 = vrot.lane.b32.xlu0 %v2158, 8
      %v2172 = vpop.permute.xlu0 %2171
      %2173 = vrot.lane.b32.xlu0 %v2166, 8
      %v2174 = vpop.permute.xlu0 %2173
      %vm2179 = vcmask 126018
      %2180 = vst.msk [vmem:[%s340] sm:$0xc] %vm2179, %v2168
      %2181 = vst.msk [vmem:[%s340 + $0x4] sm:$0xc] %vm2179, %v2170
      %2182 = vst.msk [vmem:[%s340 + $0x8] sm:$0xc] %vm2179, %v2172
      %2183 = vst.msk [vmem:[%s340 + $0xc] sm:$0xc] %vm2179, %v2174
      %s2184 = smul.u32 4, %s22
      %p2185 = scmp.lt.s32.totalorder %s21, 1
      %s2186 = scalar_select %p2185, %s21, 1
      %p2187 = scmp.lt.s32.totalorder %s2184, 7
      %s2188 = scalar_select %p2187, %s2184, 7
      %s2189 = smul.addr %s2186, 8
      %s2190 = sadd.s32 %s2188, %s2189
      %s2191 = smul.addr %s2190, 4
      %s2192 = scalar_lea.vmem %s6, %s2191
      // Predicated region
      $region45: #{_lambda_.6} parent=43 // pred_check
        %p2193 = pneg %p194
      $region46: #{_lambda_.6} parent=43 // pred_check_branch
        %2195 = sbr.rel (%p2193) target = $region48
      $region47: #{_lambda_.6} parent=43 // pred_region
        %s2196 = smul.u32 4, %s22
      $region48: #{_lambda_.6} parent=43 // pred_fallthru
        _
    $region44: #{_lambda_.6} parent=5 // pred_fallthru
      _
    %p2197 = scmp.le.s32.totalorder 2, %s12
    // Predicated region
    $region49: #{_lambda_.6} parent=5 // pred_check
      %p2198 = pneg %p2197
    $region50: #{_lambda_.6} parent=5 // pred_check_branch
      %2200 = sbr.rel (%p2198) target = $region52
    $region51: #{_lambda_.6} parent=5 // pred_region
      %s2201 = ssub.s32 %s12, 2
      // Predicated region
      $region53: #{_lambda_.6} parent=51 // pred_check
        %p2202 = pneg %p200
      $region54: #{_lambda_.6} parent=51 // pred_check_branch
        %2204 = sbr.rel (%p2202) target = $region56
      $region55: #{_lambda_.6} parent=51 // pred_region
        %s2205 = smul.u32 4, %s24
        %p2206 = scmp.lt.s32.totalorder %s23, 1
        %s2207 = scalar_select %p2206, %s23, 1
        %p2208 = scmp.lt.s32.totalorder %s2205, 7
        %s2209 = scalar_select %p2208, %s2205, 7
        %s2210 = smul.addr %s2207, 8
        %s2211 = sadd.s32 %s2209, %s2210
        %s2212 = smul.addr %s2211, 4
        %s2213 = scalar_lea.vmem %s6, %s2212
      $region56: #{_lambda_.6} parent=51 // pred_fallthru
        _
    $region52: #{_lambda_.6} parent=5 // pred_fallthru
      _
  $region6: #{_lambda_.6} parent=0 // loop_footer
    %s16 = sadd.s32 1, %s12
  $region7: #{_lambda_.6} parent=0 // loop_footer_branch
    %11 = sbr.rel target = $region3
  $region8: #{_lambda_.6} parent=0 // loop_exit
    _

</llo_original>
